<compile_context>
chip_gen: v7x
topology: tpu7x:2x2x1
jax: 0.10.0
libtpu: 0.0.40
codegen_flags: <defaults>
</compile_context>

<pallas_src>
import jax
import jax.numpy as jnp
from jax import lax
from jax.experimental import pallas as pl
from jax.experimental.pallas import tpu as pltpu
import numpy as np


def encoder_decoder_kernel(
    x_past_ref,      # (T_in, D)
    x_fut_ref,       # (T_out, D-1)
    w_ih_e_ref,      # (D, 3*Hp)    encoder W_ih^T, gate-padded
    w_hh_e_ref,      # (Hp, 3*Hp)   encoder W_hh^T, padded
    b_ih_e_ref,      # (1, 3*Hp)
    b_hh_e_ref,      # (1, 3*Hp)
    w_y_d_ref,       # (1, 3*Hp)    decoder W_ih^T row for the y_prev feature
    w_xf_d_ref,      # (D-1, 3*Hp)  decoder W_ih^T rows for x_future features
    w_big_d_ref,     # (Hp, 4*Hp)   [W_hh_r+M_r | W_hh_z+M_z | W_hh_n | M_n]
    b_big_d_ref,     # (1, 4*Hp)    [b_hh_r | b_hh_z | b_hh_n | 0]
    b_gx_d_ref,      # (1, 3*Hp)    b_ih_d + b_fc * w_y_d
    w_fc_row_ref,    # (1, Hp)      fc weight as a lane row (zero-padded)
    b_fc_ref,        # (1, 1)
    out_ref,         # (T_out, 1)
    gx_enc_ref,      # scratch (T_in, 3*Hp)   precomputed encoder input gates
    gx_dec_ref,      # scratch (T_out, 3*Hp)  precomputed decoder input gates
    h_all_ref,       # scratch (T_out, Hp)    decoder hidden states
):
    T_in = x_past_ref.shape[0]
    T_out = out_ref.shape[0]
    Hp = w_fc_row_ref.shape[1]

    # ------------- Encoder: input projection hoisted out of the loop --------
    gx_enc_ref[...] = (
        jnp.dot(x_past_ref[...], w_ih_e_ref[...],
                preferred_element_type=jnp.float32) + b_ih_e_ref[...])

    w_hh_e = w_hh_e_ref[...]
    b_hh_e = b_hh_e_ref[...]

    def enc_body(i, h):
        gx = gx_enc_ref[pl.ds(i, 1), :]                          # (1, 3Hp)
        gh = jnp.dot(h, w_hh_e, preferred_element_type=jnp.float32) + b_hh_e
        # Gate slices land on 128-lane (whole-vreg) boundaries (Hp = 128k).
        r = jax.nn.sigmoid(gx[:, 0:Hp] + gh[:, 0:Hp])
        z = jax.nn.sigmoid(gx[:, Hp:2 * Hp] + gh[:, Hp:2 * Hp])
        n = jnp.tanh(gx[:, 2 * Hp:3 * Hp] + r * gh[:, 2 * Hp:3 * Hp])
        return (1.0 - z) * n + z * h

    h_enc = lax.fori_loop(0, T_in, enc_body,
                          jnp.zeros((1, Hp), jnp.float32), unroll=True)

    # ------------- Decoder: autoregressive loop with rank-1 folded back-edge -
    w_y_d = w_y_d_ref[...]
    w_big = w_big_d_ref[...]
    b_big = b_big_d_ref[...]
    w_fc_row = w_fc_row_ref[...]
    b_fc = b_fc_ref[...]

    # Hoisted x_future projection; b_gx_d already contains b_ih_d + b_fc*w_y_d.
    gx_dec_ref[...] = (
        jnp.dot(x_fut_ref[...], w_xf_d_ref[...],
                preferred_element_type=jnp.float32) + b_gx_d_ref[...])

    # Step-0 correction: the folded matrix would inject fc(h_enc)*w_y_d, but
    # step 0 must use y0 = x_past[-1, 0].  One cross-lane reduce, once.
    y0 = x_past_ref[T_in - 1:T_in, 0:1]                          # (1, 1)
    fc_henc = jnp.sum(h_enc * w_fc_row, axis=-1, keepdims=True) + b_fc
    gx_dec_ref[0:1, :] = gx_dec_ref[0:1, :] + (y0 - fc_henc) * w_y_d

    def dec_body(i, h):
        # Single (1,Hp)@(Hp,4Hp) dot per step:
        #   g[:, 0:3Hp]   = h @ (W_hh_d with r/z fold) + b_hh_d
        #   g[:, 3Hp:4Hp] = h @ M_n   (n-gate share of the y_prev back-edge)
        g = jnp.dot(h, w_big, preferred_element_type=jnp.float32) + b_big
        gx = gx_dec_ref[pl.ds(i, 1), :]                          # (1, 3Hp)
        r = jax.nn.sigmoid(gx[:, 0:Hp] + g[:, 0:Hp])
        z = jax.nn.sigmoid(gx[:, Hp:2 * Hp] + g[:, Hp:2 * Hp])
        n = jnp.tanh(gx[:, 2 * Hp:3 * Hp] + g[:, 3 * Hp:4 * Hp]
                     + r * g[:, 2 * Hp:3 * Hp])
        h_new = (1.0 - z) * n + z * h
        h_all_ref[pl.ds(i, 1), :] = h_new                        # lane-dense vst
        return h_new

    lax.fori_loop(0, T_out, dec_body, h_enc, unroll=True)

    # Single batched FC + one writeback (off the serial critical path).
    out_ref[...] = (jnp.sum(h_all_ref[...] * w_fc_row, axis=-1, keepdims=True)
                    + b_fc).astype(out_ref.dtype)


def prepare_params(params):
    """One-time weight padding / transpose / rank-1 fold (hoisted out of the
    per-call path per review)."""
    H = params["enc_w_hh"].shape[1]
    Hp = ((H + 127) // 128) * 128          # pad each gate to whole vregs

    def pad_gate_cols(w_t):                # (in, 3H) -> (in, 3Hp)
        parts = []
        for g in range(3):
            blk = w_t[:, g * H:(g + 1) * H]
            parts.append(jnp.pad(blk, ((0, 0), (0, Hp - H))))
        return jnp.concatenate(parts, axis=1)

    def pad_bias(b):                       # (3H,) -> (1, 3Hp)
        return pad_gate_cols(b.reshape(1, -1))

    def pad_hh(w_hh_t):                    # (H, 3H) -> (Hp, 3Hp)
        return jnp.pad(pad_gate_cols(w_hh_t), ((0, Hp - H), (0, 0)))

    # encoder
    w_ih_e = pad_gate_cols(params["enc_w_ih"].T)          # (D, 3Hp)
    w_hh_e = pad_hh(params["enc_w_hh"].T)                 # (Hp, 3Hp)
    b_ih_e = pad_bias(params["enc_b_ih"])
    b_hh_e = pad_bias(params["enc_b_hh"])

    # decoder
    w_ih_d_t = pad_gate_cols(params["dec_w_ih"].T)        # (D, 3Hp)
    w_y_d = w_ih_d_t[0:1, :]                              # (1, 3Hp)
    w_xf_d = w_ih_d_t[1:, :]                              # (D-1, 3Hp)
    w_hh_d = pad_hh(params["dec_w_hh"].T)                 # (Hp, 3Hp)
    b_ih_d = pad_bias(params["dec_b_ih"])
    b_hh_d = pad_bias(params["dec_b_hh"])

    # fc
    w_fc_row = jnp.pad(params["fc_w"].reshape(1, -1),
                       ((0, 0), (0, Hp - H)))             # (1, Hp)
    w_fc_col = w_fc_row.T                                 # (Hp, 1)
    b_fc = params["fc_b"].reshape(1, 1).astype(jnp.float32)

    # Rank-1 back-edge fold: M = outer(w_fc, w_y_d); r/z blocks fold into
    # W_hh_d exactly, n block rides as 4th column block of the per-step dot.
    M = w_fc_col @ w_y_d                                  # (Hp, 3Hp)
    w_big_d = jnp.concatenate([
        w_hh_d[:, 0:Hp] + M[:, 0:Hp],
        w_hh_d[:, Hp:2 * Hp] + M[:, Hp:2 * Hp],
        w_hh_d[:, 2 * Hp:3 * Hp],
        M[:, 2 * Hp:3 * Hp],
    ], axis=1)                                            # (Hp, 4Hp)
    b_big_d = jnp.concatenate(
        [b_hh_d, jnp.zeros((1, Hp), jnp.float32)], axis=1)  # (1, 4Hp)
    b_gx_d = b_ih_d + b_fc * w_y_d                        # (1, 3Hp)

    return dict(
        w_ih_e=w_ih_e, w_hh_e=w_hh_e, b_ih_e=b_ih_e, b_hh_e=b_hh_e,
        w_y_d=w_y_d, w_xf_d=w_xf_d, w_big_d=w_big_d, b_big_d=b_big_d,
        b_gx_d=b_gx_d, w_fc_row=w_fc_row, b_fc=b_fc)


def encoder_decoder_rnn(x_past, x_future, prepped):
    """Pallas forward pass of EncoderDecoderRNN (autoregressive branch)."""
    T_in, _ = x_past.shape
    T_out = x_future.shape[0]
    Hp = prepped["w_fc_row"].shape[1]

    out = pl.pallas_call(
        encoder_decoder_kernel,
        out_shape=jax.ShapeDtypeStruct((T_out, 1), jnp.float32),
        scratch_shapes=[
            pltpu.VMEM((T_in, 3 * Hp), jnp.float32),   # encoder input gates
            pltpu.VMEM((T_out, 3 * Hp), jnp.float32),  # decoder input gates
            pltpu.VMEM((T_out, Hp), jnp.float32),      # decoder hidden states
        ],
    )(x_past, x_future,
      prepped["w_ih_e"], prepped["w_hh_e"], prepped["b_ih_e"], prepped["b_hh_e"],
      prepped["w_y_d"], prepped["w_xf_d"], prepped["w_big_d"], prepped["b_big_d"],
      prepped["b_gx_d"], prepped["w_fc_row"], prepped["b_fc"])
    return out.reshape(T_out)


encoder_decoder_rnn_jit = jax.jit(encoder_decoder_rnn)


# ----------------------------- pure-JAX reference ---------------------------
def reference_forward(x_past, x_future, params):
    H = params["enc_w_hh"].shape[1]

    def gru_step(h, x, w_ih, w_hh, b_ih, b_hh):
        gx = w_ih @ x + b_ih
        gh = w_hh @ h + b_hh
        r = jax.nn.sigmoid(gx[:H] + gh[:H])
        z = jax.nn.sigmoid(gx[H:2 * H] + gh[H:2 * H])
        n = jnp.tanh(gx[2 * H:] + r * gh[2 * H:])
        return (1.0 - z) * n + z * h

    h = jnp.zeros((H,), jnp.float32)
    for i in range(x_past.shape[0]):
        h = gru_step(h, x_past[i], params["enc_w_ih"], params["enc_w_hh"],
                     params["enc_b_ih"], params["enc_b_hh"])

    y_prev = x_past[-1, 0]
    outs = []
    for i in range(x_future.shape[0]):
        x_dec = jnp.concatenate([y_prev[None], x_future[i]], axis=0)
        h = gru_step(h, x_dec, params["dec_w_ih"], params["dec_w_hh"],
                     params["dec_b_ih"], params["dec_b_hh"])
        y_prev = (params["fc_w"] @ h + params["fc_b"])[0]
        outs.append(y_prev)
    return jnp.stack(outs)


if __name__ == "__main__":
    # Small, deterministic shapes implied by the module:
    input_sequence_length = 8
    output_sequence_length = 8
    input_vector_length = 4          # D (decoder consumes 1 prev-y + D-1 exogenous)
    hidden_vector_size = 32          # H

    T_in, T_out = input_sequence_length, output_sequence_length
    D, H = input_vector_length, hidden_vector_size

    key = jax.random.PRNGKey(0)
    keys = jax.random.split(key, 13)
    k = 1.0 / np.sqrt(H)

    def u(kk, shape):
        return jax.random.uniform(kk, shape, jnp.float32, minval=-k, maxval=k)

    params = {
        # encoder GRU (PyTorch layout: (3H, in), (3H, H), (3H,))
        "enc_w_ih": u(keys[0], (3 * H, D)),
        "enc_w_hh": u(keys[1], (3 * H, H)),
        "enc_b_ih": u(keys[2], (3 * H,)),
        "enc_b_hh": u(keys[3], (3 * H,)),
        # decoder GRU
        "dec_w_ih": u(keys[4], (3 * H, D)),
        "dec_w_hh": u(keys[5], (3 * H, H)),
        "dec_b_ih": u(keys[6], (3 * H,)),
        "dec_b_hh": u(keys[7], (3 * H,)),
        # decoder FC: Linear(H, 1)
        "fc_w": u(keys[8], (1, H)),
        "fc_b": u(keys[9], (1,)),
    }

    x_past = jax.random.normal(keys[10], (T_in, D), jnp.float32)
    x_future = jax.random.normal(keys[11], (T_out, D - 1), jnp.float32)

    # One-time weight preparation (padding + rank-1 fold), outside the call path.
    prepped = jax.tree_util.tree_map(jax.block_until_ready,
                                     prepare_params(params))

    # TODO(synk): teacher-forcing branch depends on Python random.random();
    # we implement the deterministic y_future=None (autoregressive) path only.
    out = encoder_decoder_rnn_jit(x_past, x_future, prepped)
    out = jax.block_until_ready(out)

    ref = reference_forward(x_past, x_future, params)
    np.testing.assert_allclose(np.asarray(out), np.asarray(ref),
                               rtol=1e-4, atol=1e-5)

    print("KERNEL_OK")
</pallas_src>

<mosaic_0001>
module attributes {stable_mosaic.version = 11 : i64} {
  func.func @encoder_decoder_kernel(%arg0: memref<8x4xf32, #tpu.memory_space<vmem>>, %arg1: memref<8x3xf32, #tpu.memory_space<vmem>>, %arg2: memref<4x384xf32, #tpu.memory_space<vmem>>, %arg3: memref<128x384xf32, #tpu.memory_space<vmem>>, %arg4: memref<1x384xf32, #tpu.memory_space<vmem>>, %arg5: memref<1x384xf32, #tpu.memory_space<vmem>>, %arg6: memref<1x384xf32, #tpu.memory_space<vmem>>, %arg7: memref<3x384xf32, #tpu.memory_space<vmem>>, %arg8: memref<128x512xf32, #tpu.memory_space<vmem>>, %arg9: memref<1x512xf32, #tpu.memory_space<vmem>>, %arg10: memref<1x384xf32, #tpu.memory_space<vmem>>, %arg11: memref<1x128xf32, #tpu.memory_space<vmem>>, %arg12: memref<1x1xf32, #tpu.memory_space<vmem>>, %arg13: memref<8x1xf32, #tpu.memory_space<vmem>>, %arg14: memref<8x384xf32, #tpu.memory_space<vmem>>, %arg15: memref<8x384xf32, #tpu.memory_space<vmem>>, %arg16: memref<8x128xf32, #tpu.memory_space<vmem>>) attributes {dimension_semantics = [], scalar_prefetch = 0 : i64, scratch_operands = 3 : i64, tpu.core_type = #tpu.core_type<tc>} {
    %c0 = arith.constant 0 : index
    %c0_0 = arith.constant 0 : index
    %0 = vector.load %arg0[%c0, %c0_0] : memref<8x4xf32, #tpu.memory_space<vmem>>, vector<8x4xf32>
    %c0_1 = arith.constant 0 : index
    %c0_2 = arith.constant 0 : index
    %1 = vector.load %arg2[%c0_1, %c0_2] : memref<4x384xf32, #tpu.memory_space<vmem>>, vector<4x384xf32>
    %cst = arith.constant dense<0.000000e+00> : vector<8x384xf32>
    %2 = tpu.matmul %0, %1, %cst {dimension_numbers = #tpu.dot_dimension_numbers<[1], [0], [0], [1], [0, 0, 1, 1], [], []>} : vector<8x4xf32>, vector<4x384xf32>, vector<8x384xf32> -> vector<8x384xf32>
    %c0_3 = arith.constant 0 : index
    %c0_4 = arith.constant 0 : index
    %3 = vector.load %arg4[%c0_3, %c0_4] : memref<1x384xf32, #tpu.memory_space<vmem>>, vector<1x384xf32>
    %4 = vector.broadcast %3 : vector<1x384xf32> to vector<8x384xf32>
    %5 = arith.addf %2, %4 : vector<8x384xf32>
    %c0_5 = arith.constant 0 : index
    %c0_6 = arith.constant 0 : index
    %6 = vector.load %arg14[%c0_5, %c0_6] : memref<8x384xf32, #tpu.memory_space<vmem>>, vector<8x384xf32>
    tpu.vector_store %arg14[%c0_5, %c0_6], %5 {strides = array<i32>} : memref<8x384xf32, #tpu.memory_space<vmem>>, vector<8x384xf32>,
    %c0_7 = arith.constant 0 : index
    %c0_8 = arith.constant 0 : index
    %7 = vector.load %arg3[%c0_7, %c0_8] : memref<128x384xf32, #tpu.memory_space<vmem>>, vector<128x384xf32>
    %c0_9 = arith.constant 0 : index
    %c0_10 = arith.constant 0 : index
    %8 = vector.load %arg5[%c0_9, %c0_10] : memref<1x384xf32, #tpu.memory_space<vmem>>, vector<1x384xf32>
    %cst_11 = arith.constant 0.000000e+00 : f32
    %9 = vector.broadcast %cst_11 : f32 to vector<1x128xf32>
    %c0_i32 = arith.constant 0 : i32
    %10 = arith.index_cast %c0_i32 : i32 to index
    %c0_12 = arith.constant 0 : index
    %11 = vector.load %arg14[%10, %c0_12] : memref<8x384xf32, #tpu.memory_space<vmem>>, vector<1x384xf32>
    %cst_13 = arith.constant dense<0.000000e+00> : vector<1x384xf32>
    %12 = tpu.matmul %9, %7, %cst_13 {dimension_numbers = #tpu.dot_dimension_numbers<[1], [0], [0], [1], [0, 0, 1, 1], [], []>} : vector<1x128xf32>, vector<128x384xf32>, vector<1x384xf32> -> vector<1x384xf32>
    %13 = arith.addf %12, %8 : vector<1x384xf32>
    %14 = vector.extract_strided_slice %11 {offsets = [0, 0], sizes = [1, 128], strides = [1, 1]} : vector<1x384xf32> to vector<1x128xf32>
    %15 = vector.extract_strided_slice %13 {offsets = [0, 0], sizes = [1, 128], strides = [1, 1]} : vector<1x384xf32> to vector<1x128xf32>
    %16 = arith.addf %14, %15 : vector<1x128xf32>
    %17 = arith.negf %16 : vector<1x128xf32>
    %18 = math.exp %17 : vector<1x128xf32>
    %cst_14 = arith.constant 1.000000e+00 : f32
    %19 = vector.broadcast %cst_14 : f32 to vector<1x128xf32>
    %20 = arith.addf %19, %18 : vector<1x128xf32>
    %21 = arith.divf %19, %20 : vector<1x128xf32>
    %22 = vector.extract_strided_slice %11 {offsets = [0, 128], sizes = [1, 128], strides = [1, 1]} : vector<1x384xf32> to vector<1x128xf32>
    %23 = vector.extract_strided_slice %13 {offsets = [0, 128], sizes = [1, 128], strides = [1, 1]} : vector<1x384xf32> to vector<1x128xf32>
    %24 = arith.addf %22, %23 : vector<1x128xf32>
    %25 = arith.negf %24 : vector<1x128xf32>
    %26 = math.exp %25 : vector<1x128xf32>
    %cst_15 = arith.constant 1.000000e+00 : f32
    %27 = vector.broadcast %cst_15 : f32 to vector<1x128xf32>
    %28 = arith.addf %27, %26 : vector<1x128xf32>
    %29 = arith.divf %27, %28 : vector<1x128xf32>
    %30 = vector.extract_strided_slice %11 {offsets = [0, 256], sizes = [1, 128], strides = [1, 1]} : vector<1x384xf32> to vector<1x128xf32>
    %31 = vector.extract_strided_slice %13 {offsets = [0, 256], sizes = [1, 128], strides = [1, 1]} : vector<1x384xf32> to vector<1x128xf32>
    %32 = arith.mulf %21, %31 : vector<1x128xf32>
    %33 = arith.addf %30, %32 : vector<1x128xf32>
    %34 = math.tanh %33 : vector<1x128xf32>
    %cst_16 = arith.constant 1.000000e+00 : f32
    %35 = vector.broadcast %cst_16 : f32 to vector<1x128xf32>
    %36 = arith.subf %35, %29 : vector<1x128xf32>
    %37 = arith.mulf %36, %34 : vector<1x128xf32>
    %38 = arith.mulf %29, %9 : vector<1x128xf32>
    %39 = arith.addf %37, %38 : vector<1x128xf32>
    %c1_i32 = arith.constant 1 : i32
    %40 = arith.index_cast %c1_i32 : i32 to index
    %c0_17 = arith.constant 0 : index
    %41 = vector.load %arg14[%40, %c0_17] : memref<8x384xf32, #tpu.memory_space<vmem>>, vector<1x384xf32>
    %cst_18 = arith.constant dense<0.000000e+00> : vector<1x384xf32>
    %42 = tpu.matmul %39, %7, %cst_18 {dimension_numbers = #tpu.dot_dimension_numbers<[1], [0], [0], [1], [0, 0, 1, 1], [], []>} : vector<1x128xf32>, vector<128x384xf32>, vector<1x384xf32> -> vector<1x384xf32>
    %43 = arith.addf %42, %8 : vector<1x384xf32>
    %44 = vector.extract_strided_slice %41 {offsets = [0, 0], sizes = [1, 128], strides = [1, 1]} : vector<1x384xf32> to vector<1x128xf32>
    %45 = vector.extract_strided_slice %43 {offsets = [0, 0], sizes = [1, 128], strides = [1, 1]} : vector<1x384xf32> to vector<1x128xf32>
    %46 = arith.addf %44, %45 : vector<1x128xf32>
    %47 = arith.negf %46 : vector<1x128xf32>
    %48 = math.exp %47 : vector<1x128xf32>
    %cst_19 = arith.constant 1.000000e+00 : f32
    %49 = vector.broadcast %cst_19 : f32 to vector<1x128xf32>
    %50 = arith.addf %49, %48 : vector<1x128xf32>
    %51 = arith.divf %49, %50 : vector<1x128xf32>
    %52 = vector.extract_strided_slice %41 {offsets = [0, 128], sizes = [1, 128], strides = [1, 1]} : vector<1x384xf32> to vector<1x128xf32>
    %53 = vector.extract_strided_slice %43 {offsets = [0, 128], sizes = [1, 128], strides = [1, 1]} : vector<1x384xf32> to vector<1x128xf32>
    %54 = arith.addf %52, %53 : vector<1x128xf32>
    %55 = arith.negf %54 : vector<1x128xf32>
    %56 = math.exp %55 : vector<1x128xf32>
    %cst_20 = arith.constant 1.000000e+00 : f32
    %57 = vector.broadcast %cst_20 : f32 to vector<1x128xf32>
    %58 = arith.addf %57, %56 : vector<1x128xf32>
    %59 = arith.divf %57, %58 : vector<1x128xf32>
    %60 = vector.extract_strided_slice %41 {offsets = [0, 256], sizes = [1, 128], strides = [1, 1]} : vector<1x384xf32> to vector<1x128xf32>
    %61 = vector.extract_strided_slice %43 {offsets = [0, 256], sizes = [1, 128], strides = [1, 1]} : vector<1x384xf32> to vector<1x128xf32>
    %62 = arith.mulf %51, %61 : vector<1x128xf32>
    %63 = arith.addf %60, %62 : vector<1x128xf32>
    %64 = math.tanh %63 : vector<1x128xf32>
    %cst_21 = arith.constant 1.000000e+00 : f32
    %65 = vector.broadcast %cst_21 : f32 to vector<1x128xf32>
    %66 = arith.subf %65, %59 : vector<1x128xf32>
    %67 = arith.mulf %66, %64 : vector<1x128xf32>
    %68 = arith.mulf %59, %39 : vector<1x128xf32>
    %69 = arith.addf %67, %68 : vector<1x128xf32>
    %c2_i32 = arith.constant 2 : i32
    %70 = arith.index_cast %c2_i32 : i32 to index
    %c0_22 = arith.constant 0 : index
    %71 = vector.load %arg14[%70, %c0_22] : memref<8x384xf32, #tpu.memory_space<vmem>>, vector<1x384xf32>
    %cst_23 = arith.constant dense<0.000000e+00> : vector<1x384xf32>
    %72 = tpu.matmul %69, %7, %cst_23 {dimension_numbers = #tpu.dot_dimension_numbers<[1], [0], [0], [1], [0, 0, 1, 1], [], []>} : vector<1x128xf32>, vector<128x384xf32>, vector<1x384xf32> -> vector<1x384xf32>
    %73 = arith.addf %72, %8 : vector<1x384xf32>
    %74 = vector.extract_strided_slice %71 {offsets = [0, 0], sizes = [1, 128], strides = [1, 1]} : vector<1x384xf32> to vector<1x128xf32>
    %75 = vector.extract_strided_slice %73 {offsets = [0, 0], sizes = [1, 128], strides = [1, 1]} : vector<1x384xf32> to vector<1x128xf32>
    %76 = arith.addf %74, %75 : vector<1x128xf32>
    %77 = arith.negf %76 : vector<1x128xf32>
    %78 = math.exp %77 : vector<1x128xf32>
    %cst_24 = arith.constant 1.000000e+00 : f32
    %79 = vector.broadcast %cst_24 : f32 to vector<1x128xf32>
    %80 = arith.addf %79, %78 : vector<1x128xf32>
    %81 = arith.divf %79, %80 : vector<1x128xf32>
    %82 = vector.extract_strided_slice %71 {offsets = [0, 128], sizes = [1, 128], strides = [1, 1]} : vector<1x384xf32> to vector<1x128xf32>
    %83 = vector.extract_strided_slice %73 {offsets = [0, 128], sizes = [1, 128], strides = [1, 1]} : vector<1x384xf32> to vector<1x128xf32>
    %84 = arith.addf %82, %83 : vector<1x128xf32>
    %85 = arith.negf %84 : vector<1x128xf32>
    %86 = math.exp %85 : vector<1x128xf32>
    %cst_25 = arith.constant 1.000000e+00 : f32
    %87 = vector.broadcast %cst_25 : f32 to vector<1x128xf32>
    %88 = arith.addf %87, %86 : vector<1x128xf32>
    %89 = arith.divf %87, %88 : vector<1x128xf32>
    %90 = vector.extract_strided_slice %71 {offsets = [0, 256], sizes = [1, 128], strides = [1, 1]} : vector<1x384xf32> to vector<1x128xf32>
    %91 = vector.extract_strided_slice %73 {offsets = [0, 256], sizes = [1, 128], strides = [1, 1]} : vector<1x384xf32> to vector<1x128xf32>
    %92 = arith.mulf %81, %91 : vector<1x128xf32>
    %93 = arith.addf %90, %92 : vector<1x128xf32>
    %94 = math.tanh %93 : vector<1x128xf32>
    %cst_26 = arith.constant 1.000000e+00 : f32
    %95 = vector.broadcast %cst_26 : f32 to vector<1x128xf32>
    %96 = arith.subf %95, %89 : vector<1x128xf32>
    %97 = arith.mulf %96, %94 : vector<1x128xf32>
    %98 = arith.mulf %89, %69 : vector<1x128xf32>
    %99 = arith.addf %97, %98 : vector<1x128xf32>
    %c3_i32 = arith.constant 3 : i32
    %100 = arith.index_cast %c3_i32 : i32 to index
    %c0_27 = arith.constant 0 : index
    %101 = vector.load %arg14[%100, %c0_27] : memref<8x384xf32, #tpu.memory_space<vmem>>, vector<1x384xf32>
    %cst_28 = arith.constant dense<0.000000e+00> : vector<1x384xf32>
    %102 = tpu.matmul %99, %7, %cst_28 {dimension_numbers = #tpu.dot_dimension_numbers<[1], [0], [0], [1], [0, 0, 1, 1], [], []>} : vector<1x128xf32>, vector<128x384xf32>, vector<1x384xf32> -> vector<1x384xf32>
    %103 = arith.addf %102, %8 : vector<1x384xf32>
    %104 = vector.extract_strided_slice %101 {offsets = [0, 0], sizes = [1, 128], strides = [1, 1]} : vector<1x384xf32> to vector<1x128xf32>
    %105 = vector.extract_strided_slice %103 {offsets = [0, 0], sizes = [1, 128], strides = [1, 1]} : vector<1x384xf32> to vector<1x128xf32>
    %106 = arith.addf %104, %105 : vector<1x128xf32>
    %107 = arith.negf %106 : vector<1x128xf32>
    %108 = math.exp %107 : vector<1x128xf32>
    %cst_29 = arith.constant 1.000000e+00 : f32
    %109 = vector.broadcast %cst_29 : f32 to vector<1x128xf32>
    %110 = arith.addf %109, %108 : vector<1x128xf32>
    %111 = arith.divf %109, %110 : vector<1x128xf32>
    %112 = vector.extract_strided_slice %101 {offsets = [0, 128], sizes = [1, 128], strides = [1, 1]} : vector<1x384xf32> to vector<1x128xf32>
    %113 = vector.extract_strided_slice %103 {offsets = [0, 128], sizes = [1, 128], strides = [1, 1]} : vector<1x384xf32> to vector<1x128xf32>
    %114 = arith.addf %112, %113 : vector<1x128xf32>
    %115 = arith.negf %114 : vector<1x128xf32>
    %116 = math.exp %115 : vector<1x128xf32>
    %cst_30 = arith.constant 1.000000e+00 : f32
    %117 = vector.broadcast %cst_30 : f32 to vector<1x128xf32>
    %118 = arith.addf %117, %116 : vector<1x128xf32>
    %119 = arith.divf %117, %118 : vector<1x128xf32>
    %120 = vector.extract_strided_slice %101 {offsets = [0, 256], sizes = [1, 128], strides = [1, 1]} : vector<1x384xf32> to vector<1x128xf32>
    %121 = vector.extract_strided_slice %103 {offsets = [0, 256], sizes = [1, 128], strides = [1, 1]} : vector<1x384xf32> to vector<1x128xf32>
    %122 = arith.mulf %111, %121 : vector<1x128xf32>
    %123 = arith.addf %120, %122 : vector<1x128xf32>
    %124 = math.tanh %123 : vector<1x128xf32>
    %cst_31 = arith.constant 1.000000e+00 : f32
    %125 = vector.broadcast %cst_31 : f32 to vector<1x128xf32>
    %126 = arith.subf %125, %119 : vector<1x128xf32>
    %127 = arith.mulf %126, %124 : vector<1x128xf32>
    %128 = arith.mulf %119, %99 : vector<1x128xf32>
    %129 = arith.addf %127, %128 : vector<1x128xf32>
    %c4_i32 = arith.constant 4 : i32
    %130 = arith.index_cast %c4_i32 : i32 to index
    %c0_32 = arith.constant 0 : index
    %131 = vector.load %arg14[%130, %c0_32] : memref<8x384xf32, #tpu.memory_space<vmem>>, vector<1x384xf32>
    %cst_33 = arith.constant dense<0.000000e+00> : vector<1x384xf32>
    %132 = tpu.matmul %129, %7, %cst_33 {dimension_numbers = #tpu.dot_dimension_numbers<[1], [0], [0], [1], [0, 0, 1, 1], [], []>} : vector<1x128xf32>, vector<128x384xf32>, vector<1x384xf32> -> vector<1x384xf32>
    %133 = arith.addf %132, %8 : vector<1x384xf32>
    %134 = vector.extract_strided_slice %131 {offsets = [0, 0], sizes = [1, 128], strides = [1, 1]} : vector<1x384xf32> to vector<1x128xf32>
    %135 = vector.extract_strided_slice %133 {offsets = [0, 0], sizes = [1, 128], strides = [1, 1]} : vector<1x384xf32> to vector<1x128xf32>
    %136 = arith.addf %134, %135 : vector<1x128xf32>
    %137 = arith.negf %136 : vector<1x128xf32>
    %138 = math.exp %137 : vector<1x128xf32>
    %cst_34 = arith.constant 1.000000e+00 : f32
    %139 = vector.broadcast %cst_34 : f32 to vector<1x128xf32>
    %140 = arith.addf %139, %138 : vector<1x128xf32>
    %141 = arith.divf %139, %140 : vector<1x128xf32>
    %142 = vector.extract_strided_slice %131 {offsets = [0, 128], sizes = [1, 128], strides = [1, 1]} : vector<1x384xf32> to vector<1x128xf32>
    %143 = vector.extract_strided_slice %133 {offsets = [0, 128], sizes = [1, 128], strides = [1, 1]} : vector<1x384xf32> to vector<1x128xf32>
    %144 = arith.addf %142, %143 : vector<1x128xf32>
    %145 = arith.negf %144 : vector<1x128xf32>
    %146 = math.exp %145 : vector<1x128xf32>
    %cst_35 = arith.constant 1.000000e+00 : f32
    %147 = vector.broadcast %cst_35 : f32 to vector<1x128xf32>
    %148 = arith.addf %147, %146 : vector<1x128xf32>
    %149 = arith.divf %147, %148 : vector<1x128xf32>
    %150 = vector.extract_strided_slice %131 {offsets = [0, 256], sizes = [1, 128], strides = [1, 1]} : vector<1x384xf32> to vector<1x128xf32>
    %151 = vector.extract_strided_slice %133 {offsets = [0, 256], sizes = [1, 128], strides = [1, 1]} : vector<1x384xf32> to vector<1x128xf32>
    %152 = arith.mulf %141, %151 : vector<1x128xf32>
    %153 = arith.addf %150, %152 : vector<1x128xf32>
    %154 = math.tanh %153 : vector<1x128xf32>
    %cst_36 = arith.constant 1.000000e+00 : f32
    %155 = vector.broadcast %cst_36 : f32 to vector<1x128xf32>
    %156 = arith.subf %155, %149 : vector<1x128xf32>
    %157 = arith.mulf %156, %154 : vector<1x128xf32>
    %158 = arith.mulf %149, %129 : vector<1x128xf32>
    %159 = arith.addf %157, %158 : vector<1x128xf32>
    %c5_i32 = arith.constant 5 : i32
    %160 = arith.index_cast %c5_i32 : i32 to index
    %c0_37 = arith.constant 0 : index
    %161 = vector.load %arg14[%160, %c0_37] : memref<8x384xf32, #tpu.memory_space<vmem>>, vector<1x384xf32>
    %cst_38 = arith.constant dense<0.000000e+00> : vector<1x384xf32>
    %162 = tpu.matmul %159, %7, %cst_38 {dimension_numbers = #tpu.dot_dimension_numbers<[1], [0], [0], [1], [0, 0, 1, 1], [], []>} : vector<1x128xf32>, vector<128x384xf32>, vector<1x384xf32> -> vector<1x384xf32>
    %163 = arith.addf %162, %8 : vector<1x384xf32>
    %164 = vector.extract_strided_slice %161 {offsets = [0, 0], sizes = [1, 128], strides = [1, 1]} : vector<1x384xf32> to vector<1x128xf32>
    %165 = vector.extract_strided_slice %163 {offsets = [0, 0], sizes = [1, 128], strides = [1, 1]} : vector<1x384xf32> to vector<1x128xf32>
    %166 = arith.addf %164, %165 : vector<1x128xf32>
    %167 = arith.negf %166 : vector<1x128xf32>
    %168 = math.exp %167 : vector<1x128xf32>
    %cst_39 = arith.constant 1.000000e+00 : f32
    %169 = vector.broadcast %cst_39 : f32 to vector<1x128xf32>
    %170 = arith.addf %169, %168 : vector<1x128xf32>
    %171 = arith.divf %169, %170 : vector<1x128xf32>
    %172 = vector.extract_strided_slice %161 {offsets = [0, 128], sizes = [1, 128], strides = [1, 1]} : vector<1x384xf32> to vector<1x128xf32>
    %173 = vector.extract_strided_slice %163 {offsets = [0, 128], sizes = [1, 128], strides = [1, 1]} : vector<1x384xf32> to vector<1x128xf32>
    %174 = arith.addf %172, %173 : vector<1x128xf32>
    %175 = arith.negf %174 : vector<1x128xf32>
    %176 = math.exp %175 : vector<1x128xf32>
    %cst_40 = arith.constant 1.000000e+00 : f32
    %177 = vector.broadcast %cst_40 : f32 to vector<1x128xf32>
    %178 = arith.addf %177, %176 : vector<1x128xf32>
    %179 = arith.divf %177, %178 : vector<1x128xf32>
    %180 = vector.extract_strided_slice %161 {offsets = [0, 256], sizes = [1, 128], strides = [1, 1]} : vector<1x384xf32> to vector<1x128xf32>
    %181 = vector.extract_strided_slice %163 {offsets = [0, 256], sizes = [1, 128], strides = [1, 1]} : vector<1x384xf32> to vector<1x128xf32>
    %182 = arith.mulf %171, %181 : vector<1x128xf32>
    %183 = arith.addf %180, %182 : vector<1x128xf32>
    %184 = math.tanh %183 : vector<1x128xf32>
    %cst_41 = arith.constant 1.000000e+00 : f32
    %185 = vector.broadcast %cst_41 : f32 to vector<1x128xf32>
    %186 = arith.subf %185, %179 : vector<1x128xf32>
    %187 = arith.mulf %186, %184 : vector<1x128xf32>
    %188 = arith.mulf %179, %159 : vector<1x128xf32>
    %189 = arith.addf %187, %188 : vector<1x128xf32>
    %c6_i32 = arith.constant 6 : i32
    %190 = arith.index_cast %c6_i32 : i32 to index
    %c0_42 = arith.constant 0 : index
    %191 = vector.load %arg14[%190, %c0_42] : memref<8x384xf32, #tpu.memory_space<vmem>>, vector<1x384xf32>
    %cst_43 = arith.constant dense<0.000000e+00> : vector<1x384xf32>
    %192 = tpu.matmul %189, %7, %cst_43 {dimension_numbers = #tpu.dot_dimension_numbers<[1], [0], [0], [1], [0, 0, 1, 1], [], []>} : vector<1x128xf32>, vector<128x384xf32>, vector<1x384xf32> -> vector<1x384xf32>
    %193 = arith.addf %192, %8 : vector<1x384xf32>
    %194 = vector.extract_strided_slice %191 {offsets = [0, 0], sizes = [1, 128], strides = [1, 1]} : vector<1x384xf32> to vector<1x128xf32>
    %195 = vector.extract_strided_slice %193 {offsets = [0, 0], sizes = [1, 128], strides = [1, 1]} : vector<1x384xf32> to vector<1x128xf32>
    %196 = arith.addf %194, %195 : vector<1x128xf32>
    %197 = arith.negf %196 : vector<1x128xf32>
    %198 = math.exp %197 : vector<1x128xf32>
    %cst_44 = arith.constant 1.000000e+00 : f32
    %199 = vector.broadcast %cst_44 : f32 to vector<1x128xf32>
    %200 = arith.addf %199, %198 : vector<1x128xf32>
    %201 = arith.divf %199, %200 : vector<1x128xf32>
    %202 = vector.extract_strided_slice %191 {offsets = [0, 128], sizes = [1, 128], strides = [1, 1]} : vector<1x384xf32> to vector<1x128xf32>
    %203 = vector.extract_strided_slice %193 {offsets = [0, 128], sizes = [1, 128], strides = [1, 1]} : vector<1x384xf32> to vector<1x128xf32>
    %204 = arith.addf %202, %203 : vector<1x128xf32>
    %205 = arith.negf %204 : vector<1x128xf32>
    %206 = math.exp %205 : vector<1x128xf32>
    %cst_45 = arith.constant 1.000000e+00 : f32
    %207 = vector.broadcast %cst_45 : f32 to vector<1x128xf32>
    %208 = arith.addf %207, %206 : vector<1x128xf32>
    %209 = arith.divf %207, %208 : vector<1x128xf32>
    %210 = vector.extract_strided_slice %191 {offsets = [0, 256], sizes = [1, 128], strides = [1, 1]} : vector<1x384xf32> to vector<1x128xf32>
    %211 = vector.extract_strided_slice %193 {offsets = [0, 256], sizes = [1, 128], strides = [1, 1]} : vector<1x384xf32> to vector<1x128xf32>
    %212 = arith.mulf %201, %211 : vector<1x128xf32>
    %213 = arith.addf %210, %212 : vector<1x128xf32>
    %214 = math.tanh %213 : vector<1x128xf32>
    %cst_46 = arith.constant 1.000000e+00 : f32
    %215 = vector.broadcast %cst_46 : f32 to vector<1x128xf32>
    %216 = arith.subf %215, %209 : vector<1x128xf32>
    %217 = arith.mulf %216, %214 : vector<1x128xf32>
    %218 = arith.mulf %209, %189 : vector<1x128xf32>
    %219 = arith.addf %217, %218 : vector<1x128xf32>
    %c7_i32 = arith.constant 7 : i32
    %220 = arith.index_cast %c7_i32 : i32 to index
    %c0_47 = arith.constant 0 : index
    %221 = vector.load %arg14[%220, %c0_47] : memref<8x384xf32, #tpu.memory_space<vmem>>, vector<1x384xf32>
    %cst_48 = arith.constant dense<0.000000e+00> : vector<1x384xf32>
    %222 = tpu.matmul %219, %7, %cst_48 {dimension_numbers = #tpu.dot_dimension_numbers<[1], [0], [0], [1], [0, 0, 1, 1], [], []>} : vector<1x128xf32>, vector<128x384xf32>, vector<1x384xf32> -> vector<1x384xf32>
    %223 = arith.addf %222, %8 : vector<1x384xf32>
    %224 = vector.extract_strided_slice %221 {offsets = [0, 0], sizes = [1, 128], strides = [1, 1]} : vector<1x384xf32> to vector<1x128xf32>
    %225 = vector.extract_strided_slice %223 {offsets = [0, 0], sizes = [1, 128], strides = [1, 1]} : vector<1x384xf32> to vector<1x128xf32>
    %226 = arith.addf %224, %225 : vector<1x128xf32>
    %227 = arith.negf %226 : vector<1x128xf32>
    %228 = math.exp %227 : vector<1x128xf32>
    %cst_49 = arith.constant 1.000000e+00 : f32
    %229 = vector.broadcast %cst_49 : f32 to vector<1x128xf32>
    %230 = arith.addf %229, %228 : vector<1x128xf32>
    %231 = arith.divf %229, %230 : vector<1x128xf32>
    %232 = vector.extract_strided_slice %221 {offsets = [0, 128], sizes = [1, 128], strides = [1, 1]} : vector<1x384xf32> to vector<1x128xf32>
    %233 = vector.extract_strided_slice %223 {offsets = [0, 128], sizes = [1, 128], strides = [1, 1]} : vector<1x384xf32> to vector<1x128xf32>
    %234 = arith.addf %232, %233 : vector<1x128xf32>
    %235 = arith.negf %234 : vector<1x128xf32>
    %236 = math.exp %235 : vector<1x128xf32>
    %cst_50 = arith.constant 1.000000e+00 : f32
    %237 = vector.broadcast %cst_50 : f32 to vector<1x128xf32>
    %238 = arith.addf %237, %236 : vector<1x128xf32>
    %239 = arith.divf %237, %238 : vector<1x128xf32>
    %240 = vector.extract_strided_slice %221 {offsets = [0, 256], sizes = [1, 128], strides = [1, 1]} : vector<1x384xf32> to vector<1x128xf32>
    %241 = vector.extract_strided_slice %223 {offsets = [0, 256], sizes = [1, 128], strides = [1, 1]} : vector<1x384xf32> to vector<1x128xf32>
    %242 = arith.mulf %231, %241 : vector<1x128xf32>
    %243 = arith.addf %240, %242 : vector<1x128xf32>
    %244 = math.tanh %243 : vector<1x128xf32>
    %cst_51 = arith.constant 1.000000e+00 : f32
    %245 = vector.broadcast %cst_51 : f32 to vector<1x128xf32>
    %246 = arith.subf %245, %239 : vector<1x128xf32>
    %247 = arith.mulf %246, %244 : vector<1x128xf32>
    %248 = arith.mulf %239, %219 : vector<1x128xf32>
    %249 = arith.addf %247, %248 : vector<1x128xf32>
    %c8_i32 = arith.constant 8 : i32
    %c0_52 = arith.constant 0 : index
    %c0_53 = arith.constant 0 : index
    %250 = vector.load %arg6[%c0_52, %c0_53] : memref<1x384xf32, #tpu.memory_space<vmem>>, vector<1x384xf32>
    %c0_54 = arith.constant 0 : index
    %c0_55 = arith.constant 0 : index
    %251 = vector.load %arg8[%c0_54, %c0_55] : memref<128x512xf32, #tpu.memory_space<vmem>>, vector<128x512xf32>
    %c0_56 = arith.constant 0 : index
    %c0_57 = arith.constant 0 : index
    %252 = vector.load %arg9[%c0_56, %c0_57] : memref<1x512xf32, #tpu.memory_space<vmem>>, vector<1x512xf32>
    %c0_58 = arith.constant 0 : index
    %c0_59 = arith.constant 0 : index
    %253 = vector.load %arg11[%c0_58, %c0_59] : memref<1x128xf32, #tpu.memory_space<vmem>>, vector<1x128xf32>
    %c0_60 = arith.constant 0 : index
    %c0_61 = arith.constant 0 : index
    %254 = vector.load %arg12[%c0_60, %c0_61] : memref<1x1xf32, #tpu.memory_space<vmem>>, vector<1x1xf32>
    %c0_62 = arith.constant 0 : index
    %c0_63 = arith.constant 0 : index
    %255 = vector.load %arg1[%c0_62, %c0_63] : memref<8x3xf32, #tpu.memory_space<vmem>>, vector<8x3xf32>
    %c0_64 = arith.constant 0 : index
    %c0_65 = arith.constant 0 : index
    %256 = vector.load %arg7[%c0_64, %c0_65] : memref<3x384xf32, #tpu.memory_space<vmem>>, vector<3x384xf32>
    %cst_66 = arith.constant dense<0.000000e+00> : vector<8x384xf32>
    %257 = tpu.matmul %255, %256, %cst_66 {dimension_numbers = #tpu.dot_dimension_numbers<[1], [0], [0], [1], [0, 0, 1, 1], [], []>} : vector<8x3xf32>, vector<3x384xf32>, vector<8x384xf32> -> vector<8x384xf32>
    %c0_67 = arith.constant 0 : index
    %c0_68 = arith.constant 0 : index
    %258 = vector.load %arg10[%c0_67, %c0_68] : memref<1x384xf32, #tpu.memory_space<vmem>>, vector<1x384xf32>
    %259 = vector.broadcast %258 : vector<1x384xf32> to vector<8x384xf32>
    %260 = arith.addf %257, %259 : vector<8x384xf32>
    %c0_69 = arith.constant 0 : index
    %c0_70 = arith.constant 0 : index
    %261 = vector.load %arg15[%c0_69, %c0_70] : memref<8x384xf32, #tpu.memory_space<vmem>>, vector<8x384xf32>
    tpu.vector_store %arg15[%c0_69, %c0_70], %260 {strides = array<i32>} : memref<8x384xf32, #tpu.memory_space<vmem>>, vector<8x384xf32>,
    %c7 = arith.constant 7 : index
    %c0_71 = arith.constant 0 : index
    %262 = vector.load %arg0[%c7, %c0_71] : memref<8x4xf32, #tpu.memory_space<vmem>>, vector<1x1xf32>
    %263 = arith.mulf %249, %253 : vector<1x128xf32>
    %cst_72 = arith.constant dense<0.000000e+00> : vector<1xf32>
    %264 = vector.multi_reduction <add>, %263, %cst_72 [1] : vector<1x128xf32> to vector<1xf32>
    %265 = vector.shape_cast %264 : vector<1xf32> to vector<1x1xf32>
    %266 = arith.addf %265, %254 : vector<1x1xf32>
    %c0_73 = arith.constant 0 : index
    %c0_74 = arith.constant 0 : index
    %267 = vector.load %arg15[%c0_73, %c0_74] : memref<8x384xf32, #tpu.memory_space<vmem>>, vector<1x384xf32>
    %268 = arith.subf %262, %266 : vector<1x1xf32>
    %269 = vector.broadcast %268 : vector<1x1xf32> to vector<1x384xf32>
    %270 = arith.mulf %269, %250 : vector<1x384xf32>
    %271 = arith.addf %267, %270 : vector<1x384xf32>
    %c0_75 = arith.constant 0 : index
    %c0_76 = arith.constant 0 : index
    %272 = vector.load %arg15[%c0_75, %c0_76] : memref<8x384xf32, #tpu.memory_space<vmem>>, vector<1x384xf32>
    tpu.vector_store %arg15[%c0_75, %c0_76], %271 {strides = array<i32>} : memref<8x384xf32, #tpu.memory_space<vmem>>, vector<1x384xf32>,
    %c0_i32_77 = arith.constant 0 : i32
    %cst_78 = arith.constant dense<0.000000e+00> : vector<1x512xf32>
    %273 = tpu.matmul %249, %251, %cst_78 {dimension_numbers = #tpu.dot_dimension_numbers<[1], [0], [0], [1], [0, 0, 1, 1], [], []>} : vector<1x128xf32>, vector<128x512xf32>, vector<1x512xf32> -> vector<1x512xf32>
    %274 = arith.addf %273, %252 : vector<1x512xf32>
    %275 = arith.index_cast %c0_i32_77 : i32 to index
    %c0_79 = arith.constant 0 : index
    %276 = vector.load %arg15[%275, %c0_79] : memref<8x384xf32, #tpu.memory_space<vmem>>, vector<1x384xf32>
    %277 = vector.extract_strided_slice %276 {offsets = [0, 0], sizes = [1, 128], strides = [1, 1]} : vector<1x384xf32> to vector<1x128xf32>
    %278 = vector.extract_strided_slice %274 {offsets = [0, 0], sizes = [1, 128], strides = [1, 1]} : vector<1x512xf32> to vector<1x128xf32>
    %279 = arith.addf %277, %278 : vector<1x128xf32>
    %280 = arith.negf %279 : vector<1x128xf32>
    %281 = math.exp %280 : vector<1x128xf32>
    %cst_80 = arith.constant 1.000000e+00 : f32
    %282 = vector.broadcast %cst_80 : f32 to vector<1x128xf32>
    %283 = arith.addf %282, %281 : vector<1x128xf32>
    %284 = arith.divf %282, %283 : vector<1x128xf32>
    %285 = vector.extract_strided_slice %276 {offsets = [0, 128], sizes = [1, 128], strides = [1, 1]} : vector<1x384xf32> to vector<1x128xf32>
    %286 = vector.extract_strided_slice %274 {offsets = [0, 128], sizes = [1, 128], strides = [1, 1]} : vector<1x512xf32> to vector<1x128xf32>
    %287 = arith.addf %285, %286 : vector<1x128xf32>
    %288 = arith.negf %287 : vector<1x128xf32>
    %289 = math.exp %288 : vector<1x128xf32>
    %cst_81 = arith.constant 1.000000e+00 : f32
    %290 = vector.broadcast %cst_81 : f32 to vector<1x128xf32>
    %291 = arith.addf %290, %289 : vector<1x128xf32>
    %292 = arith.divf %290, %291 : vector<1x128xf32>
    %293 = vector.extract_strided_slice %276 {offsets = [0, 256], sizes = [1, 128], strides = [1, 1]} : vector<1x384xf32> to vector<1x128xf32>
    %294 = vector.extract_strided_slice %274 {offsets = [0, 384], sizes = [1, 128], strides = [1, 1]} : vector<1x512xf32> to vector<1x128xf32>
    %295 = arith.addf %293, %294 : vector<1x128xf32>
    %296 = vector.extract_strided_slice %274 {offsets = [0, 256], sizes = [1, 128], strides = [1, 1]} : vector<1x512xf32> to vector<1x128xf32>
    %297 = arith.mulf %284, %296 : vector<1x128xf32>
    %298 = arith.addf %295, %297 : vector<1x128xf32>
    %299 = math.tanh %298 : vector<1x128xf32>
    %cst_82 = arith.constant 1.000000e+00 : f32
    %300 = vector.broadcast %cst_82 : f32 to vector<1x128xf32>
    %301 = arith.subf %300, %292 : vector<1x128xf32>
    %302 = arith.mulf %301, %299 : vector<1x128xf32>
    %303 = arith.mulf %292, %249 : vector<1x128xf32>
    %304 = arith.addf %302, %303 : vector<1x128xf32>
    %305 = arith.index_cast %c0_i32_77 : i32 to index
    %c0_83 = arith.constant 0 : index
    %306 = vector.load %arg16[%305, %c0_83] : memref<8x128xf32, #tpu.memory_space<vmem>>, vector<1x128xf32>
    tpu.vector_store %arg16[%305, %c0_83], %304 {strides = array<i32>} : memref<8x128xf32, #tpu.memory_space<vmem>>, vector<1x128xf32>,
    %c1_i32_84 = arith.constant 1 : i32
    %cst_85 = arith.constant dense<0.000000e+00> : vector<1x512xf32>
    %307 = tpu.matmul %304, %251, %cst_85 {dimension_numbers = #tpu.dot_dimension_numbers<[1], [0], [0], [1], [0, 0, 1, 1], [], []>} : vector<1x128xf32>, vector<128x512xf32>, vector<1x512xf32> -> vector<1x512xf32>
    %308 = arith.addf %307, %252 : vector<1x512xf32>
    %309 = arith.index_cast %c1_i32_84 : i32 to index
    %c0_86 = arith.constant 0 : index
    %310 = vector.load %arg15[%309, %c0_86] : memref<8x384xf32, #tpu.memory_space<vmem>>, vector<1x384xf32>
    %311 = vector.extract_strided_slice %310 {offsets = [0, 0], sizes = [1, 128], strides = [1, 1]} : vector<1x384xf32> to vector<1x128xf32>
    %312 = vector.extract_strided_slice %308 {offsets = [0, 0], sizes = [1, 128], strides = [1, 1]} : vector<1x512xf32> to vector<1x128xf32>
    %313 = arith.addf %311, %312 : vector<1x128xf32>
    %314 = arith.negf %313 : vector<1x128xf32>
    %315 = math.exp %314 : vector<1x128xf32>
    %cst_87 = arith.constant 1.000000e+00 : f32
    %316 = vector.broadcast %cst_87 : f32 to vector<1x128xf32>
    %317 = arith.addf %316, %315 : vector<1x128xf32>
    %318 = arith.divf %316, %317 : vector<1x128xf32>
    %319 = vector.extract_strided_slice %310 {offsets = [0, 128], sizes = [1, 128], strides = [1, 1]} : vector<1x384xf32> to vector<1x128xf32>
    %320 = vector.extract_strided_slice %308 {offsets = [0, 128], sizes = [1, 128], strides = [1, 1]} : vector<1x512xf32> to vector<1x128xf32>
    %321 = arith.addf %319, %320 : vector<1x128xf32>
    %322 = arith.negf %321 : vector<1x128xf32>
    %323 = math.exp %322 : vector<1x128xf32>
    %cst_88 = arith.constant 1.000000e+00 : f32
    %324 = vector.broadcast %cst_88 : f32 to vector<1x128xf32>
    %325 = arith.addf %324, %323 : vector<1x128xf32>
    %326 = arith.divf %324, %325 : vector<1x128xf32>
    %327 = vector.extract_strided_slice %310 {offsets = [0, 256], sizes = [1, 128], strides = [1, 1]} : vector<1x384xf32> to vector<1x128xf32>
    %328 = vector.extract_strided_slice %308 {offsets = [0, 384], sizes = [1, 128], strides = [1, 1]} : vector<1x512xf32> to vector<1x128xf32>
    %329 = arith.addf %327, %328 : vector<1x128xf32>
    %330 = vector.extract_strided_slice %308 {offsets = [0, 256], sizes = [1, 128], strides = [1, 1]} : vector<1x512xf32> to vector<1x128xf32>
    %331 = arith.mulf %318, %330 : vector<1x128xf32>
    %332 = arith.addf %329, %331 : vector<1x128xf32>
    %333 = math.tanh %332 : vector<1x128xf32>
    %cst_89 = arith.constant 1.000000e+00 : f32
    %334 = vector.broadcast %cst_89 : f32 to vector<1x128xf32>
    %335 = arith.subf %334, %326 : vector<1x128xf32>
    %336 = arith.mulf %335, %333 : vector<1x128xf32>
    %337 = arith.mulf %326, %304 : vector<1x128xf32>
    %338 = arith.addf %336, %337 : vector<1x128xf32>
    %339 = arith.index_cast %c1_i32_84 : i32 to index
    %c0_90 = arith.constant 0 : index
    %340 = vector.load %arg16[%339, %c0_90] : memref<8x128xf32, #tpu.memory_space<vmem>>, vector<1x128xf32>
    tpu.vector_store %arg16[%339, %c0_90], %338 {strides = array<i32>} : memref<8x128xf32, #tpu.memory_space<vmem>>, vector<1x128xf32>,
    %c2_i32_91 = arith.constant 2 : i32
    %cst_92 = arith.constant dense<0.000000e+00> : vector<1x512xf32>
    %341 = tpu.matmul %338, %251, %cst_92 {dimension_numbers = #tpu.dot_dimension_numbers<[1], [0], [0], [1], [0, 0, 1, 1], [], []>} : vector<1x128xf32>, vector<128x512xf32>, vector<1x512xf32> -> vector<1x512xf32>
    %342 = arith.addf %341, %252 : vector<1x512xf32>
    %343 = arith.index_cast %c2_i32_91 : i32 to index
    %c0_93 = arith.constant 0 : index
    %344 = vector.load %arg15[%343, %c0_93] : memref<8x384xf32, #tpu.memory_space<vmem>>, vector<1x384xf32>
    %345 = vector.extract_strided_slice %344 {offsets = [0, 0], sizes = [1, 128], strides = [1, 1]} : vector<1x384xf32> to vector<1x128xf32>
    %346 = vector.extract_strided_slice %342 {offsets = [0, 0], sizes = [1, 128], strides = [1, 1]} : vector<1x512xf32> to vector<1x128xf32>
    %347 = arith.addf %345, %346 : vector<1x128xf32>
    %348 = arith.negf %347 : vector<1x128xf32>
    %349 = math.exp %348 : vector<1x128xf32>
    %cst_94 = arith.constant 1.000000e+00 : f32
    %350 = vector.broadcast %cst_94 : f32 to vector<1x128xf32>
    %351 = arith.addf %350, %349 : vector<1x128xf32>
    %352 = arith.divf %350, %351 : vector<1x128xf32>
    %353 = vector.extract_strided_slice %344 {offsets = [0, 128], sizes = [1, 128], strides = [1, 1]} : vector<1x384xf32> to vector<1x128xf32>
    %354 = vector.extract_strided_slice %342 {offsets = [0, 128], sizes = [1, 128], strides = [1, 1]} : vector<1x512xf32> to vector<1x128xf32>
    %355 = arith.addf %353, %354 : vector<1x128xf32>
    %356 = arith.negf %355 : vector<1x128xf32>
    %357 = math.exp %356 : vector<1x128xf32>
    %cst_95 = arith.constant 1.000000e+00 : f32
    %358 = vector.broadcast %cst_95 : f32 to vector<1x128xf32>
    %359 = arith.addf %358, %357 : vector<1x128xf32>
    %360 = arith.divf %358, %359 : vector<1x128xf32>
    %361 = vector.extract_strided_slice %344 {offsets = [0, 256], sizes = [1, 128], strides = [1, 1]} : vector<1x384xf32> to vector<1x128xf32>
    %362 = vector.extract_strided_slice %342 {offsets = [0, 384], sizes = [1, 128], strides = [1, 1]} : vector<1x512xf32> to vector<1x128xf32>
    %363 = arith.addf %361, %362 : vector<1x128xf32>
    %364 = vector.extract_strided_slice %342 {offsets = [0, 256], sizes = [1, 128], strides = [1, 1]} : vector<1x512xf32> to vector<1x128xf32>
    %365 = arith.mulf %352, %364 : vector<1x128xf32>
    %366 = arith.addf %363, %365 : vector<1x128xf32>
    %367 = math.tanh %366 : vector<1x128xf32>
    %cst_96 = arith.constant 1.000000e+00 : f32
    %368 = vector.broadcast %cst_96 : f32 to vector<1x128xf32>
    %369 = arith.subf %368, %360 : vector<1x128xf32>
    %370 = arith.mulf %369, %367 : vector<1x128xf32>
    %371 = arith.mulf %360, %338 : vector<1x128xf32>
    %372 = arith.addf %370, %371 : vector<1x128xf32>
    %373 = arith.index_cast %c2_i32_91 : i32 to index
    %c0_97 = arith.constant 0 : index
    %374 = vector.load %arg16[%373, %c0_97] : memref<8x128xf32, #tpu.memory_space<vmem>>, vector<1x128xf32>
    tpu.vector_store %arg16[%373, %c0_97], %372 {strides = array<i32>} : memref<8x128xf32, #tpu.memory_space<vmem>>, vector<1x128xf32>,
    %c3_i32_98 = arith.constant 3 : i32
    %cst_99 = arith.constant dense<0.000000e+00> : vector<1x512xf32>
    %375 = tpu.matmul %372, %251, %cst_99 {dimension_numbers = #tpu.dot_dimension_numbers<[1], [0], [0], [1], [0, 0, 1, 1], [], []>} : vector<1x128xf32>, vector<128x512xf32>, vector<1x512xf32> -> vector<1x512xf32>
    %376 = arith.addf %375, %252 : vector<1x512xf32>
    %377 = arith.index_cast %c3_i32_98 : i32 to index
    %c0_100 = arith.constant 0 : index
    %378 = vector.load %arg15[%377, %c0_100] : memref<8x384xf32, #tpu.memory_space<vmem>>, vector<1x384xf32>
    %379 = vector.extract_strided_slice %378 {offsets = [0, 0], sizes = [1, 128], strides = [1, 1]} : vector<1x384xf32> to vector<1x128xf32>
    %380 = vector.extract_strided_slice %376 {offsets = [0, 0], sizes = [1, 128], strides = [1, 1]} : vector<1x512xf32> to vector<1x128xf32>
    %381 = arith.addf %379, %380 : vector<1x128xf32>
    %382 = arith.negf %381 : vector<1x128xf32>
    %383 = math.exp %382 : vector<1x128xf32>
    %cst_101 = arith.constant 1.000000e+00 : f32
    %384 = vector.broadcast %cst_101 : f32 to vector<1x128xf32>
    %385 = arith.addf %384, %383 : vector<1x128xf32>
    %386 = arith.divf %384, %385 : vector<1x128xf32>
    %387 = vector.extract_strided_slice %378 {offsets = [0, 128], sizes = [1, 128], strides = [1, 1]} : vector<1x384xf32> to vector<1x128xf32>
    %388 = vector.extract_strided_slice %376 {offsets = [0, 128], sizes = [1, 128], strides = [1, 1]} : vector<1x512xf32> to vector<1x128xf32>
    %389 = arith.addf %387, %388 : vector<1x128xf32>
    %390 = arith.negf %389 : vector<1x128xf32>
    %391 = math.exp %390 : vector<1x128xf32>
    %cst_102 = arith.constant 1.000000e+00 : f32
    %392 = vector.broadcast %cst_102 : f32 to vector<1x128xf32>
    %393 = arith.addf %392, %391 : vector<1x128xf32>
    %394 = arith.divf %392, %393 : vector<1x128xf32>
    %395 = vector.extract_strided_slice %378 {offsets = [0, 256], sizes = [1, 128], strides = [1, 1]} : vector<1x384xf32> to vector<1x128xf32>
    %396 = vector.extract_strided_slice %376 {offsets = [0, 384], sizes = [1, 128], strides = [1, 1]} : vector<1x512xf32> to vector<1x128xf32>
    %397 = arith.addf %395, %396 : vector<1x128xf32>
    %398 = vector.extract_strided_slice %376 {offsets = [0, 256], sizes = [1, 128], strides = [1, 1]} : vector<1x512xf32> to vector<1x128xf32>
    %399 = arith.mulf %386, %398 : vector<1x128xf32>
    %400 = arith.addf %397, %399 : vector<1x128xf32>
    %401 = math.tanh %400 : vector<1x128xf32>
    %cst_103 = arith.constant 1.000000e+00 : f32
    %402 = vector.broadcast %cst_103 : f32 to vector<1x128xf32>
    %403 = arith.subf %402, %394 : vector<1x128xf32>
    %404 = arith.mulf %403, %401 : vector<1x128xf32>
    %405 = arith.mulf %394, %372 : vector<1x128xf32>
    %406 = arith.addf %404, %405 : vector<1x128xf32>
    %407 = arith.index_cast %c3_i32_98 : i32 to index
    %c0_104 = arith.constant 0 : index
    %408 = vector.load %arg16[%407, %c0_104] : memref<8x128xf32, #tpu.memory_space<vmem>>, vector<1x128xf32>
    tpu.vector_store %arg16[%407, %c0_104], %406 {strides = array<i32>} : memref<8x128xf32, #tpu.memory_space<vmem>>, vector<1x128xf32>,
    %c4_i32_105 = arith.constant 4 : i32
    %cst_106 = arith.constant dense<0.000000e+00> : vector<1x512xf32>
    %409 = tpu.matmul %406, %251, %cst_106 {dimension_numbers = #tpu.dot_dimension_numbers<[1], [0], [0], [1], [0, 0, 1, 1], [], []>} : vector<1x128xf32>, vector<128x512xf32>, vector<1x512xf32> -> vector<1x512xf32>
    %410 = arith.addf %409, %252 : vector<1x512xf32>
    %411 = arith.index_cast %c4_i32_105 : i32 to index
    %c0_107 = arith.constant 0 : index
    %412 = vector.load %arg15[%411, %c0_107] : memref<8x384xf32, #tpu.memory_space<vmem>>, vector<1x384xf32>
    %413 = vector.extract_strided_slice %412 {offsets = [0, 0], sizes = [1, 128], strides = [1, 1]} : vector<1x384xf32> to vector<1x128xf32>
    %414 = vector.extract_strided_slice %410 {offsets = [0, 0], sizes = [1, 128], strides = [1, 1]} : vector<1x512xf32> to vector<1x128xf32>
    %415 = arith.addf %413, %414 : vector<1x128xf32>
    %416 = arith.negf %415 : vector<1x128xf32>
    %417 = math.exp %416 : vector<1x128xf32>
    %cst_108 = arith.constant 1.000000e+00 : f32
    %418 = vector.broadcast %cst_108 : f32 to vector<1x128xf32>
    %419 = arith.addf %418, %417 : vector<1x128xf32>
    %420 = arith.divf %418, %419 : vector<1x128xf32>
    %421 = vector.extract_strided_slice %412 {offsets = [0, 128], sizes = [1, 128], strides = [1, 1]} : vector<1x384xf32> to vector<1x128xf32>
    %422 = vector.extract_strided_slice %410 {offsets = [0, 128], sizes = [1, 128], strides = [1, 1]} : vector<1x512xf32> to vector<1x128xf32>
    %423 = arith.addf %421, %422 : vector<1x128xf32>
    %424 = arith.negf %423 : vector<1x128xf32>
    %425 = math.exp %424 : vector<1x128xf32>
    %cst_109 = arith.constant 1.000000e+00 : f32
    %426 = vector.broadcast %cst_109 : f32 to vector<1x128xf32>
    %427 = arith.addf %426, %425 : vector<1x128xf32>
    %428 = arith.divf %426, %427 : vector<1x128xf32>
    %429 = vector.extract_strided_slice %412 {offsets = [0, 256], sizes = [1, 128], strides = [1, 1]} : vector<1x384xf32> to vector<1x128xf32>
    %430 = vector.extract_strided_slice %410 {offsets = [0, 384], sizes = [1, 128], strides = [1, 1]} : vector<1x512xf32> to vector<1x128xf32>
    %431 = arith.addf %429, %430 : vector<1x128xf32>
    %432 = vector.extract_strided_slice %410 {offsets = [0, 256], sizes = [1, 128], strides = [1, 1]} : vector<1x512xf32> to vector<1x128xf32>
    %433 = arith.mulf %420, %432 : vector<1x128xf32>
    %434 = arith.addf %431, %433 : vector<1x128xf32>
    %435 = math.tanh %434 : vector<1x128xf32>
    %cst_110 = arith.constant 1.000000e+00 : f32
    %436 = vector.broadcast %cst_110 : f32 to vector<1x128xf32>
    %437 = arith.subf %436, %428 : vector<1x128xf32>
    %438 = arith.mulf %437, %435 : vector<1x128xf32>
    %439 = arith.mulf %428, %406 : vector<1x128xf32>
    %440 = arith.addf %438, %439 : vector<1x128xf32>
    %441 = arith.index_cast %c4_i32_105 : i32 to index
    %c0_111 = arith.constant 0 : index
    %442 = vector.load %arg16[%441, %c0_111] : memref<8x128xf32, #tpu.memory_space<vmem>>, vector<1x128xf32>
    tpu.vector_store %arg16[%441, %c0_111], %440 {strides = array<i32>} : memref<8x128xf32, #tpu.memory_space<vmem>>, vector<1x128xf32>,
    %c5_i32_112 = arith.constant 5 : i32
    %cst_113 = arith.constant dense<0.000000e+00> : vector<1x512xf32>
    %443 = tpu.matmul %440, %251, %cst_113 {dimension_numbers = #tpu.dot_dimension_numbers<[1], [0], [0], [1], [0, 0, 1, 1], [], []>} : vector<1x128xf32>, vector<128x512xf32>, vector<1x512xf32> -> vector<1x512xf32>
    %444 = arith.addf %443, %252 : vector<1x512xf32>
    %445 = arith.index_cast %c5_i32_112 : i32 to index
    %c0_114 = arith.constant 0 : index
    %446 = vector.load %arg15[%445, %c0_114] : memref<8x384xf32, #tpu.memory_space<vmem>>, vector<1x384xf32>
    %447 = vector.extract_strided_slice %446 {offsets = [0, 0], sizes = [1, 128], strides = [1, 1]} : vector<1x384xf32> to vector<1x128xf32>
    %448 = vector.extract_strided_slice %444 {offsets = [0, 0], sizes = [1, 128], strides = [1, 1]} : vector<1x512xf32> to vector<1x128xf32>
    %449 = arith.addf %447, %448 : vector<1x128xf32>
    %450 = arith.negf %449 : vector<1x128xf32>
    %451 = math.exp %450 : vector<1x128xf32>
    %cst_115 = arith.constant 1.000000e+00 : f32
    %452 = vector.broadcast %cst_115 : f32 to vector<1x128xf32>
    %453 = arith.addf %452, %451 : vector<1x128xf32>
    %454 = arith.divf %452, %453 : vector<1x128xf32>
    %455 = vector.extract_strided_slice %446 {offsets = [0, 128], sizes = [1, 128], strides = [1, 1]} : vector<1x384xf32> to vector<1x128xf32>
    %456 = vector.extract_strided_slice %444 {offsets = [0, 128], sizes = [1, 128], strides = [1, 1]} : vector<1x512xf32> to vector<1x128xf32>
    %457 = arith.addf %455, %456 : vector<1x128xf32>
    %458 = arith.negf %457 : vector<1x128xf32>
    %459 = math.exp %458 : vector<1x128xf32>
    %cst_116 = arith.constant 1.000000e+00 : f32
    %460 = vector.broadcast %cst_116 : f32 to vector<1x128xf32>
    %461 = arith.addf %460, %459 : vector<1x128xf32>
    %462 = arith.divf %460, %461 : vector<1x128xf32>
    %463 = vector.extract_strided_slice %446 {offsets = [0, 256], sizes = [1, 128], strides = [1, 1]} : vector<1x384xf32> to vector<1x128xf32>
    %464 = vector.extract_strided_slice %444 {offsets = [0, 384], sizes = [1, 128], strides = [1, 1]} : vector<1x512xf32> to vector<1x128xf32>
    %465 = arith.addf %463, %464 : vector<1x128xf32>
    %466 = vector.extract_strided_slice %444 {offsets = [0, 256], sizes = [1, 128], strides = [1, 1]} : vector<1x512xf32> to vector<1x128xf32>
    %467 = arith.mulf %454, %466 : vector<1x128xf32>
    %468 = arith.addf %465, %467 : vector<1x128xf32>
    %469 = math.tanh %468 : vector<1x128xf32>
    %cst_117 = arith.constant 1.000000e+00 : f32
    %470 = vector.broadcast %cst_117 : f32 to vector<1x128xf32>
    %471 = arith.subf %470, %462 : vector<1x128xf32>
    %472 = arith.mulf %471, %469 : vector<1x128xf32>
    %473 = arith.mulf %462, %440 : vector<1x128xf32>
    %474 = arith.addf %472, %473 : vector<1x128xf32>
    %475 = arith.index_cast %c5_i32_112 : i32 to index
    %c0_118 = arith.constant 0 : index
    %476 = vector.load %arg16[%475, %c0_118] : memref<8x128xf32, #tpu.memory_space<vmem>>, vector<1x128xf32>
    tpu.vector_store %arg16[%475, %c0_118], %474 {strides = array<i32>} : memref<8x128xf32, #tpu.memory_space<vmem>>, vector<1x128xf32>,
    %c6_i32_119 = arith.constant 6 : i32
    %cst_120 = arith.constant dense<0.000000e+00> : vector<1x512xf32>
    %477 = tpu.matmul %474, %251, %cst_120 {dimension_numbers = #tpu.dot_dimension_numbers<[1], [0], [0], [1], [0, 0, 1, 1], [], []>} : vector<1x128xf32>, vector<128x512xf32>, vector<1x512xf32> -> vector<1x512xf32>
    %478 = arith.addf %477, %252 : vector<1x512xf32>
    %479 = arith.index_cast %c6_i32_119 : i32 to index
    %c0_121 = arith.constant 0 : index
    %480 = vector.load %arg15[%479, %c0_121] : memref<8x384xf32, #tpu.memory_space<vmem>>, vector<1x384xf32>
    %481 = vector.extract_strided_slice %480 {offsets = [0, 0], sizes = [1, 128], strides = [1, 1]} : vector<1x384xf32> to vector<1x128xf32>
    %482 = vector.extract_strided_slice %478 {offsets = [0, 0], sizes = [1, 128], strides = [1, 1]} : vector<1x512xf32> to vector<1x128xf32>
    %483 = arith.addf %481, %482 : vector<1x128xf32>
    %484 = arith.negf %483 : vector<1x128xf32>
    %485 = math.exp %484 : vector<1x128xf32>
    %cst_122 = arith.constant 1.000000e+00 : f32
    %486 = vector.broadcast %cst_122 : f32 to vector<1x128xf32>
    %487 = arith.addf %486, %485 : vector<1x128xf32>
    %488 = arith.divf %486, %487 : vector<1x128xf32>
    %489 = vector.extract_strided_slice %480 {offsets = [0, 128], sizes = [1, 128], strides = [1, 1]} : vector<1x384xf32> to vector<1x128xf32>
    %490 = vector.extract_strided_slice %478 {offsets = [0, 128], sizes = [1, 128], strides = [1, 1]} : vector<1x512xf32> to vector<1x128xf32>
    %491 = arith.addf %489, %490 : vector<1x128xf32>
    %492 = arith.negf %491 : vector<1x128xf32>
    %493 = math.exp %492 : vector<1x128xf32>
    %cst_123 = arith.constant 1.000000e+00 : f32
    %494 = vector.broadcast %cst_123 : f32 to vector<1x128xf32>
    %495 = arith.addf %494, %493 : vector<1x128xf32>
    %496 = arith.divf %494, %495 : vector<1x128xf32>
    %497 = vector.extract_strided_slice %480 {offsets = [0, 256], sizes = [1, 128], strides = [1, 1]} : vector<1x384xf32> to vector<1x128xf32>
    %498 = vector.extract_strided_slice %478 {offsets = [0, 384], sizes = [1, 128], strides = [1, 1]} : vector<1x512xf32> to vector<1x128xf32>
    %499 = arith.addf %497, %498 : vector<1x128xf32>
    %500 = vector.extract_strided_slice %478 {offsets = [0, 256], sizes = [1, 128], strides = [1, 1]} : vector<1x512xf32> to vector<1x128xf32>
    %501 = arith.mulf %488, %500 : vector<1x128xf32>
    %502 = arith.addf %499, %501 : vector<1x128xf32>
    %503 = math.tanh %502 : vector<1x128xf32>
    %cst_124 = arith.constant 1.000000e+00 : f32
    %504 = vector.broadcast %cst_124 : f32 to vector<1x128xf32>
    %505 = arith.subf %504, %496 : vector<1x128xf32>
    %506 = arith.mulf %505, %503 : vector<1x128xf32>
    %507 = arith.mulf %496, %474 : vector<1x128xf32>
    %508 = arith.addf %506, %507 : vector<1x128xf32>
    %509 = arith.index_cast %c6_i32_119 : i32 to index
    %c0_125 = arith.constant 0 : index
    %510 = vector.load %arg16[%509, %c0_125] : memref<8x128xf32, #tpu.memory_space<vmem>>, vector<1x128xf32>
    tpu.vector_store %arg16[%509, %c0_125], %508 {strides = array<i32>} : memref<8x128xf32, #tpu.memory_space<vmem>>, vector<1x128xf32>,
    %c7_i32_126 = arith.constant 7 : i32
    %cst_127 = arith.constant dense<0.000000e+00> : vector<1x512xf32>
    %511 = tpu.matmul %508, %251, %cst_127 {dimension_numbers = #tpu.dot_dimension_numbers<[1], [0], [0], [1], [0, 0, 1, 1], [], []>} : vector<1x128xf32>, vector<128x512xf32>, vector<1x512xf32> -> vector<1x512xf32>
    %512 = arith.addf %511, %252 : vector<1x512xf32>
    %513 = arith.index_cast %c7_i32_126 : i32 to index
    %c0_128 = arith.constant 0 : index
    %514 = vector.load %arg15[%513, %c0_128] : memref<8x384xf32, #tpu.memory_space<vmem>>, vector<1x384xf32>
    %515 = vector.extract_strided_slice %514 {offsets = [0, 0], sizes = [1, 128], strides = [1, 1]} : vector<1x384xf32> to vector<1x128xf32>
    %516 = vector.extract_strided_slice %512 {offsets = [0, 0], sizes = [1, 128], strides = [1, 1]} : vector<1x512xf32> to vector<1x128xf32>
    %517 = arith.addf %515, %516 : vector<1x128xf32>
    %518 = arith.negf %517 : vector<1x128xf32>
    %519 = math.exp %518 : vector<1x128xf32>
    %cst_129 = arith.constant 1.000000e+00 : f32
    %520 = vector.broadcast %cst_129 : f32 to vector<1x128xf32>
    %521 = arith.addf %520, %519 : vector<1x128xf32>
    %522 = arith.divf %520, %521 : vector<1x128xf32>
    %523 = vector.extract_strided_slice %514 {offsets = [0, 128], sizes = [1, 128], strides = [1, 1]} : vector<1x384xf32> to vector<1x128xf32>
    %524 = vector.extract_strided_slice %512 {offsets = [0, 128], sizes = [1, 128], strides = [1, 1]} : vector<1x512xf32> to vector<1x128xf32>
    %525 = arith.addf %523, %524 : vector<1x128xf32>
    %526 = arith.negf %525 : vector<1x128xf32>
    %527 = math.exp %526 : vector<1x128xf32>
    %cst_130 = arith.constant 1.000000e+00 : f32
    %528 = vector.broadcast %cst_130 : f32 to vector<1x128xf32>
    %529 = arith.addf %528, %527 : vector<1x128xf32>
    %530 = arith.divf %528, %529 : vector<1x128xf32>
    %531 = vector.extract_strided_slice %514 {offsets = [0, 256], sizes = [1, 128], strides = [1, 1]} : vector<1x384xf32> to vector<1x128xf32>
    %532 = vector.extract_strided_slice %512 {offsets = [0, 384], sizes = [1, 128], strides = [1, 1]} : vector<1x512xf32> to vector<1x128xf32>
    %533 = arith.addf %531, %532 : vector<1x128xf32>
    %534 = vector.extract_strided_slice %512 {offsets = [0, 256], sizes = [1, 128], strides = [1, 1]} : vector<1x512xf32> to vector<1x128xf32>
    %535 = arith.mulf %522, %534 : vector<1x128xf32>
    %536 = arith.addf %533, %535 : vector<1x128xf32>
    %537 = math.tanh %536 : vector<1x128xf32>
    %cst_131 = arith.constant 1.000000e+00 : f32
    %538 = vector.broadcast %cst_131 : f32 to vector<1x128xf32>
    %539 = arith.subf %538, %530 : vector<1x128xf32>
    %540 = arith.mulf %539, %537 : vector<1x128xf32>
    %541 = arith.mulf %530, %508 : vector<1x128xf32>
    %542 = arith.addf %540, %541 : vector<1x128xf32>
    %543 = arith.index_cast %c7_i32_126 : i32 to index
    %c0_132 = arith.constant 0 : index
    %544 = vector.load %arg16[%543, %c0_132] : memref<8x128xf32, #tpu.memory_space<vmem>>, vector<1x128xf32>
    tpu.vector_store %arg16[%543, %c0_132], %542 {strides = array<i32>} : memref<8x128xf32, #tpu.memory_space<vmem>>, vector<1x128xf32>,
    %c8_i32_133 = arith.constant 8 : i32
    %c0_134 = arith.constant 0 : index
    %c0_135 = arith.constant 0 : index
    %545 = vector.load %arg16[%c0_134, %c0_135] : memref<8x128xf32, #tpu.memory_space<vmem>>, vector<8x128xf32>
    %546 = vector.broadcast %253 : vector<1x128xf32> to vector<8x128xf32>
    %547 = arith.mulf %545, %546 : vector<8x128xf32>
    %cst_136 = arith.constant dense<0.000000e+00> : vector<8xf32>
    %548 = vector.multi_reduction <add>, %547, %cst_136 [1] : vector<8x128xf32> to vector<8xf32>
    %549 = vector.shape_cast %548 : vector<8xf32> to vector<8x1xf32>
    %550 = vector.broadcast %254 : vector<1x1xf32> to vector<8x1xf32>
    %551 = arith.addf %549, %550 : vector<8x1xf32>
    %c0_137 = arith.constant 0 : index
    %c0_138 = arith.constant 0 : index
    %552 = vector.load %arg13[%c0_137, %c0_138] : memref<8x1xf32, #tpu.memory_space<vmem>>, vector<8x1xf32>
    tpu.vector_store %arg13[%c0_137, %c0_138], %551 {strides = array<i32>} : memref<8x1xf32, #tpu.memory_space<vmem>>, vector<8x1xf32>,
    return
  }
}

</mosaic_0001>

<llo_original>
// kernel: encoder_decoder_rnn.1
$region0: #{encoder_decoder_rnn.1}
  #allocation0 [shape = 'u32[]', space=smem, size = 0x4, offset = 0x4, fixed_abs, tag = 'smem constant byte address 0x4 - core index']
  #allocation1 [shape = 'u32[144,128]{1,0:T(1,128)}', space=vmem, size = 0x12000, scoped, tag = 'internal scratch']
  #allocation2 [shape = 'f32[8,384]{1,0:T(8,128)}', space=vmem, size = 0x3000, scoped, tag = 'scratch operand']
  #allocation3 [shape = 'f32[8,384]{1,0:T(8,128)}', space=vmem, size = 0x3000, scoped, tag = 'scratch operand']
  #allocation4 [shape = 'f32[8,128]{1,0:T(8,128)}', space=vmem, size = 0x1000, scoped, tag = 'scratch operand']
  #allocation5 [shape = 'f32[1,1]{1,0:T(1,128)S(1)}', space=vmem, size = 0x200, scoped, tag = 'scoped memory for encoder_decoder_rnn.1']
  %s0 = inlined_call_operand.vmem [shape: f32[8,4], index: 0, kind: input, shape index: {}]
  %s1 = inlined_call_operand.vmem [shape: f32[8,3], index: 1, kind: input, shape index: {}]
  %s2 = inlined_call_operand.vmem [shape: f32[4,384], index: 2, kind: input, shape index: {}]
  %s3 = inlined_call_operand.hbm [shape: f32[128,384], index: 3, kind: input, shape index: {}]
  %s4 = inlined_call_operand.vmem [shape: f32[1,384], index: 4, kind: input, shape index: {}]
  %s5 = inlined_call_operand.vmem [shape: f32[1,384], index: 5, kind: input, shape index: {}]
  %s6 = inlined_call_operand.vmem [shape: f32[1,384], index: 6, kind: input, shape index: {}]
  %s7 = inlined_call_operand.vmem [shape: f32[3,384], index: 7, kind: input, shape index: {}]
  %s8 = inlined_call_operand.hbm [shape: f32[128,512], index: 8, kind: input, shape index: {}]
  %s9 = inlined_call_operand.vmem [shape: f32[1,512], index: 9, kind: input, shape index: {}]
  %s10 = inlined_call_operand.hbm [shape: f32[1,384], index: 10, kind: input, shape index: {}]
  %s11 = inlined_call_operand.vmem [shape: f32[1,128], index: 11, kind: input, shape index: {}]
  %s12 = inlined_call_operand.<no memory space> [shape: f32[1,1], index: 12, kind: input, shape index: {}]
  %s13 = inlined_call_operand.vmem [shape: f32[8,1], index: 13, kind: output, shape index: {}]
  %s14 = sld [smem:[#allocation0]]
  $region74: #{encoder_decoder_rnn.1} parent=0
    _
  %s16 = ssub.s32 1, %s14
  %s17 = scalar_select 0, %s16, %s14
  %v18 = vstv %s12
  %19 = vst [vmem:[#allocation5] sm:$0x1] %v18
  $region1: #{encoder_decoder_rnn.1} parent=0
    #allocation6 [shape = 'u8[196608]{0}', space=vmem, size = 0x30000, scoped, tag = 'input window, operand 3, single buffered']
    #allocation7 [shape = 's32[1]{0}', space=sflag, size = 0x4, scoped, tag = 'scoped memory for encoder_decoder_rnn.1']
    #allocation8 [shape = 'u8[262144]{0}', space=vmem, size = 0x40000, scoped, tag = 'input window, operand 8, single buffered']
    #allocation9 [shape = 's32[1]{0}', space=sflag, size = 0x4, scoped, tag = 'scoped memory for encoder_decoder_rnn.1']
    #allocation10 [shape = 'u8[1536]{0}', space=vmem, size = 0x800, scoped, tag = 'input window, operand 10, single buffered']
    %20 = vsyncpa [#allocation7], 0
    %21 = vsyncpa [#allocation9], 0
    // Predicated region
    $region2: #{encoder_decoder_rnn.1} parent=1 // pred_check
      _
    $region3: #{encoder_decoder_rnn.1} parent=1 // pred_check_branch
      %23 = sbr.rel (0) target = $region5
    $region4: #{encoder_decoder_rnn.1} parent=1 // pred_region
      _
    $region5: #{encoder_decoder_rnn.1} parent=1 // pred_fallthru
      _
    // Predicated region
    $region6: #{encoder_decoder_rnn.1} parent=1 // pred_check
      _
    $region7: #{encoder_decoder_rnn.1} parent=1 // pred_check_branch
      %25 = sbr.rel (0) target = $region9
    $region8: #{encoder_decoder_rnn.1} parent=1 // pred_region
      _
    $region9: #{encoder_decoder_rnn.1} parent=1 // pred_fallthru
      _
    // Predicated region
    $region10: #{encoder_decoder_rnn.1} parent=1 // pred_check
      _
    $region11: #{encoder_decoder_rnn.1} parent=1 // pred_check_branch
      %27 = sbr.rel (0) target = $region13
    $region12: #{encoder_decoder_rnn.1} parent=1 // pred_region
      _
    $region13: #{encoder_decoder_rnn.1} parent=1 // pred_fallthru
      _
    // Predicated region
    $region14: #{encoder_decoder_rnn.1} parent=1 // pred_check
      _
    $region15: #{encoder_decoder_rnn.1} parent=1 // pred_check_branch
      %29 = sbr.rel (0) target = $region17
    $region16: #{encoder_decoder_rnn.1} parent=1 // pred_region
      %s31 = ssub.s32 6144, 6144
      %32 = vsyncadd [#allocation7], %s31
      %s33 = sshll.u32 [#allocation6], 4
      %s34 = int_to_ptr.vmem [resolvable:$true] %s33
      %39 = dma.hbm_to_vmem [thread:$0]  %s3, 6144, %s34, [#allocation7], 384, 384, 24
    $region17: #{encoder_decoder_rnn.1} parent=1 // pred_fallthru
      _
    // Predicated region
    $region18: #{encoder_decoder_rnn.1} parent=1 // pred_check
      _
    $region19: #{encoder_decoder_rnn.1} parent=1 // pred_check_branch
      %41 = sbr.rel (0) target = $region21
    $region20: #{encoder_decoder_rnn.1} parent=1 // pred_region
      _
    $region21: #{encoder_decoder_rnn.1} parent=1 // pred_fallthru
      _
    // Predicated region
    $region22: #{encoder_decoder_rnn.1} parent=1 // pred_check
      _
    $region23: #{encoder_decoder_rnn.1} parent=1 // pred_check_branch
      %43 = sbr.rel (0) target = $region25
    $region24: #{encoder_decoder_rnn.1} parent=1 // pred_region
      _
    $region25: #{encoder_decoder_rnn.1} parent=1 // pred_fallthru
      _
    // Predicated region
    $region26: #{encoder_decoder_rnn.1} parent=1 // pred_check
      _
    $region27: #{encoder_decoder_rnn.1} parent=1 // pred_check_branch
      %45 = sbr.rel (0) target = $region29
    $region28: #{encoder_decoder_rnn.1} parent=1 // pred_region
      _
    $region29: #{encoder_decoder_rnn.1} parent=1 // pred_fallthru
      _
    // Predicated region
    $region30: #{encoder_decoder_rnn.1} parent=1 // pred_check
      _
    $region31: #{encoder_decoder_rnn.1} parent=1 // pred_check_branch
      %47 = sbr.rel (0) target = $region33
    $region32: #{encoder_decoder_rnn.1} parent=1 // pred_region
      _
    $region33: #{encoder_decoder_rnn.1} parent=1 // pred_fallthru
      _
    // Predicated region
    $region34: #{encoder_decoder_rnn.1} parent=1 // pred_check
      _
    $region35: #{encoder_decoder_rnn.1} parent=1 // pred_check_branch
      %49 = sbr.rel (0) target = $region37
    $region36: #{encoder_decoder_rnn.1} parent=1 // pred_region
      %s51 = ssub.s32 8192, 8192
      %52 = vsyncadd [#allocation9], %s51
      %s53 = sshll.u32 [#allocation8], 4
      %s54 = int_to_ptr.vmem [resolvable:$true] %s53
      %59 = dma.hbm_to_vmem [thread:$0]  %s8, 8192, %s54, [#allocation9], 512, 512, 32
    $region37: #{encoder_decoder_rnn.1} parent=1 // pred_fallthru
      _
    // Predicated region
    $region38: #{encoder_decoder_rnn.1} parent=1 // pred_check
      _
    $region39: #{encoder_decoder_rnn.1} parent=1 // pred_check_branch
      %61 = sbr.rel (0) target = $region41
    $region40: #{encoder_decoder_rnn.1} parent=1 // pred_region
      _
    $region41: #{encoder_decoder_rnn.1} parent=1 // pred_fallthru
      _
    // Predicated region
    $region42: #{encoder_decoder_rnn.1} parent=1 // pred_check
      _
    $region43: #{encoder_decoder_rnn.1} parent=1 // pred_check_branch
      %63 = sbr.rel (0) target = $region45
    $region44: #{encoder_decoder_rnn.1} parent=1 // pred_region
      %s65 = ssub.s32 48, 48
      %66 = vsyncadd [#allocation9], %s65
      %s68 = sshll.u32 [#allocation10], 4
      %s69 = int_to_ptr.vmem [resolvable:$true] %s68
      %71 = dma.hbm_to_vmem [thread:$0]  %s10, 48, %s69, [#allocation9]
    $region45: #{encoder_decoder_rnn.1} parent=1 // pred_fallthru
      _
    // Predicated region
    $region46: #{encoder_decoder_rnn.1} parent=1 // pred_check
      _
    $region47: #{encoder_decoder_rnn.1} parent=1 // pred_check_branch
      %73 = sbr.rel (0) target = $region49
    $region48: #{encoder_decoder_rnn.1} parent=1 // pred_region
      _
    $region49: #{encoder_decoder_rnn.1} parent=1 // pred_fallthru
      _
    // Predicated region
    $region50: #{encoder_decoder_rnn.1} parent=1 // pred_check
      _
    $region51: #{encoder_decoder_rnn.1} parent=1 // pred_check_branch
      %75 = sbr.rel (0) target = $region53
    $region52: #{encoder_decoder_rnn.1} parent=1 // pred_region
      _
    $region53: #{encoder_decoder_rnn.1} parent=1 // pred_fallthru
      _
    // Predicated region
    $region54: #{encoder_decoder_rnn.1} parent=1 // pred_check
      _
    $region55: #{encoder_decoder_rnn.1} parent=1 // pred_check_branch
      %77 = sbr.rel (0) target = $region57
    $region56: #{encoder_decoder_rnn.1} parent=1 // pred_region
      %78 = dma.done [#allocation7], 6144
    $region57: #{encoder_decoder_rnn.1} parent=1 // pred_fallthru
      _
    // Predicated region
    $region58: #{encoder_decoder_rnn.1} parent=1 // pred_check
      _
    $region59: #{encoder_decoder_rnn.1} parent=1 // pred_check_branch
      %80 = sbr.rel (0) target = $region61
    $region60: #{encoder_decoder_rnn.1} parent=1 // pred_region
      %81 = dma.done [#allocation9], 8192
    $region61: #{encoder_decoder_rnn.1} parent=1 // pred_fallthru
      _
    // Predicated region
    $region62: #{encoder_decoder_rnn.1} parent=1 // pred_check
      _
    $region63: #{encoder_decoder_rnn.1} parent=1 // pred_check_branch
      %83 = sbr.rel (0) target = $region65
    $region64: #{encoder_decoder_rnn.1} parent=1 // pred_region
      %84 = dma.done [#allocation9], 48
    $region65: #{encoder_decoder_rnn.1} parent=1 // pred_fallthru
      _
    %v85 = vld [vmem:[%s0] sm:$0xff]
    %v86 = vld [vmem:[%s2] sm:$0xff]
    %v87 = vld [vmem:[%s2 + $0x8] sm:$0xf]
    %v88 = vld [vmem:[%s4] sm:$0x7]
    %v90 = vlaneseq
    %v91 = vshrl.u32 %v90, 7
    %v92 = vsub.s32 0, %v91
    %v93 = vrot.slane %v88, %v92
    %v94 = vlaneseq
    %v95 = vshrl.u32 %v94, 7
    %v96 = vsub.s32 1, %v95
    %v97 = vrot.slane %v88, %v96
    %v98 = vlaneseq
    %v99 = vshrl.u32 %v98, 7
    %v100 = vsub.s32 2, %v99
    %v101 = vrot.slane %v88, %v100
    %v107 = vcombine.high %v86, %v86
    %vm108 = vcmask 31744
    %v110 = vsel %vm108, %v85, 0
    %vm112 = vcmask 1043456
    %v113 = vsel %vm112, %v86, 0
    %v115 = vsel %vm112, %v107, 0
    %v117 = vsel %vm112, %v87, 0
    %119 = vmatprep.subr.mxu0 %v115
    %120 = vmatpush1.msra.mxu0 %v113
    %121 = vmatprep.subr.mxu0 0.0
    %122 = vmatpush1.msra.mxu0 0.0
    %123 = vmatprep.subr.mxu0 0.0
    %124 = vmatpush1.msra.mxu0 0.0
    %125 = vmatprep.subr.mxu0 0.0
    %126 = vmatpush1.msra.mxu0 0.0
    %127 = vmatprep.subr.mxu0 0.0
    %128 = vmatpush1.msra.mxu0 0.0
    %129 = vmatprep.subr.mxu0 0.0
    %130 = vmatpush1.msra.mxu0 0.0
    %131 = vmatprep.subr.mxu0 0.0
    %132 = vmatpush1.msra.mxu0 0.0
    %133 = vmatprep.subr.mxu0 0.0
    %134 = vmatpush1.msra.mxu0 0.0
    %135 = vmatprep.subr.mxu0 0.0
    %136 = vmatpush1.msra.mxu0 0.0
    %137 = vmatprep.subr.mxu0 0.0
    %138 = vmatpush1.msra.mxu0 0.0
    %139 = vmatprep.subr.mxu0 0.0
    %140 = vmatpush1.msra.mxu0 0.0
    %141 = vmatprep.subr.mxu0 0.0
    %142 = vmatpush1.msra.mxu0 0.0
    %143 = vmatprep.subr.mxu0 0.0
    %144 = vmatpush1.msra.mxu0 0.0
    %145 = vmatprep.subr.mxu0 0.0
    %146 = vmatpush1.msra.mxu0 0.0
    %147 = vmatprep.subr.mxu0 0.0
    %148 = vmatpush1.msra.mxu0 0.0
    %149 = vmatprep.subr.mxu0 0.0
    %150 = vmatpush1.msra.mxu0 0.0
    %151 = vmatprep.subr.mxu0 0.0
    %152 = vmatpush1.msra.mxu0 0.0
    %153 = vmatprep.subr.mxu0 0.0
    %154 = vmatpush1.msra.mxu0 0.0
    %155 = vmatprep.subr.mxu0 0.0
    %156 = vmatpush1.msra.mxu0 0.0
    %157 = vmatprep.subr.mxu0 0.0
    %158 = vmatpush1.msra.mxu0 0.0
    %159 = vmatprep.subr.mxu0 0.0
    %160 = vmatpush1.msra.mxu0 0.0
    %161 = vmatprep.subr.mxu0 0.0
    %162 = vmatpush1.msra.mxu0 0.0
    %163 = vmatprep.subr.mxu0 0.0
    %164 = vmatpush1.msra.mxu0 0.0
    %165 = vmatprep.subr.mxu0 0.0
    %166 = vmatpush1.msra.mxu0 0.0
    %167 = vmatprep.subr.mxu0 0.0
    %168 = vmatpush1.msra.mxu0 0.0
    %169 = vmatprep.subr.mxu0 0.0
    %170 = vmatpush1.msra.mxu0 0.0
    %171 = vmatprep.subr.mxu0 0.0
    %172 = vmatpush1.msra.mxu0 0.0
    %173 = vmatprep.subr.mxu0 0.0
    %174 = vmatpush1.msra.mxu0 0.0
    %175 = vmatprep.subr.mxu0 0.0
    %176 = vmatpush1.msra.mxu0 0.0
    %177 = vmatprep.subr.mxu0 0.0
    %178 = vmatpush1.msra.mxu0 0.0
    %179 = vmatprep.subr.mxu0 0.0
    %180 = vmatpush1.msra.mxu0 0.0
    %181 = vmatprep.subr.mxu0 0.0
    %182 = vmatpush1.msra.mxu0 0.0
    %183 = vmatprep.mubr.f32.mxu0 0.0
    %184 = vmatmul.mubr.f32.gmra.mrb[0].mxu0 %v110
    %v185 = vpop.f32.mrb[0].mxu0
    %v186 = vadd.f32 %v93, %v185
    %v187 = vpop.f32.mrb[0].mxu0
    %v188 = vadd.f32 %v97, %v187
    %189 = vdwg.mxu0
    %190 = vmatprep.subr.mxu0 0.0
    %191 = vmatpush1.msra.mxu0 %v117
    %192 = vmatprep.subr.mxu0 0.0
    %193 = vmatpush1.msra.mxu0 0.0
    %194 = vmatprep.subr.mxu0 0.0
    %195 = vmatpush1.msra.mxu0 0.0
    %196 = vmatprep.subr.mxu0 0.0
    %197 = vmatpush1.msra.mxu0 0.0
    %198 = vmatprep.subr.mxu0 0.0
    %199 = vmatpush1.msra.mxu0 0.0
    %200 = vmatprep.subr.mxu0 0.0
    %201 = vmatpush1.msra.mxu0 0.0
    %202 = vmatprep.subr.mxu0 0.0
    %203 = vmatpush1.msra.mxu0 0.0
    %204 = vmatprep.subr.mxu0 0.0
    %205 = vmatpush1.msra.mxu0 0.0
    %206 = vmatprep.subr.mxu0 0.0
    %207 = vmatpush1.msra.mxu0 0.0
    %208 = vmatprep.subr.mxu0 0.0
    %209 = vmatpush1.msra.mxu0 0.0
    %210 = vmatprep.subr.mxu0 0.0
    %211 = vmatpush1.msra.mxu0 0.0
    %212 = vmatprep.subr.mxu0 0.0
    %213 = vmatpush1.msra.mxu0 0.0
    %214 = vmatprep.subr.mxu0 0.0
    %215 = vmatpush1.msra.mxu0 0.0
    %216 = vmatprep.subr.mxu0 0.0
    %217 = vmatpush1.msra.mxu0 0.0
    %218 = vmatprep.subr.mxu0 0.0
    %219 = vmatpush1.msra.mxu0 0.0
    %220 = vmatprep.subr.mxu0 0.0
    %221 = vmatpush1.msra.mxu0 0.0
    %222 = vmatprep.subr.mxu0 0.0
    %223 = vmatpush1.msra.mxu0 0.0
    %224 = vmatprep.subr.mxu0 0.0
    %225 = vmatpush1.msra.mxu0 0.0
    %226 = vmatprep.subr.mxu0 0.0
    %227 = vmatpush1.msra.mxu0 0.0
    %228 = vmatprep.subr.mxu0 0.0
    %229 = vmatpush1.msra.mxu0 0.0
    %230 = vmatprep.subr.mxu0 0.0
    %231 = vmatpush1.msra.mxu0 0.0
    %232 = vmatprep.subr.mxu0 0.0
    %233 = vmatpush1.msra.mxu0 0.0
    %234 = vmatprep.subr.mxu0 0.0
    %235 = vmatpush1.msra.mxu0 0.0
    %236 = vmatprep.subr.mxu0 0.0
    %237 = vmatpush1.msra.mxu0 0.0
    %238 = vmatprep.subr.mxu0 0.0
    %239 = vmatpush1.msra.mxu0 0.0
    %240 = vmatprep.subr.mxu0 0.0
    %241 = vmatpush1.msra.mxu0 0.0
    %242 = vmatprep.subr.mxu0 0.0
    %243 = vmatpush1.msra.mxu0 0.0
    %244 = vmatprep.subr.mxu0 0.0
    %245 = vmatpush1.msra.mxu0 0.0
    %246 = vmatprep.subr.mxu0 0.0
    %247 = vmatpush1.msra.mxu0 0.0
    %248 = vmatprep.subr.mxu0 0.0
    %249 = vmatpush1.msra.mxu0 0.0
    %250 = vmatprep.subr.mxu0 0.0
    %251 = vmatpush1.msra.mxu0 0.0
    %252 = vmatprep.subr.mxu0 0.0
    %253 = vmatpush1.msra.mxu0 0.0
    %254 = vmatprep.mubr.f32.mxu0 0.0
    %255 = vmatmul.mubr.f32.gmra.mrb[0].mxu0 %v110
    %v256 = vpop.f32.mrb[0].mxu0
    %v257 = vadd.f32 %v101, %v256
    %v258 = vpop.f32.mrb[0].mxu0
    %259 = vdwg.mxu0
    %260 = vst [vmem:[#allocation2] sm:$0xff] %v186
    %261 = vst [vmem:[#allocation2 + $0x8] sm:$0xff] %v188
    %262 = vst [vmem:[#allocation2 + $0x10] sm:$0xff] %v257
    %v263 = vld [vmem:[#allocation6] sm:$0xff]
    %v264 = vld [vmem:[#allocation6 + $0x8] sm:$0xff]
    %v265 = vld [vmem:[#allocation6 + $0x10] sm:$0xff]
    %v266 = vld [vmem:[#allocation6 + $0x18] sm:$0xff]
    %v267 = vld [vmem:[#allocation6 + $0x20] sm:$0xff]
    %v268 = vld [vmem:[#allocation6 + $0x28] sm:$0xff]
    %v269 = vld [vmem:[#allocation6 + $0x30] sm:$0xff]
    %v270 = vld [vmem:[#allocation6 + $0x38] sm:$0xff]
    %v271 = vld [vmem:[#allocation6 + $0x40] sm:$0xff]
    %v272 = vld [vmem:[#allocation6 + $0x48] sm:$0xff]
    %v273 = vld [vmem:[#allocation6 + $0x50] sm:$0xff]
    %v274 = vld [vmem:[#allocation6 + $0x58] sm:$0xff]
    %v275 = vld [vmem:[#allocation6 + $0x60] sm:$0xff]
    %v276 = vld [vmem:[#allocation6 + $0x68] sm:$0xff]
    %v277 = vld [vmem:[#allocation6 + $0x70] sm:$0xff]
    %v278 = vld [vmem:[#allocation6 + $0x78] sm:$0xff]
    %v279 = vld [vmem:[#allocation6 + $0x80] sm:$0xff]
    %v280 = vld [vmem:[#allocation6 + $0x88] sm:$0xff]
    %v281 = vld [vmem:[#allocation6 + $0x90] sm:$0xff]
    %v282 = vld [vmem:[#allocation6 + $0x98] sm:$0xff]
    %v283 = vld [vmem:[#allocation6 + $0xa0] sm:$0xff]
    %v284 = vld [vmem:[#allocation6 + $0xa8] sm:$0xff]
    %v285 = vld [vmem:[#allocation6 + $0xb0] sm:$0xff]
    %v286 = vld [vmem:[#allocation6 + $0xb8] sm:$0xff]
    %v287 = vld [vmem:[#allocation6 + $0xc0] sm:$0xff]
    %v288 = vld [vmem:[#allocation6 + $0xc8] sm:$0xff]
    %v289 = vld [vmem:[#allocation6 + $0xd0] sm:$0xff]
    %v290 = vld [vmem:[#allocation6 + $0xd8] sm:$0xff]
    %v291 = vld [vmem:[#allocation6 + $0xe0] sm:$0xff]
    %v292 = vld [vmem:[#allocation6 + $0xe8] sm:$0xff]
    %v293 = vld [vmem:[#allocation6 + $0xf0] sm:$0xff]
    %v294 = vld [vmem:[#allocation6 + $0xf8] sm:$0xff]
    %v295 = vld [vmem:[#allocation6 + $0x100] sm:$0xff]
    %v296 = vld [vmem:[#allocation6 + $0x108] sm:$0xff]
    %v297 = vld [vmem:[#allocation6 + $0x110] sm:$0xff]
    %v298 = vld [vmem:[#allocation6 + $0x118] sm:$0xff]
    %v299 = vld [vmem:[#allocation6 + $0x120] sm:$0xff]
    %v300 = vld [vmem:[#allocation6 + $0x128] sm:$0xff]
    %v301 = vld [vmem:[#allocation6 + $0x130] sm:$0xff]
    %v302 = vld [vmem:[#allocation6 + $0x138] sm:$0xff]
    %v303 = vld [vmem:[#allocation6 + $0x140] sm:$0xff]
    %v304 = vld [vmem:[#allocation6 + $0x148] sm:$0xff]
    %v305 = vld [vmem:[#allocation6 + $0x150] sm:$0xff]
    %v306 = vld [vmem:[#allocation6 + $0x158] sm:$0xff]
    %v307 = vld [vmem:[#allocation6 + $0x160] sm:$0xff]
    %v308 = vld [vmem:[#allocation6 + $0x168] sm:$0xff]
    %v309 = vld [vmem:[#allocation6 + $0x170] sm:$0xff]
    %v310 = vld [vmem:[#allocation6 + $0x178] sm:$0xff]
    %v311 = vld [vmem:[%s5] sm:$0x7]
    %v312 = vld [vmem:[#allocation2] ss:$8 sm:$0x7]
    %v314 = vlaneseq
    %v315 = vshrl.u32 %v314, 7
    %v316 = vsub.s32 0, %v315
    %v317 = vrot.slane %v311, %v316
    %v318 = vlaneseq
    %v319 = vshrl.u32 %v318, 7
    %v320 = vsub.s32 1, %v319
    %v321 = vrot.slane %v311, %v320
    %v322 = vlaneseq
    %v323 = vshrl.u32 %v322, 7
    %v324 = vsub.s32 2, %v323
    %v325 = vrot.slane %v311, %v324
    %329 = vmatprep.subr.mxu0 %v264
    %330 = vmatpush1.msra.mxu0 %v263
    %331 = vmatprep.subr.mxu0 %v267
    %332 = vmatpush1.msra.mxu0 %v266
    %333 = vmatprep.subr.mxu0 %v270
    %334 = vmatpush1.msra.mxu0 %v269
    %335 = vmatprep.subr.mxu0 %v273
    %336 = vmatpush1.msra.mxu0 %v272
    %337 = vmatprep.subr.mxu0 %v276
    %338 = vmatpush1.msra.mxu0 %v275
    %339 = vmatprep.subr.mxu0 %v279
    %340 = vmatpush1.msra.mxu0 %v278
    %341 = vmatprep.subr.mxu0 %v282
    %342 = vmatpush1.msra.mxu0 %v281
    %343 = vmatprep.subr.mxu0 %v285
    %344 = vmatpush1.msra.mxu0 %v284
    %345 = vmatprep.subr.mxu0 %v288
    %346 = vmatpush1.msra.mxu0 %v287
    %347 = vmatprep.subr.mxu0 %v291
    %348 = vmatpush1.msra.mxu0 %v290
    %349 = vmatprep.subr.mxu0 %v294
    %350 = vmatpush1.msra.mxu0 %v293
    %351 = vmatprep.subr.mxu0 %v297
    %352 = vmatpush1.msra.mxu0 %v296
    %353 = vmatprep.subr.mxu0 %v300
    %354 = vmatpush1.msra.mxu0 %v299
    %355 = vmatprep.subr.mxu0 %v303
    %356 = vmatpush1.msra.mxu0 %v302
    %357 = vmatprep.subr.mxu0 %v306
    %358 = vmatpush1.msra.mxu0 %v305
    %359 = vmatprep.subr.mxu0 %v309
    %360 = vmatpush1.msra.mxu0 %v308
    %361 = vmatprep.subr.mxu0 0.0
    %362 = vmatpush1.msra.mxu0 0.0
    %363 = vmatprep.subr.mxu0 0.0
    %364 = vmatpush1.msra.mxu0 0.0
    %365 = vmatprep.subr.mxu0 0.0
    %366 = vmatpush1.msra.mxu0 0.0
    %367 = vmatprep.subr.mxu0 0.0
    %368 = vmatpush1.msra.mxu0 0.0
    %369 = vmatprep.subr.mxu0 0.0
    %370 = vmatpush1.msra.mxu0 0.0
    %371 = vmatprep.subr.mxu0 0.0
    %372 = vmatpush1.msra.mxu0 0.0
    %373 = vmatprep.subr.mxu0 0.0
    %374 = vmatpush1.msra.mxu0 0.0
    %375 = vmatprep.subr.mxu0 0.0
    %376 = vmatpush1.msra.mxu0 0.0
    %377 = vmatprep.subr.mxu0 0.0
    %378 = vmatpush1.msra.mxu0 0.0
    %379 = vmatprep.subr.mxu0 0.0
    %380 = vmatpush1.msra.mxu0 0.0
    %381 = vmatprep.subr.mxu0 0.0
    %382 = vmatpush1.msra.mxu0 0.0
    %383 = vmatprep.subr.mxu0 0.0
    %384 = vmatpush1.msra.mxu0 0.0
    %385 = vmatprep.subr.mxu0 0.0
    %386 = vmatpush1.msra.mxu0 0.0
    %387 = vmatprep.subr.mxu0 0.0
    %388 = vmatpush1.msra.mxu0 0.0
    %389 = vmatprep.subr.mxu0 0.0
    %390 = vmatpush1.msra.mxu0 0.0
    %391 = vmatprep.subr.mxu0 0.0
    %392 = vmatpush1.msra.mxu0 0.0
    %393 = vmatprep.mubr.f32.mxu0 0.0
    %394 = vmatmul.mubr.f32.gmra.mrb[0].mxu0 0.0
    %v395 = vpop.f32.mrb[0].mxu0
    %v396 = vadd.f32 %v317, %v395
    %v397 = vpop.f32.mrb[0].mxu0
    %v398 = vadd.f32 %v321, %v397
    %399 = vdwg.mxu0
    %400 = vmatprep.subr.mxu0 0.0
    %401 = vmatpush1.msra.mxu0 %v265
    %402 = vmatprep.subr.mxu0 0.0
    %403 = vmatpush1.msra.mxu0 %v268
    %404 = vmatprep.subr.mxu0 0.0
    %405 = vmatpush1.msra.mxu0 %v271
    %406 = vmatprep.subr.mxu0 0.0
    %407 = vmatpush1.msra.mxu0 %v274
    %408 = vmatprep.subr.mxu0 0.0
    %409 = vmatpush1.msra.mxu0 %v277
    %410 = vmatprep.subr.mxu0 0.0
    %411 = vmatpush1.msra.mxu0 %v280
    %412 = vmatprep.subr.mxu0 0.0
    %413 = vmatpush1.msra.mxu0 %v283
    %414 = vmatprep.subr.mxu0 0.0
    %415 = vmatpush1.msra.mxu0 %v286
    %416 = vmatprep.subr.mxu0 0.0
    %417 = vmatpush1.msra.mxu0 %v289
    %418 = vmatprep.subr.mxu0 0.0
    %419 = vmatpush1.msra.mxu0 %v292
    %420 = vmatprep.subr.mxu0 0.0
    %421 = vmatpush1.msra.mxu0 %v295
    %422 = vmatprep.subr.mxu0 0.0
    %423 = vmatpush1.msra.mxu0 %v298
    %424 = vmatprep.subr.mxu0 0.0
    %425 = vmatpush1.msra.mxu0 %v301
    %426 = vmatprep.subr.mxu0 0.0
    %427 = vmatpush1.msra.mxu0 %v304
    %428 = vmatprep.subr.mxu0 0.0
    %429 = vmatpush1.msra.mxu0 %v307
    %430 = vmatprep.subr.mxu0 0.0
    %431 = vmatpush1.msra.mxu0 %v310
    %432 = vmatprep.subr.mxu0 0.0
    %433 = vmatpush1.msra.mxu0 0.0
    %434 = vmatprep.subr.mxu0 0.0
    %435 = vmatpush1.msra.mxu0 0.0
    %436 = vmatprep.subr.mxu0 0.0
    %437 = vmatpush1.msra.mxu0 0.0
    %438 = vmatprep.subr.mxu0 0.0
    %439 = vmatpush1.msra.mxu0 0.0
    %440 = vmatprep.subr.mxu0 0.0
    %441 = vmatpush1.msra.mxu0 0.0
    %442 = vmatprep.subr.mxu0 0.0
    %443 = vmatpush1.msra.mxu0 0.0
    %444 = vmatprep.subr.mxu0 0.0
    %445 = vmatpush1.msra.mxu0 0.0
    %446 = vmatprep.subr.mxu0 0.0
    %447 = vmatpush1.msra.mxu0 0.0
    %448 = vmatprep.subr.mxu0 0.0
    %449 = vmatpush1.msra.mxu0 0.0
    %450 = vmatprep.subr.mxu0 0.0
    %451 = vmatpush1.msra.mxu0 0.0
    %452 = vmatprep.subr.mxu0 0.0
    %453 = vmatpush1.msra.mxu0 0.0
    %454 = vmatprep.subr.mxu0 0.0
    %455 = vmatpush1.msra.mxu0 0.0
    %456 = vmatprep.subr.mxu0 0.0
    %457 = vmatpush1.msra.mxu0 0.0
    %458 = vmatprep.subr.mxu0 0.0
    %459 = vmatpush1.msra.mxu0 0.0
    %460 = vmatprep.subr.mxu0 0.0
    %461 = vmatpush1.msra.mxu0 0.0
    %462 = vmatprep.subr.mxu0 0.0
    %463 = vmatpush1.msra.mxu0 0.0
    %464 = vmatprep.mubr.f32.mxu0 0.0
    %465 = vmatmul.mubr.f32.gmra.mrb[0].mxu0 0.0
    %v466 = vpop.f32.mrb[0].mxu0
    %v467 = vadd.f32 %v325, %v466
    %v468 = vpop.f32.mrb[0].mxu0
    %469 = vdwg.mxu0
    %v470 = vadd.f32 %v312, %v396
    %v471 = vxor.u32 %v470, 2147483648
    %v472 = vmul.f32 %v471, 1.442695
    %v473 = vpow.pop %v472
    %v474 = vadd.f32 %v473, 1.0
    %v475 = vrcp.pop %v474
    %v476 = vmul.f32 1.0, %v475
    %v478 = vrot.slane %v312, 1
    %v480 = vadd.f32 %v478, %v398
    %v481 = vxor.u32 %v480, 2147483648
    %v482 = vmul.f32 %v481, 1.442695
    %v483 = vpow.pop %v482
    %v484 = vadd.f32 %v483, 1.0
    %v485 = vrcp.pop %v484
    %v486 = vmul.f32 1.0, %v485
    %v487 = vmul.f32 %v476, %v467
    %v488 = vrot.slane %v312, 2
    %v490 = vadd.f32 %v488, %v487
    %v491 = vtanh.pop %v490
    %v492 = vsub.f32 1.0, %v486
    %v493 = vmul.f32 %v492, %v491
    %v494 = vmul.f32 %v486, 0.0
    %v495 = vadd.f32 %v493, %v494
    %s496 = scalar_lea.vmem [#allocation2], 1
    %v497 = vld [vmem:[%s496] ss:$8 sm:$0x7]
    %498 = vmatprep.subr.mxu0 %v264
    %499 = vmatpush1.msra.mxu0 %v263
    %500 = vmatprep.subr.mxu0 %v267
    %501 = vmatpush1.msra.mxu0 %v266
    %502 = vmatprep.subr.mxu0 %v270
    %503 = vmatpush1.msra.mxu0 %v269
    %504 = vmatprep.subr.mxu0 %v273
    %505 = vmatpush1.msra.mxu0 %v272
    %506 = vmatprep.subr.mxu0 %v276
    %507 = vmatpush1.msra.mxu0 %v275
    %508 = vmatprep.subr.mxu0 %v279
    %509 = vmatpush1.msra.mxu0 %v278
    %510 = vmatprep.subr.mxu0 %v282
    %511 = vmatpush1.msra.mxu0 %v281
    %512 = vmatprep.subr.mxu0 %v285
    %513 = vmatpush1.msra.mxu0 %v284
    %514 = vmatprep.subr.mxu0 %v288
    %515 = vmatpush1.msra.mxu0 %v287
    %516 = vmatprep.subr.mxu0 %v291
    %517 = vmatpush1.msra.mxu0 %v290
    %518 = vmatprep.subr.mxu0 %v294
    %519 = vmatpush1.msra.mxu0 %v293
    %520 = vmatprep.subr.mxu0 %v297
    %521 = vmatpush1.msra.mxu0 %v296
    %522 = vmatprep.subr.mxu0 %v300
    %523 = vmatpush1.msra.mxu0 %v299
    %524 = vmatprep.subr.mxu0 %v303
    %525 = vmatpush1.msra.mxu0 %v302
    %526 = vmatprep.subr.mxu0 %v306
    %527 = vmatpush1.msra.mxu0 %v305
    %528 = vmatprep.subr.mxu0 %v309
    %529 = vmatpush1.msra.mxu0 %v308
    %530 = vmatprep.subr.mxu0 0.0
    %531 = vmatpush1.msra.mxu0 0.0
    %532 = vmatprep.subr.mxu0 0.0
    %533 = vmatpush1.msra.mxu0 0.0
    %534 = vmatprep.subr.mxu0 0.0
    %535 = vmatpush1.msra.mxu0 0.0
    %536 = vmatprep.subr.mxu0 0.0
    %537 = vmatpush1.msra.mxu0 0.0
    %538 = vmatprep.subr.mxu0 0.0
    %539 = vmatpush1.msra.mxu0 0.0
    %540 = vmatprep.subr.mxu0 0.0
    %541 = vmatpush1.msra.mxu0 0.0
    %542 = vmatprep.subr.mxu0 0.0
    %543 = vmatpush1.msra.mxu0 0.0
    %544 = vmatprep.subr.mxu0 0.0
    %545 = vmatpush1.msra.mxu0 0.0
    %546 = vmatprep.subr.mxu0 0.0
    %547 = vmatpush1.msra.mxu0 0.0
    %548 = vmatprep.subr.mxu0 0.0
    %549 = vmatpush1.msra.mxu0 0.0
    %550 = vmatprep.subr.mxu0 0.0
    %551 = vmatpush1.msra.mxu0 0.0
    %552 = vmatprep.subr.mxu0 0.0
    %553 = vmatpush1.msra.mxu0 0.0
    %554 = vmatprep.subr.mxu0 0.0
    %555 = vmatpush1.msra.mxu0 0.0
    %556 = vmatprep.subr.mxu0 0.0
    %557 = vmatpush1.msra.mxu0 0.0
    %558 = vmatprep.subr.mxu0 0.0
    %559 = vmatpush1.msra.mxu0 0.0
    %560 = vmatprep.subr.mxu0 0.0
    %561 = vmatpush1.msra.mxu0 0.0
    %562 = vmatprep.mubr.f32.mxu0 0.0
    %563 = vmatmul.mubr.f32.gmra.mrb[0].mxu0 %v495
    %v564 = vpop.f32.mrb[0].mxu0
    %v565 = vadd.f32 %v317, %v564
    %v566 = vpop.f32.mrb[0].mxu0
    %v567 = vadd.f32 %v321, %v566
    %568 = vdwg.mxu0
    %569 = vmatprep.subr.mxu0 0.0
    %570 = vmatpush1.msra.mxu0 %v265
    %571 = vmatprep.subr.mxu0 0.0
    %572 = vmatpush1.msra.mxu0 %v268
    %573 = vmatprep.subr.mxu0 0.0
    %574 = vmatpush1.msra.mxu0 %v271
    %575 = vmatprep.subr.mxu0 0.0
    %576 = vmatpush1.msra.mxu0 %v274
    %577 = vmatprep.subr.mxu0 0.0
    %578 = vmatpush1.msra.mxu0 %v277
    %579 = vmatprep.subr.mxu0 0.0
    %580 = vmatpush1.msra.mxu0 %v280
    %581 = vmatprep.subr.mxu0 0.0
    %582 = vmatpush1.msra.mxu0 %v283
    %583 = vmatprep.subr.mxu0 0.0
    %584 = vmatpush1.msra.mxu0 %v286
    %585 = vmatprep.subr.mxu0 0.0
    %586 = vmatpush1.msra.mxu0 %v289
    %587 = vmatprep.subr.mxu0 0.0
    %588 = vmatpush1.msra.mxu0 %v292
    %589 = vmatprep.subr.mxu0 0.0
    %590 = vmatpush1.msra.mxu0 %v295
    %591 = vmatprep.subr.mxu0 0.0
    %592 = vmatpush1.msra.mxu0 %v298
    %593 = vmatprep.subr.mxu0 0.0
    %594 = vmatpush1.msra.mxu0 %v301
    %595 = vmatprep.subr.mxu0 0.0
    %596 = vmatpush1.msra.mxu0 %v304
    %597 = vmatprep.subr.mxu0 0.0
    %598 = vmatpush1.msra.mxu0 %v307
    %599 = vmatprep.subr.mxu0 0.0
    %600 = vmatpush1.msra.mxu0 %v310
    %601 = vmatprep.subr.mxu0 0.0
    %602 = vmatpush1.msra.mxu0 0.0
    %603 = vmatprep.subr.mxu0 0.0
    %604 = vmatpush1.msra.mxu0 0.0
    %605 = vmatprep.subr.mxu0 0.0
    %606 = vmatpush1.msra.mxu0 0.0
    %607 = vmatprep.subr.mxu0 0.0
    %608 = vmatpush1.msra.mxu0 0.0
    %609 = vmatprep.subr.mxu0 0.0
    %610 = vmatpush1.msra.mxu0 0.0
    %611 = vmatprep.subr.mxu0 0.0
    %612 = vmatpush1.msra.mxu0 0.0
    %613 = vmatprep.subr.mxu0 0.0
    %614 = vmatpush1.msra.mxu0 0.0
    %615 = vmatprep.subr.mxu0 0.0
    %616 = vmatpush1.msra.mxu0 0.0
    %617 = vmatprep.subr.mxu0 0.0
    %618 = vmatpush1.msra.mxu0 0.0
    %619 = vmatprep.subr.mxu0 0.0
    %620 = vmatpush1.msra.mxu0 0.0
    %621 = vmatprep.subr.mxu0 0.0
    %622 = vmatpush1.msra.mxu0 0.0
    %623 = vmatprep.subr.mxu0 0.0
    %624 = vmatpush1.msra.mxu0 0.0
    %625 = vmatprep.subr.mxu0 0.0
    %626 = vmatpush1.msra.mxu0 0.0
    %627 = vmatprep.subr.mxu0 0.0
    %628 = vmatpush1.msra.mxu0 0.0
    %629 = vmatprep.subr.mxu0 0.0
    %630 = vmatpush1.msra.mxu0 0.0
    %631 = vmatprep.subr.mxu0 0.0
    %632 = vmatpush1.msra.mxu0 0.0
    %633 = vmatprep.mubr.f32.mxu0 0.0
    %634 = vmatmul.mubr.f32.gmra.mrb[0].mxu0 %v495
    %v635 = vpop.f32.mrb[0].mxu0
    %v636 = vadd.f32 %v325, %v635
    %v637 = vpop.f32.mrb[0].mxu0
    %638 = vdwg.mxu0
    %v639 = vadd.f32 %v497, %v565
    %v640 = vxor.u32 %v639, 2147483648
    %v641 = vmul.f32 %v640, 1.442695
    %v642 = vpow.pop %v641
    %v643 = vadd.f32 %v642, 1.0
    %v644 = vrcp.pop %v643
    %v645 = vmul.f32 1.0, %v644
    %v647 = vrot.slane %v497, 1
    %v649 = vadd.f32 %v647, %v567
    %v650 = vxor.u32 %v649, 2147483648
    %v651 = vmul.f32 %v650, 1.442695
    %v652 = vpow.pop %v651
    %v653 = vadd.f32 %v652, 1.0
    %v654 = vrcp.pop %v653
    %v655 = vmul.f32 1.0, %v654
    %v656 = vmul.f32 %v645, %v636
    %v657 = vrot.slane %v497, 2
    %v659 = vadd.f32 %v657, %v656
    %v660 = vtanh.pop %v659
    %v661 = vsub.f32 1.0, %v655
    %v662 = vmul.f32 %v661, %v660
    %v663 = vmul.f32 %v655, %v495
    %v664 = vadd.f32 %v662, %v663
    %s665 = scalar_lea.vmem [#allocation2], 2
    %v666 = vld [vmem:[%s665] ss:$8 sm:$0x7]
    %667 = vmatprep.subr.mxu0 %v264
    %668 = vmatpush1.msra.mxu0 %v263
    %669 = vmatprep.subr.mxu0 %v267
    %670 = vmatpush1.msra.mxu0 %v266
    %671 = vmatprep.subr.mxu0 %v270
    %672 = vmatpush1.msra.mxu0 %v269
    %673 = vmatprep.subr.mxu0 %v273
    %674 = vmatpush1.msra.mxu0 %v272
    %675 = vmatprep.subr.mxu0 %v276
    %676 = vmatpush1.msra.mxu0 %v275
    %677 = vmatprep.subr.mxu0 %v279
    %678 = vmatpush1.msra.mxu0 %v278
    %679 = vmatprep.subr.mxu0 %v282
    %680 = vmatpush1.msra.mxu0 %v281
    %681 = vmatprep.subr.mxu0 %v285
    %682 = vmatpush1.msra.mxu0 %v284
    %683 = vmatprep.subr.mxu0 %v288
    %684 = vmatpush1.msra.mxu0 %v287
    %685 = vmatprep.subr.mxu0 %v291
    %686 = vmatpush1.msra.mxu0 %v290
    %687 = vmatprep.subr.mxu0 %v294
    %688 = vmatpush1.msra.mxu0 %v293
    %689 = vmatprep.subr.mxu0 %v297
    %690 = vmatpush1.msra.mxu0 %v296
    %691 = vmatprep.subr.mxu0 %v300
    %692 = vmatpush1.msra.mxu0 %v299
    %693 = vmatprep.subr.mxu0 %v303
    %694 = vmatpush1.msra.mxu0 %v302
    %695 = vmatprep.subr.mxu0 %v306
    %696 = vmatpush1.msra.mxu0 %v305
    %697 = vmatprep.subr.mxu0 %v309
    %698 = vmatpush1.msra.mxu0 %v308
    %699 = vmatprep.subr.mxu0 0.0
    %700 = vmatpush1.msra.mxu0 0.0
    %701 = vmatprep.subr.mxu0 0.0
    %702 = vmatpush1.msra.mxu0 0.0
    %703 = vmatprep.subr.mxu0 0.0
    %704 = vmatpush1.msra.mxu0 0.0
    %705 = vmatprep.subr.mxu0 0.0
    %706 = vmatpush1.msra.mxu0 0.0
    %707 = vmatprep.subr.mxu0 0.0
    %708 = vmatpush1.msra.mxu0 0.0
    %709 = vmatprep.subr.mxu0 0.0
    %710 = vmatpush1.msra.mxu0 0.0
    %711 = vmatprep.subr.mxu0 0.0
    %712 = vmatpush1.msra.mxu0 0.0
    %713 = vmatprep.subr.mxu0 0.0
    %714 = vmatpush1.msra.mxu0 0.0
    %715 = vmatprep.subr.mxu0 0.0
    %716 = vmatpush1.msra.mxu0 0.0
    %717 = vmatprep.subr.mxu0 0.0
    %718 = vmatpush1.msra.mxu0 0.0
    %719 = vmatprep.subr.mxu0 0.0
    %720 = vmatpush1.msra.mxu0 0.0
    %721 = vmatprep.subr.mxu0 0.0
    %722 = vmatpush1.msra.mxu0 0.0
    %723 = vmatprep.subr.mxu0 0.0
    %724 = vmatpush1.msra.mxu0 0.0
    %725 = vmatprep.subr.mxu0 0.0
    %726 = vmatpush1.msra.mxu0 0.0
    %727 = vmatprep.subr.mxu0 0.0
    %728 = vmatpush1.msra.mxu0 0.0
    %729 = vmatprep.subr.mxu0 0.0
    %730 = vmatpush1.msra.mxu0 0.0
    %731 = vmatprep.mubr.f32.mxu0 0.0
    %732 = vmatmul.mubr.f32.gmra.mrb[0].mxu0 %v664
    %v733 = vpop.f32.mrb[0].mxu0
    %v734 = vadd.f32 %v317, %v733
    %v735 = vpop.f32.mrb[0].mxu0
    %v736 = vadd.f32 %v321, %v735
    %737 = vdwg.mxu0
    %738 = vmatprep.subr.mxu0 0.0
    %739 = vmatpush1.msra.mxu0 %v265
    %740 = vmatprep.subr.mxu0 0.0
    %741 = vmatpush1.msra.mxu0 %v268
    %742 = vmatprep.subr.mxu0 0.0
    %743 = vmatpush1.msra.mxu0 %v271
    %744 = vmatprep.subr.mxu0 0.0
    %745 = vmatpush1.msra.mxu0 %v274
    %746 = vmatprep.subr.mxu0 0.0
    %747 = vmatpush1.msra.mxu0 %v277
    %748 = vmatprep.subr.mxu0 0.0
    %749 = vmatpush1.msra.mxu0 %v280
    %750 = vmatprep.subr.mxu0 0.0
    %751 = vmatpush1.msra.mxu0 %v283
    %752 = vmatprep.subr.mxu0 0.0
    %753 = vmatpush1.msra.mxu0 %v286
    %754 = vmatprep.subr.mxu0 0.0
    %755 = vmatpush1.msra.mxu0 %v289
    %756 = vmatprep.subr.mxu0 0.0
    %757 = vmatpush1.msra.mxu0 %v292
    %758 = vmatprep.subr.mxu0 0.0
    %759 = vmatpush1.msra.mxu0 %v295
    %760 = vmatprep.subr.mxu0 0.0
    %761 = vmatpush1.msra.mxu0 %v298
    %762 = vmatprep.subr.mxu0 0.0
    %763 = vmatpush1.msra.mxu0 %v301
    %764 = vmatprep.subr.mxu0 0.0
    %765 = vmatpush1.msra.mxu0 %v304
    %766 = vmatprep.subr.mxu0 0.0
    %767 = vmatpush1.msra.mxu0 %v307
    %768 = vmatprep.subr.mxu0 0.0
    %769 = vmatpush1.msra.mxu0 %v310
    %770 = vmatprep.subr.mxu0 0.0
    %771 = vmatpush1.msra.mxu0 0.0
    %772 = vmatprep.subr.mxu0 0.0
    %773 = vmatpush1.msra.mxu0 0.0
    %774 = vmatprep.subr.mxu0 0.0
    %775 = vmatpush1.msra.mxu0 0.0
    %776 = vmatprep.subr.mxu0 0.0
    %777 = vmatpush1.msra.mxu0 0.0
    %778 = vmatprep.subr.mxu0 0.0
    %779 = vmatpush1.msra.mxu0 0.0
    %780 = vmatprep.subr.mxu0 0.0
    %781 = vmatpush1.msra.mxu0 0.0
    %782 = vmatprep.subr.mxu0 0.0
    %783 = vmatpush1.msra.mxu0 0.0
    %784 = vmatprep.subr.mxu0 0.0
    %785 = vmatpush1.msra.mxu0 0.0
    %786 = vmatprep.subr.mxu0 0.0
    %787 = vmatpush1.msra.mxu0 0.0
    %788 = vmatprep.subr.mxu0 0.0
    %789 = vmatpush1.msra.mxu0 0.0
    %790 = vmatprep.subr.mxu0 0.0
    %791 = vmatpush1.msra.mxu0 0.0
    %792 = vmatprep.subr.mxu0 0.0
    %793 = vmatpush1.msra.mxu0 0.0
    %794 = vmatprep.subr.mxu0 0.0
    %795 = vmatpush1.msra.mxu0 0.0
    %796 = vmatprep.subr.mxu0 0.0
    %797 = vmatpush1.msra.mxu0 0.0
    %798 = vmatprep.subr.mxu0 0.0
    %799 = vmatpush1.msra.mxu0 0.0
    %800 = vmatprep.subr.mxu0 0.0
    %801 = vmatpush1.msra.mxu0 0.0
    %802 = vmatprep.mubr.f32.mxu0 0.0
    %803 = vmatmul.mubr.f32.gmra.mrb[0].mxu0 %v664
    %v804 = vpop.f32.mrb[0].mxu0
    %v805 = vadd.f32 %v325, %v804
    %v806 = vpop.f32.mrb[0].mxu0
    %807 = vdwg.mxu0
    %v808 = vadd.f32 %v666, %v734
    %v809 = vxor.u32 %v808, 2147483648
    %v810 = vmul.f32 %v809, 1.442695
    %v811 = vpow.pop %v810
    %v812 = vadd.f32 %v811, 1.0
    %v813 = vrcp.pop %v812
    %v814 = vmul.f32 1.0, %v813
    %v816 = vrot.slane %v666, 1
    %v818 = vadd.f32 %v816, %v736
    %v819 = vxor.u32 %v818, 2147483648
    %v820 = vmul.f32 %v819, 1.442695
    %v821 = vpow.pop %v820
    %v822 = vadd.f32 %v821, 1.0
    %v823 = vrcp.pop %v822
    %v824 = vmul.f32 1.0, %v823
    %v825 = vmul.f32 %v814, %v805
    %v826 = vrot.slane %v666, 2
    %v828 = vadd.f32 %v826, %v825
    %v829 = vtanh.pop %v828
    %v830 = vsub.f32 1.0, %v824
    %v831 = vmul.f32 %v830, %v829
    %v832 = vmul.f32 %v824, %v664
    %v833 = vadd.f32 %v831, %v832
    %s834 = scalar_lea.vmem [#allocation2], 3
    %v835 = vld [vmem:[%s834] ss:$8 sm:$0x7]
    %836 = vmatprep.subr.mxu0 %v264
    %837 = vmatpush1.msra.mxu0 %v263
    %838 = vmatprep.subr.mxu0 %v267
    %839 = vmatpush1.msra.mxu0 %v266
    %840 = vmatprep.subr.mxu0 %v270
    %841 = vmatpush1.msra.mxu0 %v269
    %842 = vmatprep.subr.mxu0 %v273
    %843 = vmatpush1.msra.mxu0 %v272
    %844 = vmatprep.subr.mxu0 %v276
    %845 = vmatpush1.msra.mxu0 %v275
    %846 = vmatprep.subr.mxu0 %v279
    %847 = vmatpush1.msra.mxu0 %v278
    %848 = vmatprep.subr.mxu0 %v282
    %849 = vmatpush1.msra.mxu0 %v281
    %850 = vmatprep.subr.mxu0 %v285
    %851 = vmatpush1.msra.mxu0 %v284
    %852 = vmatprep.subr.mxu0 %v288
    %853 = vmatpush1.msra.mxu0 %v287
    %854 = vmatprep.subr.mxu0 %v291
    %855 = vmatpush1.msra.mxu0 %v290
    %856 = vmatprep.subr.mxu0 %v294
    %857 = vmatpush1.msra.mxu0 %v293
    %858 = vmatprep.subr.mxu0 %v297
    %859 = vmatpush1.msra.mxu0 %v296
    %860 = vmatprep.subr.mxu0 %v300
    %861 = vmatpush1.msra.mxu0 %v299
    %862 = vmatprep.subr.mxu0 %v303
    %863 = vmatpush1.msra.mxu0 %v302
    %864 = vmatprep.subr.mxu0 %v306
    %865 = vmatpush1.msra.mxu0 %v305
    %866 = vmatprep.subr.mxu0 %v309
    %867 = vmatpush1.msra.mxu0 %v308
    %868 = vmatprep.subr.mxu0 0.0
    %869 = vmatpush1.msra.mxu0 0.0
    %870 = vmatprep.subr.mxu0 0.0
    %871 = vmatpush1.msra.mxu0 0.0
    %872 = vmatprep.subr.mxu0 0.0
    %873 = vmatpush1.msra.mxu0 0.0
    %874 = vmatprep.subr.mxu0 0.0
    %875 = vmatpush1.msra.mxu0 0.0
    %876 = vmatprep.subr.mxu0 0.0
    %877 = vmatpush1.msra.mxu0 0.0
    %878 = vmatprep.subr.mxu0 0.0
    %879 = vmatpush1.msra.mxu0 0.0
    %880 = vmatprep.subr.mxu0 0.0
    %881 = vmatpush1.msra.mxu0 0.0
    %882 = vmatprep.subr.mxu0 0.0
    %883 = vmatpush1.msra.mxu0 0.0
    %884 = vmatprep.subr.mxu0 0.0
    %885 = vmatpush1.msra.mxu0 0.0
    %886 = vmatprep.subr.mxu0 0.0
    %887 = vmatpush1.msra.mxu0 0.0
    %888 = vmatprep.subr.mxu0 0.0
    %889 = vmatpush1.msra.mxu0 0.0
    %890 = vmatprep.subr.mxu0 0.0
    %891 = vmatpush1.msra.mxu0 0.0
    %892 = vmatprep.subr.mxu0 0.0
    %893 = vmatpush1.msra.mxu0 0.0
    %894 = vmatprep.subr.mxu0 0.0
    %895 = vmatpush1.msra.mxu0 0.0
    %896 = vmatprep.subr.mxu0 0.0
    %897 = vmatpush1.msra.mxu0 0.0
    %898 = vmatprep.subr.mxu0 0.0
    %899 = vmatpush1.msra.mxu0 0.0
    %900 = vmatprep.mubr.f32.mxu0 0.0
    %901 = vmatmul.mubr.f32.gmra.mrb[0].mxu0 %v833
    %v902 = vpop.f32.mrb[0].mxu0
    %v903 = vadd.f32 %v317, %v902
    %v904 = vpop.f32.mrb[0].mxu0
    %v905 = vadd.f32 %v321, %v904
    %906 = vdwg.mxu0
    %907 = vmatprep.subr.mxu0 0.0
    %908 = vmatpush1.msra.mxu0 %v265
    %909 = vmatprep.subr.mxu0 0.0
    %910 = vmatpush1.msra.mxu0 %v268
    %911 = vmatprep.subr.mxu0 0.0
    %912 = vmatpush1.msra.mxu0 %v271
    %913 = vmatprep.subr.mxu0 0.0
    %914 = vmatpush1.msra.mxu0 %v274
    %915 = vmatprep.subr.mxu0 0.0
    %916 = vmatpush1.msra.mxu0 %v277
    %917 = vmatprep.subr.mxu0 0.0
    %918 = vmatpush1.msra.mxu0 %v280
    %919 = vmatprep.subr.mxu0 0.0
    %920 = vmatpush1.msra.mxu0 %v283
    %921 = vmatprep.subr.mxu0 0.0
    %922 = vmatpush1.msra.mxu0 %v286
    %923 = vmatprep.subr.mxu0 0.0
    %924 = vmatpush1.msra.mxu0 %v289
    %925 = vmatprep.subr.mxu0 0.0
    %926 = vmatpush1.msra.mxu0 %v292
    %927 = vmatprep.subr.mxu0 0.0
    %928 = vmatpush1.msra.mxu0 %v295
    %929 = vmatprep.subr.mxu0 0.0
    %930 = vmatpush1.msra.mxu0 %v298
    %931 = vmatprep.subr.mxu0 0.0
    %932 = vmatpush1.msra.mxu0 %v301
    %933 = vmatprep.subr.mxu0 0.0
    %934 = vmatpush1.msra.mxu0 %v304
    %935 = vmatprep.subr.mxu0 0.0
    %936 = vmatpush1.msra.mxu0 %v307
    %937 = vmatprep.subr.mxu0 0.0
    %938 = vmatpush1.msra.mxu0 %v310
    %939 = vmatprep.subr.mxu0 0.0
    %940 = vmatpush1.msra.mxu0 0.0
    %941 = vmatprep.subr.mxu0 0.0
    %942 = vmatpush1.msra.mxu0 0.0
    %943 = vmatprep.subr.mxu0 0.0
    %944 = vmatpush1.msra.mxu0 0.0
    %945 = vmatprep.subr.mxu0 0.0
    %946 = vmatpush1.msra.mxu0 0.0
    %947 = vmatprep.subr.mxu0 0.0
    %948 = vmatpush1.msra.mxu0 0.0
    %949 = vmatprep.subr.mxu0 0.0
    %950 = vmatpush1.msra.mxu0 0.0
    %951 = vmatprep.subr.mxu0 0.0
    %952 = vmatpush1.msra.mxu0 0.0
    %953 = vmatprep.subr.mxu0 0.0
    %954 = vmatpush1.msra.mxu0 0.0
    %955 = vmatprep.subr.mxu0 0.0
    %956 = vmatpush1.msra.mxu0 0.0
    %957 = vmatprep.subr.mxu0 0.0
    %958 = vmatpush1.msra.mxu0 0.0
    %959 = vmatprep.subr.mxu0 0.0
    %960 = vmatpush1.msra.mxu0 0.0
    %961 = vmatprep.subr.mxu0 0.0
    %962 = vmatpush1.msra.mxu0 0.0
    %963 = vmatprep.subr.mxu0 0.0
    %964 = vmatpush1.msra.mxu0 0.0
    %965 = vmatprep.subr.mxu0 0.0
    %966 = vmatpush1.msra.mxu0 0.0
    %967 = vmatprep.subr.mxu0 0.0
    %968 = vmatpush1.msra.mxu0 0.0
    %969 = vmatprep.subr.mxu0 0.0
    %970 = vmatpush1.msra.mxu0 0.0
    %971 = vmatprep.mubr.f32.mxu0 0.0
    %972 = vmatmul.mubr.f32.gmra.mrb[0].mxu0 %v833
    %v973 = vpop.f32.mrb[0].mxu0
    %v974 = vadd.f32 %v325, %v973
    %v975 = vpop.f32.mrb[0].mxu0
    %976 = vdwg.mxu0
    %v977 = vadd.f32 %v835, %v903
    %v978 = vxor.u32 %v977, 2147483648
    %v979 = vmul.f32 %v978, 1.442695
    %v980 = vpow.pop %v979
    %v981 = vadd.f32 %v980, 1.0
    %v982 = vrcp.pop %v981
    %v983 = vmul.f32 1.0, %v982
    %v985 = vrot.slane %v835, 1
    %v987 = vadd.f32 %v985, %v905
    %v988 = vxor.u32 %v987, 2147483648
    %v989 = vmul.f32 %v988, 1.442695
    %v990 = vpow.pop %v989
    %v991 = vadd.f32 %v990, 1.0
    %v992 = vrcp.pop %v991
    %v993 = vmul.f32 1.0, %v992
    %v994 = vmul.f32 %v983, %v974
    %v995 = vrot.slane %v835, 2
    %v997 = vadd.f32 %v995, %v994
    %v998 = vtanh.pop %v997
    %v999 = vsub.f32 1.0, %v993
    %v1000 = vmul.f32 %v999, %v998
    %v1001 = vmul.f32 %v993, %v833
    %v1002 = vadd.f32 %v1000, %v1001
    %s1003 = scalar_lea.vmem [#allocation2], 4
    %v1004 = vld [vmem:[%s1003] ss:$8 sm:$0x7]
    %1005 = vmatprep.subr.mxu0 %v264
    %1006 = vmatpush1.msra.mxu0 %v263
    %1007 = vmatprep.subr.mxu0 %v267
    %1008 = vmatpush1.msra.mxu0 %v266
    %1009 = vmatprep.subr.mxu0 %v270
    %1010 = vmatpush1.msra.mxu0 %v269
    %1011 = vmatprep.subr.mxu0 %v273
    %1012 = vmatpush1.msra.mxu0 %v272
    %1013 = vmatprep.subr.mxu0 %v276
    %1014 = vmatpush1.msra.mxu0 %v275
    %1015 = vmatprep.subr.mxu0 %v279
    %1016 = vmatpush1.msra.mxu0 %v278
    %1017 = vmatprep.subr.mxu0 %v282
    %1018 = vmatpush1.msra.mxu0 %v281
    %1019 = vmatprep.subr.mxu0 %v285
    %1020 = vmatpush1.msra.mxu0 %v284
    %1021 = vmatprep.subr.mxu0 %v288
    %1022 = vmatpush1.msra.mxu0 %v287
    %1023 = vmatprep.subr.mxu0 %v291
    %1024 = vmatpush1.msra.mxu0 %v290
    %1025 = vmatprep.subr.mxu0 %v294
    %1026 = vmatpush1.msra.mxu0 %v293
    %1027 = vmatprep.subr.mxu0 %v297
    %1028 = vmatpush1.msra.mxu0 %v296
    %1029 = vmatprep.subr.mxu0 %v300
    %1030 = vmatpush1.msra.mxu0 %v299
    %1031 = vmatprep.subr.mxu0 %v303
    %1032 = vmatpush1.msra.mxu0 %v302
    %1033 = vmatprep.subr.mxu0 %v306
    %1034 = vmatpush1.msra.mxu0 %v305
    %1035 = vmatprep.subr.mxu0 %v309
    %1036 = vmatpush1.msra.mxu0 %v308
    %1037 = vmatprep.subr.mxu0 0.0
    %1038 = vmatpush1.msra.mxu0 0.0
    %1039 = vmatprep.subr.mxu0 0.0
    %1040 = vmatpush1.msra.mxu0 0.0
    %1041 = vmatprep.subr.mxu0 0.0
    %1042 = vmatpush1.msra.mxu0 0.0
    %1043 = vmatprep.subr.mxu0 0.0
    %1044 = vmatpush1.msra.mxu0 0.0
    %1045 = vmatprep.subr.mxu0 0.0
    %1046 = vmatpush1.msra.mxu0 0.0
    %1047 = vmatprep.subr.mxu0 0.0
    %1048 = vmatpush1.msra.mxu0 0.0
    %1049 = vmatprep.subr.mxu0 0.0
    %1050 = vmatpush1.msra.mxu0 0.0
    %1051 = vmatprep.subr.mxu0 0.0
    %1052 = vmatpush1.msra.mxu0 0.0
    %1053 = vmatprep.subr.mxu0 0.0
    %1054 = vmatpush1.msra.mxu0 0.0
    %1055 = vmatprep.subr.mxu0 0.0
    %1056 = vmatpush1.msra.mxu0 0.0
    %1057 = vmatprep.subr.mxu0 0.0
    %1058 = vmatpush1.msra.mxu0 0.0
    %1059 = vmatprep.subr.mxu0 0.0
    %1060 = vmatpush1.msra.mxu0 0.0
    %1061 = vmatprep.subr.mxu0 0.0
    %1062 = vmatpush1.msra.mxu0 0.0
    %1063 = vmatprep.subr.mxu0 0.0
    %1064 = vmatpush1.msra.mxu0 0.0
    %1065 = vmatprep.subr.mxu0 0.0
    %1066 = vmatpush1.msra.mxu0 0.0
    %1067 = vmatprep.subr.mxu0 0.0
    %1068 = vmatpush1.msra.mxu0 0.0
    %1069 = vmatprep.mubr.f32.mxu0 0.0
    %1070 = vmatmul.mubr.f32.gmra.mrb[0].mxu0 %v1002
    %v1071 = vpop.f32.mrb[0].mxu0
    %v1072 = vadd.f32 %v317, %v1071
    %v1073 = vpop.f32.mrb[0].mxu0
    %v1074 = vadd.f32 %v321, %v1073
    %1075 = vdwg.mxu0
    %1076 = vmatprep.subr.mxu0 0.0
    %1077 = vmatpush1.msra.mxu0 %v265
    %1078 = vmatprep.subr.mxu0 0.0
    %1079 = vmatpush1.msra.mxu0 %v268
    %1080 = vmatprep.subr.mxu0 0.0
    %1081 = vmatpush1.msra.mxu0 %v271
    %1082 = vmatprep.subr.mxu0 0.0
    %1083 = vmatpush1.msra.mxu0 %v274
    %1084 = vmatprep.subr.mxu0 0.0
    %1085 = vmatpush1.msra.mxu0 %v277
    %1086 = vmatprep.subr.mxu0 0.0
    %1087 = vmatpush1.msra.mxu0 %v280
    %1088 = vmatprep.subr.mxu0 0.0
    %1089 = vmatpush1.msra.mxu0 %v283
    %1090 = vmatprep.subr.mxu0 0.0
    %1091 = vmatpush1.msra.mxu0 %v286
    %1092 = vmatprep.subr.mxu0 0.0
    %1093 = vmatpush1.msra.mxu0 %v289
    %1094 = vmatprep.subr.mxu0 0.0
    %1095 = vmatpush1.msra.mxu0 %v292
    %1096 = vmatprep.subr.mxu0 0.0
    %1097 = vmatpush1.msra.mxu0 %v295
    %1098 = vmatprep.subr.mxu0 0.0
    %1099 = vmatpush1.msra.mxu0 %v298
    %1100 = vmatprep.subr.mxu0 0.0
    %1101 = vmatpush1.msra.mxu0 %v301
    %1102 = vmatprep.subr.mxu0 0.0
    %1103 = vmatpush1.msra.mxu0 %v304
    %1104 = vmatprep.subr.mxu0 0.0
    %1105 = vmatpush1.msra.mxu0 %v307
    %1106 = vmatprep.subr.mxu0 0.0
    %1107 = vmatpush1.msra.mxu0 %v310
    %1108 = vmatprep.subr.mxu0 0.0
    %1109 = vmatpush1.msra.mxu0 0.0
    %1110 = vmatprep.subr.mxu0 0.0
    %1111 = vmatpush1.msra.mxu0 0.0
    %1112 = vmatprep.subr.mxu0 0.0
    %1113 = vmatpush1.msra.mxu0 0.0
    %1114 = vmatprep.subr.mxu0 0.0
    %1115 = vmatpush1.msra.mxu0 0.0
    %1116 = vmatprep.subr.mxu0 0.0
    %1117 = vmatpush1.msra.mxu0 0.0
    %1118 = vmatprep.subr.mxu0 0.0
    %1119 = vmatpush1.msra.mxu0 0.0
    %1120 = vmatprep.subr.mxu0 0.0
    %1121 = vmatpush1.msra.mxu0 0.0
    %1122 = vmatprep.subr.mxu0 0.0
    %1123 = vmatpush1.msra.mxu0 0.0
    %1124 = vmatprep.subr.mxu0 0.0
    %1125 = vmatpush1.msra.mxu0 0.0
    %1126 = vmatprep.subr.mxu0 0.0
    %1127 = vmatpush1.msra.mxu0 0.0
    %1128 = vmatprep.subr.mxu0 0.0
    %1129 = vmatpush1.msra.mxu0 0.0
    %1130 = vmatprep.subr.mxu0 0.0
    %1131 = vmatpush1.msra.mxu0 0.0
    %1132 = vmatprep.subr.mxu0 0.0
    %1133 = vmatpush1.msra.mxu0 0.0
    %1134 = vmatprep.subr.mxu0 0.0
    %1135 = vmatpush1.msra.mxu0 0.0
    %1136 = vmatprep.subr.mxu0 0.0
    %1137 = vmatpush1.msra.mxu0 0.0
    %1138 = vmatprep.subr.mxu0 0.0
    %1139 = vmatpush1.msra.mxu0 0.0
    %1140 = vmatprep.mubr.f32.mxu0 0.0
    %1141 = vmatmul.mubr.f32.gmra.mrb[0].mxu0 %v1002
    %v1142 = vpop.f32.mrb[0].mxu0
    %v1143 = vadd.f32 %v325, %v1142
    %v1144 = vpop.f32.mrb[0].mxu0
    %1145 = vdwg.mxu0
    %v1146 = vadd.f32 %v1004, %v1072
    %v1147 = vxor.u32 %v1146, 2147483648
    %v1148 = vmul.f32 %v1147, 1.442695
    %v1149 = vpow.pop %v1148
    %v1150 = vadd.f32 %v1149, 1.0
    %v1151 = vrcp.pop %v1150
    %v1152 = vmul.f32 1.0, %v1151
    %v1154 = vrot.slane %v1004, 1
    %v1156 = vadd.f32 %v1154, %v1074
    %v1157 = vxor.u32 %v1156, 2147483648
    %v1158 = vmul.f32 %v1157, 1.442695
    %v1159 = vpow.pop %v1158
    %v1160 = vadd.f32 %v1159, 1.0
    %v1161 = vrcp.pop %v1160
    %v1162 = vmul.f32 1.0, %v1161
    %v1163 = vmul.f32 %v1152, %v1143
    %v1164 = vrot.slane %v1004, 2
    %v1166 = vadd.f32 %v1164, %v1163
    %v1167 = vtanh.pop %v1166
    %v1168 = vsub.f32 1.0, %v1162
    %v1169 = vmul.f32 %v1168, %v1167
    %v1170 = vmul.f32 %v1162, %v1002
    %v1171 = vadd.f32 %v1169, %v1170
    %s1172 = scalar_lea.vmem [#allocation2], 5
    %v1173 = vld [vmem:[%s1172] ss:$8 sm:$0x7]
    %1174 = vmatprep.subr.mxu0 %v264
    %1175 = vmatpush1.msra.mxu0 %v263
    %1176 = vmatprep.subr.mxu0 %v267
    %1177 = vmatpush1.msra.mxu0 %v266
    %1178 = vmatprep.subr.mxu0 %v270
    %1179 = vmatpush1.msra.mxu0 %v269
    %1180 = vmatprep.subr.mxu0 %v273
    %1181 = vmatpush1.msra.mxu0 %v272
    %1182 = vmatprep.subr.mxu0 %v276
    %1183 = vmatpush1.msra.mxu0 %v275
    %1184 = vmatprep.subr.mxu0 %v279
    %1185 = vmatpush1.msra.mxu0 %v278
    %1186 = vmatprep.subr.mxu0 %v282
    %1187 = vmatpush1.msra.mxu0 %v281
    %1188 = vmatprep.subr.mxu0 %v285
    %1189 = vmatpush1.msra.mxu0 %v284
    %1190 = vmatprep.subr.mxu0 %v288
    %1191 = vmatpush1.msra.mxu0 %v287
    %1192 = vmatprep.subr.mxu0 %v291
    %1193 = vmatpush1.msra.mxu0 %v290
    %1194 = vmatprep.subr.mxu0 %v294
    %1195 = vmatpush1.msra.mxu0 %v293
    %1196 = vmatprep.subr.mxu0 %v297
    %1197 = vmatpush1.msra.mxu0 %v296
    %1198 = vmatprep.subr.mxu0 %v300
    %1199 = vmatpush1.msra.mxu0 %v299
    %1200 = vmatprep.subr.mxu0 %v303
    %1201 = vmatpush1.msra.mxu0 %v302
    %1202 = vmatprep.subr.mxu0 %v306
    %1203 = vmatpush1.msra.mxu0 %v305
    %1204 = vmatprep.subr.mxu0 %v309
    %1205 = vmatpush1.msra.mxu0 %v308
    %1206 = vmatprep.subr.mxu0 0.0
    %1207 = vmatpush1.msra.mxu0 0.0
    %1208 = vmatprep.subr.mxu0 0.0
    %1209 = vmatpush1.msra.mxu0 0.0
    %1210 = vmatprep.subr.mxu0 0.0
    %1211 = vmatpush1.msra.mxu0 0.0
    %1212 = vmatprep.subr.mxu0 0.0
    %1213 = vmatpush1.msra.mxu0 0.0
    %1214 = vmatprep.subr.mxu0 0.0
    %1215 = vmatpush1.msra.mxu0 0.0
    %1216 = vmatprep.subr.mxu0 0.0
    %1217 = vmatpush1.msra.mxu0 0.0
    %1218 = vmatprep.subr.mxu0 0.0
    %1219 = vmatpush1.msra.mxu0 0.0
    %1220 = vmatprep.subr.mxu0 0.0
    %1221 = vmatpush1.msra.mxu0 0.0
    %1222 = vmatprep.subr.mxu0 0.0
    %1223 = vmatpush1.msra.mxu0 0.0
    %1224 = vmatprep.subr.mxu0 0.0
    %1225 = vmatpush1.msra.mxu0 0.0
    %1226 = vmatprep.subr.mxu0 0.0
    %1227 = vmatpush1.msra.mxu0 0.0
    %1228 = vmatprep.subr.mxu0 0.0
    %1229 = vmatpush1.msra.mxu0 0.0
    %1230 = vmatprep.subr.mxu0 0.0
    %1231 = vmatpush1.msra.mxu0 0.0
    %1232 = vmatprep.subr.mxu0 0.0
    %1233 = vmatpush1.msra.mxu0 0.0
    %1234 = vmatprep.subr.mxu0 0.0
    %1235 = vmatpush1.msra.mxu0 0.0
    %1236 = vmatprep.subr.mxu0 0.0
    %1237 = vmatpush1.msra.mxu0 0.0
    %1238 = vmatprep.mubr.f32.mxu0 0.0
    %1239 = vmatmul.mubr.f32.gmra.mrb[0].mxu0 %v1171
    %v1240 = vpop.f32.mrb[0].mxu0
    %v1241 = vadd.f32 %v317, %v1240
    %v1242 = vpop.f32.mrb[0].mxu0
    %v1243 = vadd.f32 %v321, %v1242
    %1244 = vdwg.mxu0
    %1245 = vmatprep.subr.mxu0 0.0
    %1246 = vmatpush1.msra.mxu0 %v265
    %1247 = vmatprep.subr.mxu0 0.0
    %1248 = vmatpush1.msra.mxu0 %v268
    %1249 = vmatprep.subr.mxu0 0.0
    %1250 = vmatpush1.msra.mxu0 %v271
    %1251 = vmatprep.subr.mxu0 0.0
    %1252 = vmatpush1.msra.mxu0 %v274
    %1253 = vmatprep.subr.mxu0 0.0
    %1254 = vmatpush1.msra.mxu0 %v277
    %1255 = vmatprep.subr.mxu0 0.0
    %1256 = vmatpush1.msra.mxu0 %v280
    %1257 = vmatprep.subr.mxu0 0.0
    %1258 = vmatpush1.msra.mxu0 %v283
    %1259 = vmatprep.subr.mxu0 0.0
    %1260 = vmatpush1.msra.mxu0 %v286
    %1261 = vmatprep.subr.mxu0 0.0
    %1262 = vmatpush1.msra.mxu0 %v289
    %1263 = vmatprep.subr.mxu0 0.0
    %1264 = vmatpush1.msra.mxu0 %v292
    %1265 = vmatprep.subr.mxu0 0.0
    %1266 = vmatpush1.msra.mxu0 %v295
    %1267 = vmatprep.subr.mxu0 0.0
    %1268 = vmatpush1.msra.mxu0 %v298
    %1269 = vmatprep.subr.mxu0 0.0
    %1270 = vmatpush1.msra.mxu0 %v301
    %1271 = vmatprep.subr.mxu0 0.0
    %1272 = vmatpush1.msra.mxu0 %v304
    %1273 = vmatprep.subr.mxu0 0.0
    %1274 = vmatpush1.msra.mxu0 %v307
    %1275 = vmatprep.subr.mxu0 0.0
    %1276 = vmatpush1.msra.mxu0 %v310
    %1277 = vmatprep.subr.mxu0 0.0
    %1278 = vmatpush1.msra.mxu0 0.0
    %1279 = vmatprep.subr.mxu0 0.0
    %1280 = vmatpush1.msra.mxu0 0.0
    %1281 = vmatprep.subr.mxu0 0.0
    %1282 = vmatpush1.msra.mxu0 0.0
    %1283 = vmatprep.subr.mxu0 0.0
    %1284 = vmatpush1.msra.mxu0 0.0
    %1285 = vmatprep.subr.mxu0 0.0
    %1286 = vmatpush1.msra.mxu0 0.0
    %1287 = vmatprep.subr.mxu0 0.0
    %1288 = vmatpush1.msra.mxu0 0.0
    %1289 = vmatprep.subr.mxu0 0.0
    %1290 = vmatpush1.msra.mxu0 0.0
    %1291 = vmatprep.subr.mxu0 0.0
    %1292 = vmatpush1.msra.mxu0 0.0
    %1293 = vmatprep.subr.mxu0 0.0
    %1294 = vmatpush1.msra.mxu0 0.0
    %1295 = vmatprep.subr.mxu0 0.0
    %1296 = vmatpush1.msra.mxu0 0.0
    %1297 = vmatprep.subr.mxu0 0.0
    %1298 = vmatpush1.msra.mxu0 0.0
    %1299 = vmatprep.subr.mxu0 0.0
    %1300 = vmatpush1.msra.mxu0 0.0
    %1301 = vmatprep.subr.mxu0 0.0
    %1302 = vmatpush1.msra.mxu0 0.0
    %1303 = vmatprep.subr.mxu0 0.0
    %1304 = vmatpush1.msra.mxu0 0.0
    %1305 = vmatprep.subr.mxu0 0.0
    %1306 = vmatpush1.msra.mxu0 0.0
    %1307 = vmatprep.subr.mxu0 0.0
    %1308 = vmatpush1.msra.mxu0 0.0
    %1309 = vmatprep.mubr.f32.mxu0 0.0
    %1310 = vmatmul.mubr.f32.gmra.mrb[0].mxu0 %v1171
    %v1311 = vpop.f32.mrb[0].mxu0
    %v1312 = vadd.f32 %v325, %v1311
    %v1313 = vpop.f32.mrb[0].mxu0
    %1314 = vdwg.mxu0
    %v1315 = vadd.f32 %v1173, %v1241
    %v1316 = vxor.u32 %v1315, 2147483648
    %v1317 = vmul.f32 %v1316, 1.442695
    %v1318 = vpow.pop %v1317
    %v1319 = vadd.f32 %v1318, 1.0
    %v1320 = vrcp.pop %v1319
    %v1321 = vmul.f32 1.0, %v1320
    %v1323 = vrot.slane %v1173, 1
    %v1325 = vadd.f32 %v1323, %v1243
    %v1326 = vxor.u32 %v1325, 2147483648
    %v1327 = vmul.f32 %v1326, 1.442695
    %v1328 = vpow.pop %v1327
    %v1329 = vadd.f32 %v1328, 1.0
    %v1330 = vrcp.pop %v1329
    %v1331 = vmul.f32 1.0, %v1330
    %v1332 = vmul.f32 %v1321, %v1312
    %v1333 = vrot.slane %v1173, 2
    %v1335 = vadd.f32 %v1333, %v1332
    %v1336 = vtanh.pop %v1335
    %v1337 = vsub.f32 1.0, %v1331
    %v1338 = vmul.f32 %v1337, %v1336
    %v1339 = vmul.f32 %v1331, %v1171
    %v1340 = vadd.f32 %v1338, %v1339
    %s1341 = scalar_lea.vmem [#allocation2], 6
    %v1342 = vld [vmem:[%s1341] ss:$8 sm:$0x7]
    %1343 = vmatprep.subr.mxu0 %v264
    %1344 = vmatpush1.msra.mxu0 %v263
    %1345 = vmatprep.subr.mxu0 %v267
    %1346 = vmatpush1.msra.mxu0 %v266
    %1347 = vmatprep.subr.mxu0 %v270
    %1348 = vmatpush1.msra.mxu0 %v269
    %1349 = vmatprep.subr.mxu0 %v273
    %1350 = vmatpush1.msra.mxu0 %v272
    %1351 = vmatprep.subr.mxu0 %v276
    %1352 = vmatpush1.msra.mxu0 %v275
    %1353 = vmatprep.subr.mxu0 %v279
    %1354 = vmatpush1.msra.mxu0 %v278
    %1355 = vmatprep.subr.mxu0 %v282
    %1356 = vmatpush1.msra.mxu0 %v281
    %1357 = vmatprep.subr.mxu0 %v285
    %1358 = vmatpush1.msra.mxu0 %v284
    %1359 = vmatprep.subr.mxu0 %v288
    %1360 = vmatpush1.msra.mxu0 %v287
    %1361 = vmatprep.subr.mxu0 %v291
    %1362 = vmatpush1.msra.mxu0 %v290
    %1363 = vmatprep.subr.mxu0 %v294
    %1364 = vmatpush1.msra.mxu0 %v293
    %1365 = vmatprep.subr.mxu0 %v297
    %1366 = vmatpush1.msra.mxu0 %v296
    %1367 = vmatprep.subr.mxu0 %v300
    %1368 = vmatpush1.msra.mxu0 %v299
    %1369 = vmatprep.subr.mxu0 %v303
    %1370 = vmatpush1.msra.mxu0 %v302
    %1371 = vmatprep.subr.mxu0 %v306
    %1372 = vmatpush1.msra.mxu0 %v305
    %1373 = vmatprep.subr.mxu0 %v309
    %1374 = vmatpush1.msra.mxu0 %v308
    %1375 = vmatprep.subr.mxu0 0.0
    %1376 = vmatpush1.msra.mxu0 0.0
    %1377 = vmatprep.subr.mxu0 0.0
    %1378 = vmatpush1.msra.mxu0 0.0
    %1379 = vmatprep.subr.mxu0 0.0
    %1380 = vmatpush1.msra.mxu0 0.0
    %1381 = vmatprep.subr.mxu0 0.0
    %1382 = vmatpush1.msra.mxu0 0.0
    %1383 = vmatprep.subr.mxu0 0.0
    %1384 = vmatpush1.msra.mxu0 0.0
    %1385 = vmatprep.subr.mxu0 0.0
    %1386 = vmatpush1.msra.mxu0 0.0
    %1387 = vmatprep.subr.mxu0 0.0
    %1388 = vmatpush1.msra.mxu0 0.0
    %1389 = vmatprep.subr.mxu0 0.0
    %1390 = vmatpush1.msra.mxu0 0.0
    %1391 = vmatprep.subr.mxu0 0.0
    %1392 = vmatpush1.msra.mxu0 0.0
    %1393 = vmatprep.subr.mxu0 0.0
    %1394 = vmatpush1.msra.mxu0 0.0
    %1395 = vmatprep.subr.mxu0 0.0
    %1396 = vmatpush1.msra.mxu0 0.0
    %1397 = vmatprep.subr.mxu0 0.0
    %1398 = vmatpush1.msra.mxu0 0.0
    %1399 = vmatprep.subr.mxu0 0.0
    %1400 = vmatpush1.msra.mxu0 0.0
    %1401 = vmatprep.subr.mxu0 0.0
    %1402 = vmatpush1.msra.mxu0 0.0
    %1403 = vmatprep.subr.mxu0 0.0
    %1404 = vmatpush1.msra.mxu0 0.0
    %1405 = vmatprep.subr.mxu0 0.0
    %1406 = vmatpush1.msra.mxu0 0.0
    %1407 = vmatprep.mubr.f32.mxu0 0.0
    %1408 = vmatmul.mubr.f32.gmra.mrb[0].mxu0 %v1340
    %v1409 = vpop.f32.mrb[0].mxu0
    %v1410 = vadd.f32 %v317, %v1409
    %v1411 = vpop.f32.mrb[0].mxu0
    %v1412 = vadd.f32 %v321, %v1411
    %1413 = vdwg.mxu0
    %1414 = vmatprep.subr.mxu0 0.0
    %1415 = vmatpush1.msra.mxu0 %v265
    %1416 = vmatprep.subr.mxu0 0.0
    %1417 = vmatpush1.msra.mxu0 %v268
    %1418 = vmatprep.subr.mxu0 0.0
    %1419 = vmatpush1.msra.mxu0 %v271
    %1420 = vmatprep.subr.mxu0 0.0
    %1421 = vmatpush1.msra.mxu0 %v274
    %1422 = vmatprep.subr.mxu0 0.0
    %1423 = vmatpush1.msra.mxu0 %v277
    %1424 = vmatprep.subr.mxu0 0.0
    %1425 = vmatpush1.msra.mxu0 %v280
    %1426 = vmatprep.subr.mxu0 0.0
    %1427 = vmatpush1.msra.mxu0 %v283
    %1428 = vmatprep.subr.mxu0 0.0
    %1429 = vmatpush1.msra.mxu0 %v286
    %1430 = vmatprep.subr.mxu0 0.0
    %1431 = vmatpush1.msra.mxu0 %v289
    %1432 = vmatprep.subr.mxu0 0.0
    %1433 = vmatpush1.msra.mxu0 %v292
    %1434 = vmatprep.subr.mxu0 0.0
    %1435 = vmatpush1.msra.mxu0 %v295
    %1436 = vmatprep.subr.mxu0 0.0
    %1437 = vmatpush1.msra.mxu0 %v298
    %1438 = vmatprep.subr.mxu0 0.0
    %1439 = vmatpush1.msra.mxu0 %v301
    %1440 = vmatprep.subr.mxu0 0.0
    %1441 = vmatpush1.msra.mxu0 %v304
    %1442 = vmatprep.subr.mxu0 0.0
    %1443 = vmatpush1.msra.mxu0 %v307
    %1444 = vmatprep.subr.mxu0 0.0
    %1445 = vmatpush1.msra.mxu0 %v310
    %1446 = vmatprep.subr.mxu0 0.0
    %1447 = vmatpush1.msra.mxu0 0.0
    %1448 = vmatprep.subr.mxu0 0.0
    %1449 = vmatpush1.msra.mxu0 0.0
    %1450 = vmatprep.subr.mxu0 0.0
    %1451 = vmatpush1.msra.mxu0 0.0
    %1452 = vmatprep.subr.mxu0 0.0
    %1453 = vmatpush1.msra.mxu0 0.0
    %1454 = vmatprep.subr.mxu0 0.0
    %1455 = vmatpush1.msra.mxu0 0.0
    %1456 = vmatprep.subr.mxu0 0.0
    %1457 = vmatpush1.msra.mxu0 0.0
    %1458 = vmatprep.subr.mxu0 0.0
    %1459 = vmatpush1.msra.mxu0 0.0
    %1460 = vmatprep.subr.mxu0 0.0
    %1461 = vmatpush1.msra.mxu0 0.0
    %1462 = vmatprep.subr.mxu0 0.0
    %1463 = vmatpush1.msra.mxu0 0.0
    %1464 = vmatprep.subr.mxu0 0.0
    %1465 = vmatpush1.msra.mxu0 0.0
    %1466 = vmatprep.subr.mxu0 0.0
    %1467 = vmatpush1.msra.mxu0 0.0
    %1468 = vmatprep.subr.mxu0 0.0
    %1469 = vmatpush1.msra.mxu0 0.0
    %1470 = vmatprep.subr.mxu0 0.0
    %1471 = vmatpush1.msra.mxu0 0.0
    %1472 = vmatprep.subr.mxu0 0.0
    %1473 = vmatpush1.msra.mxu0 0.0
    %1474 = vmatprep.subr.mxu0 0.0
    %1475 = vmatpush1.msra.mxu0 0.0
    %1476 = vmatprep.subr.mxu0 0.0
    %1477 = vmatpush1.msra.mxu0 0.0
    %1478 = vmatprep.mubr.f32.mxu0 0.0
    %1479 = vmatmul.mubr.f32.gmra.mrb[0].mxu0 %v1340
    %v1480 = vpop.f32.mrb[0].mxu0
    %v1481 = vadd.f32 %v325, %v1480
    %v1482 = vpop.f32.mrb[0].mxu0
    %1483 = vdwg.mxu0
    %v1484 = vadd.f32 %v1342, %v1410
    %v1485 = vxor.u32 %v1484, 2147483648
    %v1486 = vmul.f32 %v1485, 1.442695
    %v1487 = vpow.pop %v1486
    %v1488 = vadd.f32 %v1487, 1.0
    %v1489 = vrcp.pop %v1488
    %v1490 = vmul.f32 1.0, %v1489
    %v1492 = vrot.slane %v1342, 1
    %v1494 = vadd.f32 %v1492, %v1412
    %v1495 = vxor.u32 %v1494, 2147483648
    %v1496 = vmul.f32 %v1495, 1.442695
    %v1497 = vpow.pop %v1496
    %v1498 = vadd.f32 %v1497, 1.0
    %v1499 = vrcp.pop %v1498
    %v1500 = vmul.f32 1.0, %v1499
    %v1501 = vmul.f32 %v1490, %v1481
    %v1502 = vrot.slane %v1342, 2
    %v1504 = vadd.f32 %v1502, %v1501
    %v1505 = vtanh.pop %v1504
    %v1506 = vsub.f32 1.0, %v1500
    %v1507 = vmul.f32 %v1506, %v1505
    %v1508 = vmul.f32 %v1500, %v1340
    %v1509 = vadd.f32 %v1507, %v1508
    %s1510 = scalar_lea.vmem [#allocation2], 7
    %v1511 = vld [vmem:[%s1510] ss:$8 sm:$0x7]
    %1512 = vmatprep.subr.mxu0 %v264
    %1513 = vmatpush1.msra.mxu0 %v263
    %1514 = vmatprep.subr.mxu0 %v267
    %1515 = vmatpush1.msra.mxu0 %v266
    %1516 = vmatprep.subr.mxu0 %v270
    %1517 = vmatpush1.msra.mxu0 %v269
    %1518 = vmatprep.subr.mxu0 %v273
    %1519 = vmatpush1.msra.mxu0 %v272
    %1520 = vmatprep.subr.mxu0 %v276
    %1521 = vmatpush1.msra.mxu0 %v275
    %1522 = vmatprep.subr.mxu0 %v279
    %1523 = vmatpush1.msra.mxu0 %v278
    %1524 = vmatprep.subr.mxu0 %v282
    %1525 = vmatpush1.msra.mxu0 %v281
    %1526 = vmatprep.subr.mxu0 %v285
    %1527 = vmatpush1.msra.mxu0 %v284
    %1528 = vmatprep.subr.mxu0 %v288
    %1529 = vmatpush1.msra.mxu0 %v287
    %1530 = vmatprep.subr.mxu0 %v291
    %1531 = vmatpush1.msra.mxu0 %v290
    %1532 = vmatprep.subr.mxu0 %v294
    %1533 = vmatpush1.msra.mxu0 %v293
    %1534 = vmatprep.subr.mxu0 %v297
    %1535 = vmatpush1.msra.mxu0 %v296
    %1536 = vmatprep.subr.mxu0 %v300
    %1537 = vmatpush1.msra.mxu0 %v299
    %1538 = vmatprep.subr.mxu0 %v303
    %1539 = vmatpush1.msra.mxu0 %v302
    %1540 = vmatprep.subr.mxu0 %v306
    %1541 = vmatpush1.msra.mxu0 %v305
    %1542 = vmatprep.subr.mxu0 %v309
    %1543 = vmatpush1.msra.mxu0 %v308
    %1544 = vmatprep.subr.mxu0 0.0
    %1545 = vmatpush1.msra.mxu0 0.0
    %1546 = vmatprep.subr.mxu0 0.0
    %1547 = vmatpush1.msra.mxu0 0.0
    %1548 = vmatprep.subr.mxu0 0.0
    %1549 = vmatpush1.msra.mxu0 0.0
    %1550 = vmatprep.subr.mxu0 0.0
    %1551 = vmatpush1.msra.mxu0 0.0
    %1552 = vmatprep.subr.mxu0 0.0
    %1553 = vmatpush1.msra.mxu0 0.0
    %1554 = vmatprep.subr.mxu0 0.0
    %1555 = vmatpush1.msra.mxu0 0.0
    %1556 = vmatprep.subr.mxu0 0.0
    %1557 = vmatpush1.msra.mxu0 0.0
    %1558 = vmatprep.subr.mxu0 0.0
    %1559 = vmatpush1.msra.mxu0 0.0
    %1560 = vmatprep.subr.mxu0 0.0
    %1561 = vmatpush1.msra.mxu0 0.0
    %1562 = vmatprep.subr.mxu0 0.0
    %1563 = vmatpush1.msra.mxu0 0.0
    %1564 = vmatprep.subr.mxu0 0.0
    %1565 = vmatpush1.msra.mxu0 0.0
    %1566 = vmatprep.subr.mxu0 0.0
    %1567 = vmatpush1.msra.mxu0 0.0
    %1568 = vmatprep.subr.mxu0 0.0
    %1569 = vmatpush1.msra.mxu0 0.0
    %1570 = vmatprep.subr.mxu0 0.0
    %1571 = vmatpush1.msra.mxu0 0.0
    %1572 = vmatprep.subr.mxu0 0.0
    %1573 = vmatpush1.msra.mxu0 0.0
    %1574 = vmatprep.subr.mxu0 0.0
    %1575 = vmatpush1.msra.mxu0 0.0
    %1576 = vmatprep.mubr.f32.mxu0 0.0
    %1577 = vmatmul.mubr.f32.gmra.mrb[0].mxu0 %v1509
    %v1578 = vpop.f32.mrb[0].mxu0
    %v1579 = vadd.f32 %v317, %v1578
    %v1580 = vpop.f32.mrb[0].mxu0
    %v1581 = vadd.f32 %v321, %v1580
    %1582 = vdwg.mxu0
    %1583 = vmatprep.subr.mxu0 0.0
    %1584 = vmatpush1.msra.mxu0 %v265
    %1585 = vmatprep.subr.mxu0 0.0
    %1586 = vmatpush1.msra.mxu0 %v268
    %1587 = vmatprep.subr.mxu0 0.0
    %1588 = vmatpush1.msra.mxu0 %v271
    %1589 = vmatprep.subr.mxu0 0.0
    %1590 = vmatpush1.msra.mxu0 %v274
    %1591 = vmatprep.subr.mxu0 0.0
    %1592 = vmatpush1.msra.mxu0 %v277
    %1593 = vmatprep.subr.mxu0 0.0
    %1594 = vmatpush1.msra.mxu0 %v280
    %1595 = vmatprep.subr.mxu0 0.0
    %1596 = vmatpush1.msra.mxu0 %v283
    %1597 = vmatprep.subr.mxu0 0.0
    %1598 = vmatpush1.msra.mxu0 %v286
    %1599 = vmatprep.subr.mxu0 0.0
    %1600 = vmatpush1.msra.mxu0 %v289
    %1601 = vmatprep.subr.mxu0 0.0
    %1602 = vmatpush1.msra.mxu0 %v292
    %1603 = vmatprep.subr.mxu0 0.0
    %1604 = vmatpush1.msra.mxu0 %v295
    %1605 = vmatprep.subr.mxu0 0.0
    %1606 = vmatpush1.msra.mxu0 %v298
    %1607 = vmatprep.subr.mxu0 0.0
    %1608 = vmatpush1.msra.mxu0 %v301
    %1609 = vmatprep.subr.mxu0 0.0
    %1610 = vmatpush1.msra.mxu0 %v304
    %1611 = vmatprep.subr.mxu0 0.0
    %1612 = vmatpush1.msra.mxu0 %v307
    %1613 = vmatprep.subr.mxu0 0.0
    %1614 = vmatpush1.msra.mxu0 %v310
    %1615 = vmatprep.subr.mxu0 0.0
    %1616 = vmatpush1.msra.mxu0 0.0
    %1617 = vmatprep.subr.mxu0 0.0
    %1618 = vmatpush1.msra.mxu0 0.0
    %1619 = vmatprep.subr.mxu0 0.0
    %1620 = vmatpush1.msra.mxu0 0.0
    %1621 = vmatprep.subr.mxu0 0.0
    %1622 = vmatpush1.msra.mxu0 0.0
    %1623 = vmatprep.subr.mxu0 0.0
    %1624 = vmatpush1.msra.mxu0 0.0
    %1625 = vmatprep.subr.mxu0 0.0
    %1626 = vmatpush1.msra.mxu0 0.0
    %1627 = vmatprep.subr.mxu0 0.0
    %1628 = vmatpush1.msra.mxu0 0.0
    %1629 = vmatprep.subr.mxu0 0.0
    %1630 = vmatpush1.msra.mxu0 0.0
    %1631 = vmatprep.subr.mxu0 0.0
    %1632 = vmatpush1.msra.mxu0 0.0
    %1633 = vmatprep.subr.mxu0 0.0
    %1634 = vmatpush1.msra.mxu0 0.0
    %1635 = vmatprep.subr.mxu0 0.0
    %1636 = vmatpush1.msra.mxu0 0.0
    %1637 = vmatprep.subr.mxu0 0.0
    %1638 = vmatpush1.msra.mxu0 0.0
    %1639 = vmatprep.subr.mxu0 0.0
    %1640 = vmatpush1.msra.mxu0 0.0
    %1641 = vmatprep.subr.mxu0 0.0
    %1642 = vmatpush1.msra.mxu0 0.0
    %1643 = vmatprep.subr.mxu0 0.0
    %1644 = vmatpush1.msra.mxu0 0.0
    %1645 = vmatprep.subr.mxu0 0.0
    %1646 = vmatpush1.msra.mxu0 0.0
    %1647 = vmatprep.mubr.f32.mxu0 0.0
    %1648 = vmatmul.mubr.f32.gmra.mrb[0].mxu0 %v1509
    %v1649 = vpop.f32.mrb[0].mxu0
    %v1650 = vadd.f32 %v325, %v1649
    %v1651 = vpop.f32.mrb[0].mxu0
    %1652 = vdwg.mxu0
    %v1653 = vadd.f32 %v1511, %v1579
    %v1654 = vxor.u32 %v1653, 2147483648
    %v1655 = vmul.f32 %v1654, 1.442695
    %v1656 = vpow.pop %v1655
    %v1657 = vadd.f32 %v1656, 1.0
    %v1658 = vrcp.pop %v1657
    %v1659 = vmul.f32 1.0, %v1658
    %v1661 = vrot.slane %v1511, 1
    %v1663 = vadd.f32 %v1661, %v1581
    %v1664 = vxor.u32 %v1663, 2147483648
    %v1665 = vmul.f32 %v1664, 1.442695
    %v1666 = vpow.pop %v1665
    %v1667 = vadd.f32 %v1666, 1.0
    %v1668 = vrcp.pop %v1667
    %v1669 = vmul.f32 1.0, %v1668
    %v1670 = vmul.f32 %v1659, %v1650
    %v1671 = vrot.slane %v1511, 2
    %v1673 = vadd.f32 %v1671, %v1670
    %v1674 = vtanh.pop %v1673
    %v1675 = vsub.f32 1.0, %v1669
    %v1676 = vmul.f32 %v1675, %v1674
    %v1677 = vmul.f32 %v1669, %v1509
    %v1678 = vadd.f32 %v1676, %v1677
    %v1679 = vld [vmem:[%s6] sm:$0x7]
    %v1680 = vld [vmem:[#allocation8] sm:$0xff]
    %v1681 = vld [vmem:[#allocation8 + $0x8] sm:$0xff]
    %v1682 = vld [vmem:[#allocation8 + $0x10] sm:$0xff]
    %v1683 = vld [vmem:[#allocation8 + $0x18] sm:$0xff]
    %v1684 = vld [vmem:[#allocation8 + $0x20] sm:$0xff]
    %v1685 = vld [vmem:[#allocation8 + $0x28] sm:$0xff]
    %v1686 = vld [vmem:[#allocation8 + $0x30] sm:$0xff]
    %v1687 = vld [vmem:[#allocation8 + $0x38] sm:$0xff]
    %v1688 = vld [vmem:[#allocation8 + $0x40] sm:$0xff]
    %v1689 = vld [vmem:[#allocation8 + $0x48] sm:$0xff]
    %v1690 = vld [vmem:[#allocation8 + $0x50] sm:$0xff]
    %v1691 = vld [vmem:[#allocation8 + $0x58] sm:$0xff]
    %v1692 = vld [vmem:[#allocation8 + $0x60] sm:$0xff]
    %v1693 = vld [vmem:[#allocation8 + $0x68] sm:$0xff]
    %v1694 = vld [vmem:[#allocation8 + $0x70] sm:$0xff]
    %v1695 = vld [vmem:[#allocation8 + $0x78] sm:$0xff]
    %v1696 = vld [vmem:[#allocation8 + $0x80] sm:$0xff]
    %v1697 = vld [vmem:[#allocation8 + $0x88] sm:$0xff]
    %v1698 = vld [vmem:[#allocation8 + $0x90] sm:$0xff]
    %v1699 = vld [vmem:[#allocation8 + $0x98] sm:$0xff]
    %v1700 = vld [vmem:[#allocation8 + $0xa0] sm:$0xff]
    %v1701 = vld [vmem:[#allocation8 + $0xa8] sm:$0xff]
    %v1702 = vld [vmem:[#allocation8 + $0xb0] sm:$0xff]
    %v1703 = vld [vmem:[#allocation8 + $0xb8] sm:$0xff]
    %v1704 = vld [vmem:[#allocation8 + $0xc0] sm:$0xff]
    %v1705 = vld [vmem:[#allocation8 + $0xc8] sm:$0xff]
    %v1706 = vld [vmem:[#allocation8 + $0xd0] sm:$0xff]
    %v1707 = vld [vmem:[#allocation8 + $0xd8] sm:$0xff]
    %v1708 = vld [vmem:[#allocation8 + $0xe0] sm:$0xff]
    %v1709 = vld [vmem:[#allocation8 + $0xe8] sm:$0xff]
    %v1710 = vld [vmem:[#allocation8 + $0xf0] sm:$0xff]
    %v1711 = vld [vmem:[#allocation8 + $0xf8] sm:$0xff]
    %v1712 = vld [vmem:[#allocation8 + $0x100] sm:$0xff]
    %v1713 = vld [vmem:[#allocation8 + $0x108] sm:$0xff]
    %v1714 = vld [vmem:[#allocation8 + $0x110] sm:$0xff]
    %v1715 = vld [vmem:[#allocation8 + $0x118] sm:$0xff]
    %v1716 = vld [vmem:[#allocation8 + $0x120] sm:$0xff]
    %v1717 = vld [vmem:[#allocation8 + $0x128] sm:$0xff]
    %v1718 = vld [vmem:[#allocation8 + $0x130] sm:$0xff]
    %v1719 = vld [vmem:[#allocation8 + $0x138] sm:$0xff]
    %v1720 = vld [vmem:[#allocation8 + $0x140] sm:$0xff]
    %v1721 = vld [vmem:[#allocation8 + $0x148] sm:$0xff]
    %v1722 = vld [vmem:[#allocation8 + $0x150] sm:$0xff]
    %v1723 = vld [vmem:[#allocation8 + $0x158] sm:$0xff]
    %v1724 = vld [vmem:[#allocation8 + $0x160] sm:$0xff]
    %v1725 = vld [vmem:[#allocation8 + $0x168] sm:$0xff]
    %v1726 = vld [vmem:[#allocation8 + $0x170] sm:$0xff]
    %v1727 = vld [vmem:[#allocation8 + $0x178] sm:$0xff]
    %v1728 = vld [vmem:[#allocation8 + $0x180] sm:$0xff]
    %v1729 = vld [vmem:[#allocation8 + $0x188] sm:$0xff]
    %v1730 = vld [vmem:[#allocation8 + $0x190] sm:$0xff]
    %v1731 = vld [vmem:[#allocation8 + $0x198] sm:$0xff]
    %v1732 = vld [vmem:[#allocation8 + $0x1a0] sm:$0xff]
    %v1733 = vld [vmem:[#allocation8 + $0x1a8] sm:$0xff]
    %v1734 = vld [vmem:[#allocation8 + $0x1b0] sm:$0xff]
    %v1735 = vld [vmem:[#allocation8 + $0x1b8] sm:$0xff]
    %v1736 = vld [vmem:[#allocation8 + $0x1c0] sm:$0xff]
    %v1737 = vld [vmem:[#allocation8 + $0x1c8] sm:$0xff]
    %v1738 = vld [vmem:[#allocation8 + $0x1d0] sm:$0xff]
    %v1739 = vld [vmem:[#allocation8 + $0x1d8] sm:$0xff]
    %v1740 = vld [vmem:[#allocation8 + $0x1e0] sm:$0xff]
    %v1741 = vld [vmem:[#allocation8 + $0x1e8] sm:$0xff]
    %v1742 = vld [vmem:[#allocation8 + $0x1f0] sm:$0xff]
    %v1743 = vld [vmem:[#allocation8 + $0x1f8] sm:$0xff]
    %v1744 = vld [vmem:[%s9] sm:$0xf]
    %v1745 = vld [vmem:[%s11] sm:$0x1]
    %v1746 = vld [vmem:[#allocation5] sm:$0x1]
    %v1747 = vld [vmem:[%s1] sm:$0xff]
    %v1748 = vld [vmem:[%s7] sm:$0x77]
    %v1749 = vld [vmem:[%s7 + $0x8] sm:$0x7]
    %v1750 = vld [vmem:[#allocation10] sm:$0x7]
    %v1752 = vlaneseq
    %v1753 = vshrl.u32 %v1752, 7
    %v1754 = vsub.s32 0, %v1753
    %v1755 = vrot.slane %v1750, %v1754
    %v1756 = vlaneseq
    %v1757 = vshrl.u32 %v1756, 7
    %v1758 = vsub.s32 1, %v1757
    %v1759 = vrot.slane %v1750, %v1758
    %v1760 = vlaneseq
    %v1761 = vshrl.u32 %v1760, 7
    %v1762 = vsub.s32 2, %v1761
    %v1763 = vrot.slane %v1750, %v1762
    %v1769 = vcombine.high %v1748, %v1748
    %vm1770 = vcmask 23552
    %v1772 = vsel %vm1770, %v1747, 0
    %vm1774 = vcmask 1042432
    %v1775 = vsel %vm1774, %v1748, 0
    %v1777 = vsel %vm1774, %v1769, 0
    %v1779 = vsel %vm1774, %v1749, 0
    %1781 = vmatprep.subr.mxu0 %v1777
    %1782 = vmatpush1.msra.mxu0 %v1775
    %1783 = vmatprep.subr.mxu0 0.0
    %1784 = vmatpush1.msra.mxu0 0.0
    %1785 = vmatprep.subr.mxu0 0.0
    %1786 = vmatpush1.msra.mxu0 0.0
    %1787 = vmatprep.subr.mxu0 0.0
    %1788 = vmatpush1.msra.mxu0 0.0
    %1789 = vmatprep.subr.mxu0 0.0
    %1790 = vmatpush1.msra.mxu0 0.0
    %1791 = vmatprep.subr.mxu0 0.0
    %1792 = vmatpush1.msra.mxu0 0.0
    %1793 = vmatprep.subr.mxu0 0.0
    %1794 = vmatpush1.msra.mxu0 0.0
    %1795 = vmatprep.subr.mxu0 0.0
    %1796 = vmatpush1.msra.mxu0 0.0
    %1797 = vmatprep.subr.mxu0 0.0
    %1798 = vmatpush1.msra.mxu0 0.0
    %1799 = vmatprep.subr.mxu0 0.0
    %1800 = vmatpush1.msra.mxu0 0.0
    %1801 = vmatprep.subr.mxu0 0.0
    %1802 = vmatpush1.msra.mxu0 0.0
    %1803 = vmatprep.subr.mxu0 0.0
    %1804 = vmatpush1.msra.mxu0 0.0
    %1805 = vmatprep.subr.mxu0 0.0
    %1806 = vmatpush1.msra.mxu0 0.0
    %1807 = vmatprep.subr.mxu0 0.0
    %1808 = vmatpush1.msra.mxu0 0.0
    %1809 = vmatprep.subr.mxu0 0.0
    %1810 = vmatpush1.msra.mxu0 0.0
    %1811 = vmatprep.subr.mxu0 0.0
    %1812 = vmatpush1.msra.mxu0 0.0
    %1813 = vmatprep.subr.mxu0 0.0
    %1814 = vmatpush1.msra.mxu0 0.0
    %1815 = vmatprep.subr.mxu0 0.0
    %1816 = vmatpush1.msra.mxu0 0.0
    %1817 = vmatprep.subr.mxu0 0.0
    %1818 = vmatpush1.msra.mxu0 0.0
    %1819 = vmatprep.subr.mxu0 0.0
    %1820 = vmatpush1.msra.mxu0 0.0
    %1821 = vmatprep.subr.mxu0 0.0
    %1822 = vmatpush1.msra.mxu0 0.0
    %1823 = vmatprep.subr.mxu0 0.0
    %1824 = vmatpush1.msra.mxu0 0.0
    %1825 = vmatprep.subr.mxu0 0.0
    %1826 = vmatpush1.msra.mxu0 0.0
    %1827 = vmatprep.subr.mxu0 0.0
    %1828 = vmatpush1.msra.mxu0 0.0
    %1829 = vmatprep.subr.mxu0 0.0
    %1830 = vmatpush1.msra.mxu0 0.0
    %1831 = vmatprep.subr.mxu0 0.0
    %1832 = vmatpush1.msra.mxu0 0.0
    %1833 = vmatprep.subr.mxu0 0.0
    %1834 = vmatpush1.msra.mxu0 0.0
    %1835 = vmatprep.subr.mxu0 0.0
    %1836 = vmatpush1.msra.mxu0 0.0
    %1837 = vmatprep.subr.mxu0 0.0
    %1838 = vmatpush1.msra.mxu0 0.0
    %1839 = vmatprep.subr.mxu0 0.0
    %1840 = vmatpush1.msra.mxu0 0.0
    %1841 = vmatprep.subr.mxu0 0.0
    %1842 = vmatpush1.msra.mxu0 0.0
    %1843 = vmatprep.subr.mxu0 0.0
    %1844 = vmatpush1.msra.mxu0 0.0
    %1845 = vmatprep.mubr.f32.mxu0 0.0
    %1846 = vmatmul.mubr.f32.gmra.mrb[0].mxu0 %v1772
    %v1847 = vpop.f32.mrb[0].mxu0
    %v1848 = vadd.f32 %v1755, %v1847
    %v1849 = vpop.f32.mrb[0].mxu0
    %v1850 = vadd.f32 %v1759, %v1849
    %1851 = vdwg.mxu0
    %1852 = vmatprep.subr.mxu0 0.0
    %1853 = vmatpush1.msra.mxu0 %v1779
    %1854 = vmatprep.subr.mxu0 0.0
    %1855 = vmatpush1.msra.mxu0 0.0
    %1856 = vmatprep.subr.mxu0 0.0
    %1857 = vmatpush1.msra.mxu0 0.0
    %1858 = vmatprep.subr.mxu0 0.0
    %1859 = vmatpush1.msra.mxu0 0.0
    %1860 = vmatprep.subr.mxu0 0.0
    %1861 = vmatpush1.msra.mxu0 0.0
    %1862 = vmatprep.subr.mxu0 0.0
    %1863 = vmatpush1.msra.mxu0 0.0
    %1864 = vmatprep.subr.mxu0 0.0
    %1865 = vmatpush1.msra.mxu0 0.0
    %1866 = vmatprep.subr.mxu0 0.0
    %1867 = vmatpush1.msra.mxu0 0.0
    %1868 = vmatprep.subr.mxu0 0.0
    %1869 = vmatpush1.msra.mxu0 0.0
    %1870 = vmatprep.subr.mxu0 0.0
    %1871 = vmatpush1.msra.mxu0 0.0
    %1872 = vmatprep.subr.mxu0 0.0
    %1873 = vmatpush1.msra.mxu0 0.0
    %1874 = vmatprep.subr.mxu0 0.0
    %1875 = vmatpush1.msra.mxu0 0.0
    %1876 = vmatprep.subr.mxu0 0.0
    %1877 = vmatpush1.msra.mxu0 0.0
    %1878 = vmatprep.subr.mxu0 0.0
    %1879 = vmatpush1.msra.mxu0 0.0
    %1880 = vmatprep.subr.mxu0 0.0
    %1881 = vmatpush1.msra.mxu0 0.0
    %1882 = vmatprep.subr.mxu0 0.0
    %1883 = vmatpush1.msra.mxu0 0.0
    %1884 = vmatprep.subr.mxu0 0.0
    %1885 = vmatpush1.msra.mxu0 0.0
    %1886 = vmatprep.subr.mxu0 0.0
    %1887 = vmatpush1.msra.mxu0 0.0
    %1888 = vmatprep.subr.mxu0 0.0
    %1889 = vmatpush1.msra.mxu0 0.0
    %1890 = vmatprep.subr.mxu0 0.0
    %1891 = vmatpush1.msra.mxu0 0.0
    %1892 = vmatprep.subr.mxu0 0.0
    %1893 = vmatpush1.msra.mxu0 0.0
    %1894 = vmatprep.subr.mxu0 0.0
    %1895 = vmatpush1.msra.mxu0 0.0
    %1896 = vmatprep.subr.mxu0 0.0
    %1897 = vmatpush1.msra.mxu0 0.0
    %1898 = vmatprep.subr.mxu0 0.0
    %1899 = vmatpush1.msra.mxu0 0.0
    %1900 = vmatprep.subr.mxu0 0.0
    %1901 = vmatpush1.msra.mxu0 0.0
    %1902 = vmatprep.subr.mxu0 0.0
    %1903 = vmatpush1.msra.mxu0 0.0
    %1904 = vmatprep.subr.mxu0 0.0
    %1905 = vmatpush1.msra.mxu0 0.0
    %1906 = vmatprep.subr.mxu0 0.0
    %1907 = vmatpush1.msra.mxu0 0.0
    %1908 = vmatprep.subr.mxu0 0.0
    %1909 = vmatpush1.msra.mxu0 0.0
    %1910 = vmatprep.subr.mxu0 0.0
    %1911 = vmatpush1.msra.mxu0 0.0
    %1912 = vmatprep.subr.mxu0 0.0
    %1913 = vmatpush1.msra.mxu0 0.0
    %1914 = vmatprep.subr.mxu0 0.0
    %1915 = vmatpush1.msra.mxu0 0.0
    %1916 = vmatprep.mubr.f32.mxu0 0.0
    %1917 = vmatmul.mubr.f32.gmra.mrb[0].mxu0 %v1772
    %v1918 = vpop.f32.mrb[0].mxu0
    %v1919 = vadd.f32 %v1763, %v1918
    %v1920 = vpop.f32.mrb[0].mxu0
    %1921 = vdwg.mxu0
    %1922 = vst [vmem:[#allocation3] sm:$0xff] %v1848
    %1923 = vst [vmem:[#allocation3 + $0x8] sm:$0xff] %v1850
    %1924 = vst [vmem:[#allocation3 + $0x10] sm:$0xff] %v1919
    %v1925 = vld [vmem:[%s0 + $0x7] sm:$0x1]
    %v1926 = vmul.f32 %v1678, %v1745
    %vm1927 = vcmask 1040384
    %v1928 = vsel %vm1927, %v1926, 0.0
    %1929 = vadd.xlane.f32.xlu0 %v1928
    %v1930 = vpop.xlane.xlu0 %1929
    %v1931 = vadd.f32 %v1930, %v1746
    %v1932 = vld [vmem:[#allocation3] ss:$8 sm:$0x7]
    %v1933 = vsub.f32 %v1925, %v1931
    %1935 = vset.pattern.permute.xlu0 0
    %1936 = vperm.xlu0 %1935, %v1933
    %v1937 = vpop.permute.xlu0 %1936
    %v1940 = vlaneseq
    %v1941 = vshrl.u32 %v1940, 7
    %v1942 = vsub.s32 0, %v1941
    %v1943 = vrot.slane %v1679, %v1942
    %v1944 = vlaneseq
    %v1945 = vshrl.u32 %v1944, 7
    %v1946 = vsub.s32 1, %v1945
    %v1947 = vrot.slane %v1679, %v1946
    %v1948 = vlaneseq
    %v1949 = vshrl.u32 %v1948, 7
    %v1950 = vsub.s32 2, %v1949
    %v1951 = vrot.slane %v1679, %v1950
    %v1955 = vmul.f32 %v1937, %v1943
    %v1956 = vmul.f32 %v1937, %v1947
    %v1957 = vmul.f32 %v1937, %v1951
    %v1961 = vcombine.low %v1955, %v1956
    %v1963 = vunpack.c.l.s4 1966171168
    %v1964 = vunpack.c.0.s8 %v1963
    %v1965 = vlaneseq
    %v1966 = vshrl.u32 %v1965, 7
    %v1967 = vsub.s32 %v1964, %v1966
    %v1968 = vrot.slane %v1961, %v1967
    %v1970 = vunpack.c.l.s4 1966171168
    %v1971 = vunpack.c.0.s8 %v1970
    %v1972 = vlaneseq
    %v1973 = vshrl.u32 %v1972, 7
    %v1974 = vsub.s32 %v1971, %v1973
    %v1975 = vrot.slane %v1957, %v1974
    %v1976 = vcombine.low %v1968, %v1975
    %v1978 = vunpack.c.l.s4 1966171168
    %v1979 = vunpack.c.0.s8 %v1978
    %v1980 = vlaneseq
    %v1981 = vshrl.u32 %v1980, 7
    %v1982 = vsub.s32 %v1979, %v1981
    %v1983 = vrot.slane %v1976, %v1982
    %v1985 = vadd.f32 %v1932, %v1983
    %v1986 = vlaneseq
    %vm1987 = vcmp.ge.s32.totalorder %v1986, 0
    %vm1988 = vcmp.lt.s32.totalorder %v1986, 384
    %vm1989 = vmand %vm1987, %vm1988
    %1990 = vst.msk [vmem:[#allocation3] ss:$8 sm:$0x7] %vm1989, %v1985
    %1991 = vst.msk [vmem:[#allocation3] ss:$8 sm:$0x0] %vm1989, %v1985
    %v1993 = vlaneseq
    %v1994 = vshrl.u32 %v1993, 7
    %v1995 = vsub.s32 0, %v1994
    %v1996 = vrot.slane %v1744, %v1995
    %v1997 = vlaneseq
    %v1998 = vshrl.u32 %v1997, 7
    %v1999 = vsub.s32 1, %v1998
    %v2000 = vrot.slane %v1744, %v1999
    %v2001 = vlaneseq
    %v2002 = vshrl.u32 %v2001, 7
    %v2003 = vsub.s32 2, %v2002
    %v2004 = vrot.slane %v1744, %v2003
    %v2005 = vlaneseq
    %v2006 = vshrl.u32 %v2005, 7
    %v2007 = vsub.s32 3, %v2006
    %v2008 = vrot.slane %v1744, %v2007
    %2013 = vmatprep.subr.mxu0 %v1681
    %2014 = vmatpush1.msra.mxu0 %v1680
    %2015 = vmatprep.subr.mxu0 %v1685
    %2016 = vmatpush1.msra.mxu0 %v1684
    %2017 = vmatprep.subr.mxu0 %v1689
    %2018 = vmatpush1.msra.mxu0 %v1688
    %2019 = vmatprep.subr.mxu0 %v1693
    %2020 = vmatpush1.msra.mxu0 %v1692
    %2021 = vmatprep.subr.mxu0 %v1697
    %2022 = vmatpush1.msra.mxu0 %v1696
    %2023 = vmatprep.subr.mxu0 %v1701
    %2024 = vmatpush1.msra.mxu0 %v1700
    %2025 = vmatprep.subr.mxu0 %v1705
    %2026 = vmatpush1.msra.mxu0 %v1704
    %2027 = vmatprep.subr.mxu0 %v1709
    %2028 = vmatpush1.msra.mxu0 %v1708
    %2029 = vmatprep.subr.mxu0 %v1713
    %2030 = vmatpush1.msra.mxu0 %v1712
    %2031 = vmatprep.subr.mxu0 %v1717
    %2032 = vmatpush1.msra.mxu0 %v1716
    %2033 = vmatprep.subr.mxu0 %v1721
    %2034 = vmatpush1.msra.mxu0 %v1720
    %2035 = vmatprep.subr.mxu0 %v1725
    %2036 = vmatpush1.msra.mxu0 %v1724
    %2037 = vmatprep.subr.mxu0 %v1729
    %2038 = vmatpush1.msra.mxu0 %v1728
    %2039 = vmatprep.subr.mxu0 %v1733
    %2040 = vmatpush1.msra.mxu0 %v1732
    %2041 = vmatprep.subr.mxu0 %v1737
    %2042 = vmatpush1.msra.mxu0 %v1736
    %2043 = vmatprep.subr.mxu0 %v1741
    %2044 = vmatpush1.msra.mxu0 %v1740
    %2045 = vmatprep.subr.mxu0 0.0
    %2046 = vmatpush1.msra.mxu0 0.0
    %2047 = vmatprep.subr.mxu0 0.0
    %2048 = vmatpush1.msra.mxu0 0.0
    %2049 = vmatprep.subr.mxu0 0.0
    %2050 = vmatpush1.msra.mxu0 0.0
    %2051 = vmatprep.subr.mxu0 0.0
    %2052 = vmatpush1.msra.mxu0 0.0
    %2053 = vmatprep.subr.mxu0 0.0
    %2054 = vmatpush1.msra.mxu0 0.0
    %2055 = vmatprep.subr.mxu0 0.0
    %2056 = vmatpush1.msra.mxu0 0.0
    %2057 = vmatprep.subr.mxu0 0.0
    %2058 = vmatpush1.msra.mxu0 0.0
    %2059 = vmatprep.subr.mxu0 0.0
    %2060 = vmatpush1.msra.mxu0 0.0
    %2061 = vmatprep.subr.mxu0 0.0
    %2062 = vmatpush1.msra.mxu0 0.0
    %2063 = vmatprep.subr.mxu0 0.0
    %2064 = vmatpush1.msra.mxu0 0.0
    %2065 = vmatprep.subr.mxu0 0.0
    %2066 = vmatpush1.msra.mxu0 0.0
    %2067 = vmatprep.subr.mxu0 0.0
    %2068 = vmatpush1.msra.mxu0 0.0
    %2069 = vmatprep.subr.mxu0 0.0
    %2070 = vmatpush1.msra.mxu0 0.0
    %2071 = vmatprep.subr.mxu0 0.0
    %2072 = vmatpush1.msra.mxu0 0.0
    %2073 = vmatprep.subr.mxu0 0.0
    %2074 = vmatpush1.msra.mxu0 0.0
    %2075 = vmatprep.subr.mxu0 0.0
    %2076 = vmatpush1.msra.mxu0 0.0
    %2077 = vmatprep.mubr.f32.mxu0 0.0
    %2078 = vmatmul.mubr.f32.gmra.mrb[0].mxu0 %v1678
    %v2079 = vpop.f32.mrb[0].mxu0
    %v2080 = vadd.f32 %v1996, %v2079
    %v2081 = vpop.f32.mrb[0].mxu0
    %v2082 = vadd.f32 %v2000, %v2081
    %2083 = vdwg.mxu0
    %2084 = vmatprep.subr.mxu0 %v1683
    %2085 = vmatpush1.msra.mxu0 %v1682
    %2086 = vmatprep.subr.mxu0 %v1687
    %2087 = vmatpush1.msra.mxu0 %v1686
    %2088 = vmatprep.subr.mxu0 %v1691
    %2089 = vmatpush1.msra.mxu0 %v1690
    %2090 = vmatprep.subr.mxu0 %v1695
    %2091 = vmatpush1.msra.mxu0 %v1694
    %2092 = vmatprep.subr.mxu0 %v1699
    %2093 = vmatpush1.msra.mxu0 %v1698
    %2094 = vmatprep.subr.mxu0 %v1703
    %2095 = vmatpush1.msra.mxu0 %v1702
    %2096 = vmatprep.subr.mxu0 %v1707
    %2097 = vmatpush1.msra.mxu0 %v1706
    %2098 = vmatprep.subr.mxu0 %v1711
    %2099 = vmatpush1.msra.mxu0 %v1710
    %2100 = vmatprep.subr.mxu0 %v1715
    %2101 = vmatpush1.msra.mxu0 %v1714
    %2102 = vmatprep.subr.mxu0 %v1719
    %2103 = vmatpush1.msra.mxu0 %v1718
    %2104 = vmatprep.subr.mxu0 %v1723
    %2105 = vmatpush1.msra.mxu0 %v1722
    %2106 = vmatprep.subr.mxu0 %v1727
    %2107 = vmatpush1.msra.mxu0 %v1726
    %2108 = vmatprep.subr.mxu0 %v1731
    %2109 = vmatpush1.msra.mxu0 %v1730
    %2110 = vmatprep.subr.mxu0 %v1735
    %2111 = vmatpush1.msra.mxu0 %v1734
    %2112 = vmatprep.subr.mxu0 %v1739
    %2113 = vmatpush1.msra.mxu0 %v1738
    %2114 = vmatprep.subr.mxu0 %v1743
    %2115 = vmatpush1.msra.mxu0 %v1742
    %2116 = vmatprep.subr.mxu0 0.0
    %2117 = vmatpush1.msra.mxu0 0.0
    %2118 = vmatprep.subr.mxu0 0.0
    %2119 = vmatpush1.msra.mxu0 0.0
    %2120 = vmatprep.subr.mxu0 0.0
    %2121 = vmatpush1.msra.mxu0 0.0
    %2122 = vmatprep.subr.mxu0 0.0
    %2123 = vmatpush1.msra.mxu0 0.0
    %2124 = vmatprep.subr.mxu0 0.0
    %2125 = vmatpush1.msra.mxu0 0.0
    %2126 = vmatprep.subr.mxu0 0.0
    %2127 = vmatpush1.msra.mxu0 0.0
    %2128 = vmatprep.subr.mxu0 0.0
    %2129 = vmatpush1.msra.mxu0 0.0
    %2130 = vmatprep.subr.mxu0 0.0
    %2131 = vmatpush1.msra.mxu0 0.0
    %2132 = vmatprep.subr.mxu0 0.0
    %2133 = vmatpush1.msra.mxu0 0.0
    %2134 = vmatprep.subr.mxu0 0.0
    %2135 = vmatpush1.msra.mxu0 0.0
    %2136 = vmatprep.subr.mxu0 0.0
    %2137 = vmatpush1.msra.mxu0 0.0
    %2138 = vmatprep.subr.mxu0 0.0
    %2139 = vmatpush1.msra.mxu0 0.0
    %2140 = vmatprep.subr.mxu0 0.0
    %2141 = vmatpush1.msra.mxu0 0.0
    %2142 = vmatprep.subr.mxu0 0.0
    %2143 = vmatpush1.msra.mxu0 0.0
    %2144 = vmatprep.subr.mxu0 0.0
    %2145 = vmatpush1.msra.mxu0 0.0
    %2146 = vmatprep.subr.mxu0 0.0
    %2147 = vmatpush1.msra.mxu0 0.0
    %2148 = vmatprep.mubr.f32.mxu0 0.0
    %2149 = vmatmul.mubr.f32.gmra.mrb[0].mxu0 %v1678
    %v2150 = vpop.f32.mrb[0].mxu0
    %v2151 = vadd.f32 %v2004, %v2150
    %v2152 = vpop.f32.mrb[0].mxu0
    %v2153 = vadd.f32 %v2008, %v2152
    %2154 = vdwg.mxu0
    %v2155 = vld [vmem:[#allocation3] ss:$8 sm:$0x7]
    %v2156 = vadd.f32 %v2155, %v2080
    %v2157 = vxor.u32 %v2156, 2147483648
    %v2158 = vmul.f32 %v2157, 1.442695
    %v2159 = vpow.pop %v2158
    %v2160 = vadd.f32 %v2159, 1.0
    %v2161 = vrcp.pop %v2160
    %v2162 = vmul.f32 1.0, %v2161
    %v2164 = vrot.slane %v2155, 1
    %v2166 = vadd.f32 %v2164, %v2082
    %v2167 = vxor.u32 %v2166, 2147483648
    %v2168 = vmul.f32 %v2167, 1.442695
    %v2169 = vpow.pop %v2168
    %v2170 = vadd.f32 %v2169, 1.0
    %v2171 = vrcp.pop %v2170
    %v2172 = vmul.f32 1.0, %v2171
    %v2173 = vrot.slane %v2155, 2
    %v2175 = vadd.f32 %v2173, %v2153
    %v2176 = vmul.f32 %v2162, %v2151
    %v2177 = vadd.f32 %v2175, %v2176
    %v2178 = vtanh.pop %v2177
    %v2179 = vsub.f32 1.0, %v2172
    %v2180 = vmul.f32 %v2179, %v2178
    %v2181 = vmul.f32 %v2172, %v1678
    %v2182 = vadd.f32 %v2180, %v2181
    %2183 = vst [vmem:[#allocation4] sm:$0x1] %v2182
    %2184 = vmatprep.subr.mxu0 %v1681
    %2185 = vmatpush1.msra.mxu0 %v1680
    %2186 = vmatprep.subr.mxu0 %v1685
    %2187 = vmatpush1.msra.mxu0 %v1684
    %2188 = vmatprep.subr.mxu0 %v1689
    %2189 = vmatpush1.msra.mxu0 %v1688
    %2190 = vmatprep.subr.mxu0 %v1693
    %2191 = vmatpush1.msra.mxu0 %v1692
    %2192 = vmatprep.subr.mxu0 %v1697
    %2193 = vmatpush1.msra.mxu0 %v1696
    %2194 = vmatprep.subr.mxu0 %v1701
    %2195 = vmatpush1.msra.mxu0 %v1700
    %2196 = vmatprep.subr.mxu0 %v1705
    %2197 = vmatpush1.msra.mxu0 %v1704
    %2198 = vmatprep.subr.mxu0 %v1709
    %2199 = vmatpush1.msra.mxu0 %v1708
    %2200 = vmatprep.subr.mxu0 %v1713
    %2201 = vmatpush1.msra.mxu0 %v1712
    %2202 = vmatprep.subr.mxu0 %v1717
    %2203 = vmatpush1.msra.mxu0 %v1716
    %2204 = vmatprep.subr.mxu0 %v1721
    %2205 = vmatpush1.msra.mxu0 %v1720
    %2206 = vmatprep.subr.mxu0 %v1725
    %2207 = vmatpush1.msra.mxu0 %v1724
    %2208 = vmatprep.subr.mxu0 %v1729
    %2209 = vmatpush1.msra.mxu0 %v1728
    %2210 = vmatprep.subr.mxu0 %v1733
    %2211 = vmatpush1.msra.mxu0 %v1732
    %2212 = vmatprep.subr.mxu0 %v1737
    %2213 = vmatpush1.msra.mxu0 %v1736
    %2214 = vmatprep.subr.mxu0 %v1741
    %2215 = vmatpush1.msra.mxu0 %v1740
    %2216 = vmatprep.subr.mxu0 0.0
    %2217 = vmatpush1.msra.mxu0 0.0
    %2218 = vmatprep.subr.mxu0 0.0
    %2219 = vmatpush1.msra.mxu0 0.0
    %2220 = vmatprep.subr.mxu0 0.0
    %2221 = vmatpush1.msra.mxu0 0.0
    %2222 = vmatprep.subr.mxu0 0.0
    %2223 = vmatpush1.msra.mxu0 0.0
    %2224 = vmatprep.subr.mxu0 0.0
    %2225 = vmatpush1.msra.mxu0 0.0
    %2226 = vmatprep.subr.mxu0 0.0
    %2227 = vmatpush1.msra.mxu0 0.0
    %2228 = vmatprep.subr.mxu0 0.0
    %2229 = vmatpush1.msra.mxu0 0.0
    %2230 = vmatprep.subr.mxu0 0.0
    %2231 = vmatpush1.msra.mxu0 0.0
    %2232 = vmatprep.subr.mxu0 0.0
    %2233 = vmatpush1.msra.mxu0 0.0
    %2234 = vmatprep.subr.mxu0 0.0
    %2235 = vmatpush1.msra.mxu0 0.0
    %2236 = vmatprep.subr.mxu0 0.0
    %2237 = vmatpush1.msra.mxu0 0.0
    %2238 = vmatprep.subr.mxu0 0.0
    %2239 = vmatpush1.msra.mxu0 0.0
    %2240 = vmatprep.subr.mxu0 0.0
    %2241 = vmatpush1.msra.mxu0 0.0
    %2242 = vmatprep.subr.mxu0 0.0
    %2243 = vmatpush1.msra.mxu0 0.0
    %2244 = vmatprep.subr.mxu0 0.0
    %2245 = vmatpush1.msra.mxu0 0.0
    %2246 = vmatprep.subr.mxu0 0.0
    %2247 = vmatpush1.msra.mxu0 0.0
    %2248 = vmatprep.mubr.f32.mxu0 0.0
    %2249 = vmatmul.mubr.f32.gmra.mrb[0].mxu0 %v2182
    %v2250 = vpop.f32.mrb[0].mxu0
    %v2251 = vadd.f32 %v1996, %v2250
    %v2252 = vpop.f32.mrb[0].mxu0
    %v2253 = vadd.f32 %v2000, %v2252
    %2254 = vdwg.mxu0
    %2255 = vmatprep.subr.mxu0 %v1683
    %2256 = vmatpush1.msra.mxu0 %v1682
    %2257 = vmatprep.subr.mxu0 %v1687
    %2258 = vmatpush1.msra.mxu0 %v1686
    %2259 = vmatprep.subr.mxu0 %v1691
    %2260 = vmatpush1.msra.mxu0 %v1690
    %2261 = vmatprep.subr.mxu0 %v1695
    %2262 = vmatpush1.msra.mxu0 %v1694
    %2263 = vmatprep.subr.mxu0 %v1699
    %2264 = vmatpush1.msra.mxu0 %v1698
    %2265 = vmatprep.subr.mxu0 %v1703
    %2266 = vmatpush1.msra.mxu0 %v1702
    %2267 = vmatprep.subr.mxu0 %v1707
    %2268 = vmatpush1.msra.mxu0 %v1706
    %2269 = vmatprep.subr.mxu0 %v1711
    %2270 = vmatpush1.msra.mxu0 %v1710
    %2271 = vmatprep.subr.mxu0 %v1715
    %2272 = vmatpush1.msra.mxu0 %v1714
    %2273 = vmatprep.subr.mxu0 %v1719
    %2274 = vmatpush1.msra.mxu0 %v1718
    %2275 = vmatprep.subr.mxu0 %v1723
    %2276 = vmatpush1.msra.mxu0 %v1722
    %2277 = vmatprep.subr.mxu0 %v1727
    %2278 = vmatpush1.msra.mxu0 %v1726
    %2279 = vmatprep.subr.mxu0 %v1731
    %2280 = vmatpush1.msra.mxu0 %v1730
    %2281 = vmatprep.subr.mxu0 %v1735
    %2282 = vmatpush1.msra.mxu0 %v1734
    %2283 = vmatprep.subr.mxu0 %v1739
    %2284 = vmatpush1.msra.mxu0 %v1738
    %2285 = vmatprep.subr.mxu0 %v1743
    %2286 = vmatpush1.msra.mxu0 %v1742
    %2287 = vmatprep.subr.mxu0 0.0
    %2288 = vmatpush1.msra.mxu0 0.0
    %2289 = vmatprep.subr.mxu0 0.0
    %2290 = vmatpush1.msra.mxu0 0.0
    %2291 = vmatprep.subr.mxu0 0.0
    %2292 = vmatpush1.msra.mxu0 0.0
    %2293 = vmatprep.subr.mxu0 0.0
    %2294 = vmatpush1.msra.mxu0 0.0
    %2295 = vmatprep.subr.mxu0 0.0
    %2296 = vmatpush1.msra.mxu0 0.0
    %2297 = vmatprep.subr.mxu0 0.0
    %2298 = vmatpush1.msra.mxu0 0.0
    %2299 = vmatprep.subr.mxu0 0.0
    %2300 = vmatpush1.msra.mxu0 0.0
    %2301 = vmatprep.subr.mxu0 0.0
    %2302 = vmatpush1.msra.mxu0 0.0
    %2303 = vmatprep.subr.mxu0 0.0
    %2304 = vmatpush1.msra.mxu0 0.0
    %2305 = vmatprep.subr.mxu0 0.0
    %2306 = vmatpush1.msra.mxu0 0.0
    %2307 = vmatprep.subr.mxu0 0.0
    %2308 = vmatpush1.msra.mxu0 0.0
    %2309 = vmatprep.subr.mxu0 0.0
    %2310 = vmatpush1.msra.mxu0 0.0
    %2311 = vmatprep.subr.mxu0 0.0
    %2312 = vmatpush1.msra.mxu0 0.0
    %2313 = vmatprep.subr.mxu0 0.0
    %2314 = vmatpush1.msra.mxu0 0.0
    %2315 = vmatprep.subr.mxu0 0.0
    %2316 = vmatpush1.msra.mxu0 0.0
    %2317 = vmatprep.subr.mxu0 0.0
    %2318 = vmatpush1.msra.mxu0 0.0
    %2319 = vmatprep.mubr.f32.mxu0 0.0
    %2320 = vmatmul.mubr.f32.gmra.mrb[0].mxu0 %v2182
    %v2321 = vpop.f32.mrb[0].mxu0
    %v2322 = vadd.f32 %v2004, %v2321
    %v2323 = vpop.f32.mrb[0].mxu0
    %v2324 = vadd.f32 %v2008, %v2323
    %2325 = vdwg.mxu0
    %s2326 = scalar_lea.vmem [#allocation3], 1
    %v2327 = vld [vmem:[%s2326] ss:$8 sm:$0x7]
    %v2328 = vadd.f32 %v2327, %v2251
    %v2329 = vxor.u32 %v2328, 2147483648
    %v2330 = vmul.f32 %v2329, 1.442695
    %v2331 = vpow.pop %v2330
    %v2332 = vadd.f32 %v2331, 1.0
    %v2333 = vrcp.pop %v2332
    %v2334 = vmul.f32 1.0, %v2333
    %v2336 = vrot.slane %v2327, 1
    %v2338 = vadd.f32 %v2336, %v2253
    %v2339 = vxor.u32 %v2338, 2147483648
    %v2340 = vmul.f32 %v2339, 1.442695
    %v2341 = vpow.pop %v2340
    %v2342 = vadd.f32 %v2341, 1.0
    %v2343 = vrcp.pop %v2342
    %v2344 = vmul.f32 1.0, %v2343
    %v2345 = vrot.slane %v2327, 2
    %v2347 = vadd.f32 %v2345, %v2324
    %v2348 = vmul.f32 %v2334, %v2322
    %v2349 = vadd.f32 %v2347, %v2348
    %v2350 = vtanh.pop %v2349
    %v2351 = vsub.f32 1.0, %v2344
    %v2352 = vmul.f32 %v2351, %v2350
    %v2353 = vmul.f32 %v2344, %v2182
    %v2354 = vadd.f32 %v2352, %v2353
    %2355 = vst [vmem:[#allocation4 + $0x1] sm:$0x1] %v2354
    %2356 = vmatprep.subr.mxu0 %v1681
    %2357 = vmatpush1.msra.mxu0 %v1680
    %2358 = vmatprep.subr.mxu0 %v1685
    %2359 = vmatpush1.msra.mxu0 %v1684
    %2360 = vmatprep.subr.mxu0 %v1689
    %2361 = vmatpush1.msra.mxu0 %v1688
    %2362 = vmatprep.subr.mxu0 %v1693
    %2363 = vmatpush1.msra.mxu0 %v1692
    %2364 = vmatprep.subr.mxu0 %v1697
    %2365 = vmatpush1.msra.mxu0 %v1696
    %2366 = vmatprep.subr.mxu0 %v1701
    %2367 = vmatpush1.msra.mxu0 %v1700
    %2368 = vmatprep.subr.mxu0 %v1705
    %2369 = vmatpush1.msra.mxu0 %v1704
    %2370 = vmatprep.subr.mxu0 %v1709
    %2371 = vmatpush1.msra.mxu0 %v1708
    %2372 = vmatprep.subr.mxu0 %v1713
    %2373 = vmatpush1.msra.mxu0 %v1712
    %2374 = vmatprep.subr.mxu0 %v1717
    %2375 = vmatpush1.msra.mxu0 %v1716
    %2376 = vmatprep.subr.mxu0 %v1721
    %2377 = vmatpush1.msra.mxu0 %v1720
    %2378 = vmatprep.subr.mxu0 %v1725
    %2379 = vmatpush1.msra.mxu0 %v1724
    %2380 = vmatprep.subr.mxu0 %v1729
    %2381 = vmatpush1.msra.mxu0 %v1728
    %2382 = vmatprep.subr.mxu0 %v1733
    %2383 = vmatpush1.msra.mxu0 %v1732
    %2384 = vmatprep.subr.mxu0 %v1737
    %2385 = vmatpush1.msra.mxu0 %v1736
    %2386 = vmatprep.subr.mxu0 %v1741
    %2387 = vmatpush1.msra.mxu0 %v1740
    %2388 = vmatprep.subr.mxu0 0.0
    %2389 = vmatpush1.msra.mxu0 0.0
    %2390 = vmatprep.subr.mxu0 0.0
    %2391 = vmatpush1.msra.mxu0 0.0
    %2392 = vmatprep.subr.mxu0 0.0
    %2393 = vmatpush1.msra.mxu0 0.0
    %2394 = vmatprep.subr.mxu0 0.0
    %2395 = vmatpush1.msra.mxu0 0.0
    %2396 = vmatprep.subr.mxu0 0.0
    %2397 = vmatpush1.msra.mxu0 0.0
    %2398 = vmatprep.subr.mxu0 0.0
    %2399 = vmatpush1.msra.mxu0 0.0
    %2400 = vmatprep.subr.mxu0 0.0
    %2401 = vmatpush1.msra.mxu0 0.0
    %2402 = vmatprep.subr.mxu0 0.0
    %2403 = vmatpush1.msra.mxu0 0.0
    %2404 = vmatprep.subr.mxu0 0.0
    %2405 = vmatpush1.msra.mxu0 0.0
    %2406 = vmatprep.subr.mxu0 0.0
    %2407 = vmatpush1.msra.mxu0 0.0
    %2408 = vmatprep.subr.mxu0 0.0
    %2409 = vmatpush1.msra.mxu0 0.0
    %2410 = vmatprep.subr.mxu0 0.0
    %2411 = vmatpush1.msra.mxu0 0.0
    %2412 = vmatprep.subr.mxu0 0.0
    %2413 = vmatpush1.msra.mxu0 0.0
    %2414 = vmatprep.subr.mxu0 0.0
    %2415 = vmatpush1.msra.mxu0 0.0
    %2416 = vmatprep.subr.mxu0 0.0
    %2417 = vmatpush1.msra.mxu0 0.0
    %2418 = vmatprep.subr.mxu0 0.0
    %2419 = vmatpush1.msra.mxu0 0.0
    %2420 = vmatprep.mubr.f32.mxu0 0.0
    %2421 = vmatmul.mubr.f32.gmra.mrb[0].mxu0 %v2354
    %v2422 = vpop.f32.mrb[0].mxu0
    %v2423 = vadd.f32 %v1996, %v2422
    %v2424 = vpop.f32.mrb[0].mxu0
    %v2425 = vadd.f32 %v2000, %v2424
    %2426 = vdwg.mxu0
    %2427 = vmatprep.subr.mxu0 %v1683
    %2428 = vmatpush1.msra.mxu0 %v1682
    %2429 = vmatprep.subr.mxu0 %v1687
    %2430 = vmatpush1.msra.mxu0 %v1686
    %2431 = vmatprep.subr.mxu0 %v1691
    %2432 = vmatpush1.msra.mxu0 %v1690
    %2433 = vmatprep.subr.mxu0 %v1695
    %2434 = vmatpush1.msra.mxu0 %v1694
    %2435 = vmatprep.subr.mxu0 %v1699
    %2436 = vmatpush1.msra.mxu0 %v1698
    %2437 = vmatprep.subr.mxu0 %v1703
    %2438 = vmatpush1.msra.mxu0 %v1702
    %2439 = vmatprep.subr.mxu0 %v1707
    %2440 = vmatpush1.msra.mxu0 %v1706
    %2441 = vmatprep.subr.mxu0 %v1711
    %2442 = vmatpush1.msra.mxu0 %v1710
    %2443 = vmatprep.subr.mxu0 %v1715
    %2444 = vmatpush1.msra.mxu0 %v1714
    %2445 = vmatprep.subr.mxu0 %v1719
    %2446 = vmatpush1.msra.mxu0 %v1718
    %2447 = vmatprep.subr.mxu0 %v1723
    %2448 = vmatpush1.msra.mxu0 %v1722
    %2449 = vmatprep.subr.mxu0 %v1727
    %2450 = vmatpush1.msra.mxu0 %v1726
    %2451 = vmatprep.subr.mxu0 %v1731
    %2452 = vmatpush1.msra.mxu0 %v1730
    %2453 = vmatprep.subr.mxu0 %v1735
    %2454 = vmatpush1.msra.mxu0 %v1734
    %2455 = vmatprep.subr.mxu0 %v1739
    %2456 = vmatpush1.msra.mxu0 %v1738
    %2457 = vmatprep.subr.mxu0 %v1743
    %2458 = vmatpush1.msra.mxu0 %v1742
    %2459 = vmatprep.subr.mxu0 0.0
    %2460 = vmatpush1.msra.mxu0 0.0
    %2461 = vmatprep.subr.mxu0 0.0
    %2462 = vmatpush1.msra.mxu0 0.0
    %2463 = vmatprep.subr.mxu0 0.0
    %2464 = vmatpush1.msra.mxu0 0.0
    %2465 = vmatprep.subr.mxu0 0.0
    %2466 = vmatpush1.msra.mxu0 0.0
    %2467 = vmatprep.subr.mxu0 0.0
    %2468 = vmatpush1.msra.mxu0 0.0
    %2469 = vmatprep.subr.mxu0 0.0
    %2470 = vmatpush1.msra.mxu0 0.0
    %2471 = vmatprep.subr.mxu0 0.0
    %2472 = vmatpush1.msra.mxu0 0.0
    %2473 = vmatprep.subr.mxu0 0.0
    %2474 = vmatpush1.msra.mxu0 0.0
    %2475 = vmatprep.subr.mxu0 0.0
    %2476 = vmatpush1.msra.mxu0 0.0
    %2477 = vmatprep.subr.mxu0 0.0
    %2478 = vmatpush1.msra.mxu0 0.0
    %2479 = vmatprep.subr.mxu0 0.0
    %2480 = vmatpush1.msra.mxu0 0.0
    %2481 = vmatprep.subr.mxu0 0.0
    %2482 = vmatpush1.msra.mxu0 0.0
    %2483 = vmatprep.subr.mxu0 0.0
    %2484 = vmatpush1.msra.mxu0 0.0
    %2485 = vmatprep.subr.mxu0 0.0
    %2486 = vmatpush1.msra.mxu0 0.0
    %2487 = vmatprep.subr.mxu0 0.0
    %2488 = vmatpush1.msra.mxu0 0.0
    %2489 = vmatprep.subr.mxu0 0.0
    %2490 = vmatpush1.msra.mxu0 0.0
    %2491 = vmatprep.mubr.f32.mxu0 0.0
    %2492 = vmatmul.mubr.f32.gmra.mrb[0].mxu0 %v2354
    %v2493 = vpop.f32.mrb[0].mxu0
    %v2494 = vadd.f32 %v2004, %v2493
    %v2495 = vpop.f32.mrb[0].mxu0
    %v2496 = vadd.f32 %v2008, %v2495
    %2497 = vdwg.mxu0
    %s2498 = scalar_lea.vmem [#allocation3], 2
    %v2499 = vld [vmem:[%s2498] ss:$8 sm:$0x7]
    %v2500 = vadd.f32 %v2499, %v2423
    %v2501 = vxor.u32 %v2500, 2147483648
    %v2502 = vmul.f32 %v2501, 1.442695
    %v2503 = vpow.pop %v2502
    %v2504 = vadd.f32 %v2503, 1.0
    %v2505 = vrcp.pop %v2504
    %v2506 = vmul.f32 1.0, %v2505
    %v2508 = vrot.slane %v2499, 1
    %v2510 = vadd.f32 %v2508, %v2425
    %v2511 = vxor.u32 %v2510, 2147483648
    %v2512 = vmul.f32 %v2511, 1.442695
    %v2513 = vpow.pop %v2512
    %v2514 = vadd.f32 %v2513, 1.0
    %v2515 = vrcp.pop %v2514
    %v2516 = vmul.f32 1.0, %v2515
    %v2517 = vrot.slane %v2499, 2
    %v2519 = vadd.f32 %v2517, %v2496
    %v2520 = vmul.f32 %v2506, %v2494
    %v2521 = vadd.f32 %v2519, %v2520
    %v2522 = vtanh.pop %v2521
    %v2523 = vsub.f32 1.0, %v2516
    %v2524 = vmul.f32 %v2523, %v2522
    %v2525 = vmul.f32 %v2516, %v2354
    %v2526 = vadd.f32 %v2524, %v2525
    %2527 = vst [vmem:[#allocation4 + $0x2] sm:$0x1] %v2526
    %2528 = vmatprep.subr.mxu0 %v1681
    %2529 = vmatpush1.msra.mxu0 %v1680
    %2530 = vmatprep.subr.mxu0 %v1685
    %2531 = vmatpush1.msra.mxu0 %v1684
    %2532 = vmatprep.subr.mxu0 %v1689
    %2533 = vmatpush1.msra.mxu0 %v1688
    %2534 = vmatprep.subr.mxu0 %v1693
    %2535 = vmatpush1.msra.mxu0 %v1692
    %2536 = vmatprep.subr.mxu0 %v1697
    %2537 = vmatpush1.msra.mxu0 %v1696
    %2538 = vmatprep.subr.mxu0 %v1701
    %2539 = vmatpush1.msra.mxu0 %v1700
    %2540 = vmatprep.subr.mxu0 %v1705
    %2541 = vmatpush1.msra.mxu0 %v1704
    %2542 = vmatprep.subr.mxu0 %v1709
    %2543 = vmatpush1.msra.mxu0 %v1708
    %2544 = vmatprep.subr.mxu0 %v1713
    %2545 = vmatpush1.msra.mxu0 %v1712
    %2546 = vmatprep.subr.mxu0 %v1717
    %2547 = vmatpush1.msra.mxu0 %v1716
    %2548 = vmatprep.subr.mxu0 %v1721
    %2549 = vmatpush1.msra.mxu0 %v1720
    %2550 = vmatprep.subr.mxu0 %v1725
    %2551 = vmatpush1.msra.mxu0 %v1724
    %2552 = vmatprep.subr.mxu0 %v1729
    %2553 = vmatpush1.msra.mxu0 %v1728
    %2554 = vmatprep.subr.mxu0 %v1733
    %2555 = vmatpush1.msra.mxu0 %v1732
    %2556 = vmatprep.subr.mxu0 %v1737
    %2557 = vmatpush1.msra.mxu0 %v1736
    %2558 = vmatprep.subr.mxu0 %v1741
    %2559 = vmatpush1.msra.mxu0 %v1740
    %2560 = vmatprep.subr.mxu0 0.0
    %2561 = vmatpush1.msra.mxu0 0.0
    %2562 = vmatprep.subr.mxu0 0.0
    %2563 = vmatpush1.msra.mxu0 0.0
    %2564 = vmatprep.subr.mxu0 0.0
    %2565 = vmatpush1.msra.mxu0 0.0
    %2566 = vmatprep.subr.mxu0 0.0
    %2567 = vmatpush1.msra.mxu0 0.0
    %2568 = vmatprep.subr.mxu0 0.0
    %2569 = vmatpush1.msra.mxu0 0.0
    %2570 = vmatprep.subr.mxu0 0.0
    %2571 = vmatpush1.msra.mxu0 0.0
    %2572 = vmatprep.subr.mxu0 0.0
    %2573 = vmatpush1.msra.mxu0 0.0
    %2574 = vmatprep.subr.mxu0 0.0
    %2575 = vmatpush1.msra.mxu0 0.0
    %2576 = vmatprep.subr.mxu0 0.0
    %2577 = vmatpush1.msra.mxu0 0.0
    %2578 = vmatprep.subr.mxu0 0.0
    %2579 = vmatpush1.msra.mxu0 0.0
    %2580 = vmatprep.subr.mxu0 0.0
    %2581 = vmatpush1.msra.mxu0 0.0
    %2582 = vmatprep.subr.mxu0 0.0
    %2583 = vmatpush1.msra.mxu0 0.0
    %2584 = vmatprep.subr.mxu0 0.0
    %2585 = vmatpush1.msra.mxu0 0.0
    %2586 = vmatprep.subr.mxu0 0.0
    %2587 = vmatpush1.msra.mxu0 0.0
    %2588 = vmatprep.subr.mxu0 0.0
    %2589 = vmatpush1.msra.mxu0 0.0
    %2590 = vmatprep.subr.mxu0 0.0
    %2591 = vmatpush1.msra.mxu0 0.0
    %2592 = vmatprep.mubr.f32.mxu0 0.0
    %2593 = vmatmul.mubr.f32.gmra.mrb[0].mxu0 %v2526
    %v2594 = vpop.f32.mrb[0].mxu0
    %v2595 = vadd.f32 %v1996, %v2594
    %v2596 = vpop.f32.mrb[0].mxu0
    %v2597 = vadd.f32 %v2000, %v2596
    %2598 = vdwg.mxu0
    %2599 = vmatprep.subr.mxu0 %v1683
    %2600 = vmatpush1.msra.mxu0 %v1682
    %2601 = vmatprep.subr.mxu0 %v1687
    %2602 = vmatpush1.msra.mxu0 %v1686
    %2603 = vmatprep.subr.mxu0 %v1691
    %2604 = vmatpush1.msra.mxu0 %v1690
    %2605 = vmatprep.subr.mxu0 %v1695
    %2606 = vmatpush1.msra.mxu0 %v1694
    %2607 = vmatprep.subr.mxu0 %v1699
    %2608 = vmatpush1.msra.mxu0 %v1698
    %2609 = vmatprep.subr.mxu0 %v1703
    %2610 = vmatpush1.msra.mxu0 %v1702
    %2611 = vmatprep.subr.mxu0 %v1707
    %2612 = vmatpush1.msra.mxu0 %v1706
    %2613 = vmatprep.subr.mxu0 %v1711
    %2614 = vmatpush1.msra.mxu0 %v1710
    %2615 = vmatprep.subr.mxu0 %v1715
    %2616 = vmatpush1.msra.mxu0 %v1714
    %2617 = vmatprep.subr.mxu0 %v1719
    %2618 = vmatpush1.msra.mxu0 %v1718
    %2619 = vmatprep.subr.mxu0 %v1723
    %2620 = vmatpush1.msra.mxu0 %v1722
    %2621 = vmatprep.subr.mxu0 %v1727
    %2622 = vmatpush1.msra.mxu0 %v1726
    %2623 = vmatprep.subr.mxu0 %v1731
    %2624 = vmatpush1.msra.mxu0 %v1730
    %2625 = vmatprep.subr.mxu0 %v1735
    %2626 = vmatpush1.msra.mxu0 %v1734
    %2627 = vmatprep.subr.mxu0 %v1739
    %2628 = vmatpush1.msra.mxu0 %v1738
    %2629 = vmatprep.subr.mxu0 %v1743
    %2630 = vmatpush1.msra.mxu0 %v1742
    %2631 = vmatprep.subr.mxu0 0.0
    %2632 = vmatpush1.msra.mxu0 0.0
    %2633 = vmatprep.subr.mxu0 0.0
    %2634 = vmatpush1.msra.mxu0 0.0
    %2635 = vmatprep.subr.mxu0 0.0
    %2636 = vmatpush1.msra.mxu0 0.0
    %2637 = vmatprep.subr.mxu0 0.0
    %2638 = vmatpush1.msra.mxu0 0.0
    %2639 = vmatprep.subr.mxu0 0.0
    %2640 = vmatpush1.msra.mxu0 0.0
    %2641 = vmatprep.subr.mxu0 0.0
    %2642 = vmatpush1.msra.mxu0 0.0
    %2643 = vmatprep.subr.mxu0 0.0
    %2644 = vmatpush1.msra.mxu0 0.0
    %2645 = vmatprep.subr.mxu0 0.0
    %2646 = vmatpush1.msra.mxu0 0.0
    %2647 = vmatprep.subr.mxu0 0.0
    %2648 = vmatpush1.msra.mxu0 0.0
    %2649 = vmatprep.subr.mxu0 0.0
    %2650 = vmatpush1.msra.mxu0 0.0
    %2651 = vmatprep.subr.mxu0 0.0
    %2652 = vmatpush1.msra.mxu0 0.0
    %2653 = vmatprep.subr.mxu0 0.0
    %2654 = vmatpush1.msra.mxu0 0.0
    %2655 = vmatprep.subr.mxu0 0.0
    %2656 = vmatpush1.msra.mxu0 0.0
    %2657 = vmatprep.subr.mxu0 0.0
    %2658 = vmatpush1.msra.mxu0 0.0
    %2659 = vmatprep.subr.mxu0 0.0
    %2660 = vmatpush1.msra.mxu0 0.0
    %2661 = vmatprep.subr.mxu0 0.0
    %2662 = vmatpush1.msra.mxu0 0.0
    %2663 = vmatprep.mubr.f32.mxu0 0.0
    %2664 = vmatmul.mubr.f32.gmra.mrb[0].mxu0 %v2526
    %v2665 = vpop.f32.mrb[0].mxu0
    %v2666 = vadd.f32 %v2004, %v2665
    %v2667 = vpop.f32.mrb[0].mxu0
    %v2668 = vadd.f32 %v2008, %v2667
    %2669 = vdwg.mxu0
    %s2670 = scalar_lea.vmem [#allocation3], 3
    %v2671 = vld [vmem:[%s2670] ss:$8 sm:$0x7]
    %v2672 = vadd.f32 %v2671, %v2595
    %v2673 = vxor.u32 %v2672, 2147483648
    %v2674 = vmul.f32 %v2673, 1.442695
    %v2675 = vpow.pop %v2674
    %v2676 = vadd.f32 %v2675, 1.0
    %v2677 = vrcp.pop %v2676
    %v2678 = vmul.f32 1.0, %v2677
    %v2680 = vrot.slane %v2671, 1
    %v2682 = vadd.f32 %v2680, %v2597
    %v2683 = vxor.u32 %v2682, 2147483648
    %v2684 = vmul.f32 %v2683, 1.442695
    %v2685 = vpow.pop %v2684
    %v2686 = vadd.f32 %v2685, 1.0
    %v2687 = vrcp.pop %v2686
    %v2688 = vmul.f32 1.0, %v2687
    %v2689 = vrot.slane %v2671, 2
    %v2691 = vadd.f32 %v2689, %v2668
    %v2692 = vmul.f32 %v2678, %v2666
    %v2693 = vadd.f32 %v2691, %v2692
    %v2694 = vtanh.pop %v2693
    %v2695 = vsub.f32 1.0, %v2688
    %v2696 = vmul.f32 %v2695, %v2694
    %v2697 = vmul.f32 %v2688, %v2526
    %v2698 = vadd.f32 %v2696, %v2697
    %2699 = vst [vmem:[#allocation4 + $0x3] sm:$0x1] %v2698
    %2700 = vmatprep.subr.mxu0 %v1681
    %2701 = vmatpush1.msra.mxu0 %v1680
    %2702 = vmatprep.subr.mxu0 %v1685
    %2703 = vmatpush1.msra.mxu0 %v1684
    %2704 = vmatprep.subr.mxu0 %v1689
    %2705 = vmatpush1.msra.mxu0 %v1688
    %2706 = vmatprep.subr.mxu0 %v1693
    %2707 = vmatpush1.msra.mxu0 %v1692
    %2708 = vmatprep.subr.mxu0 %v1697
    %2709 = vmatpush1.msra.mxu0 %v1696
    %2710 = vmatprep.subr.mxu0 %v1701
    %2711 = vmatpush1.msra.mxu0 %v1700
    %2712 = vmatprep.subr.mxu0 %v1705
    %2713 = vmatpush1.msra.mxu0 %v1704
    %2714 = vmatprep.subr.mxu0 %v1709
    %2715 = vmatpush1.msra.mxu0 %v1708
    %2716 = vmatprep.subr.mxu0 %v1713
    %2717 = vmatpush1.msra.mxu0 %v1712
    %2718 = vmatprep.subr.mxu0 %v1717
    %2719 = vmatpush1.msra.mxu0 %v1716
    %2720 = vmatprep.subr.mxu0 %v1721
    %2721 = vmatpush1.msra.mxu0 %v1720
    %2722 = vmatprep.subr.mxu0 %v1725
    %2723 = vmatpush1.msra.mxu0 %v1724
    %2724 = vmatprep.subr.mxu0 %v1729
    %2725 = vmatpush1.msra.mxu0 %v1728
    %2726 = vmatprep.subr.mxu0 %v1733
    %2727 = vmatpush1.msra.mxu0 %v1732
    %2728 = vmatprep.subr.mxu0 %v1737
    %2729 = vmatpush1.msra.mxu0 %v1736
    %2730 = vmatprep.subr.mxu0 %v1741
    %2731 = vmatpush1.msra.mxu0 %v1740
    %2732 = vmatprep.subr.mxu0 0.0
    %2733 = vmatpush1.msra.mxu0 0.0
    %2734 = vmatprep.subr.mxu0 0.0
    %2735 = vmatpush1.msra.mxu0 0.0
    %2736 = vmatprep.subr.mxu0 0.0
    %2737 = vmatpush1.msra.mxu0 0.0
    %2738 = vmatprep.subr.mxu0 0.0
    %2739 = vmatpush1.msra.mxu0 0.0
    %2740 = vmatprep.subr.mxu0 0.0
    %2741 = vmatpush1.msra.mxu0 0.0
    %2742 = vmatprep.subr.mxu0 0.0
    %2743 = vmatpush1.msra.mxu0 0.0
    %2744 = vmatprep.subr.mxu0 0.0
    %2745 = vmatpush1.msra.mxu0 0.0
    %2746 = vmatprep.subr.mxu0 0.0
    %2747 = vmatpush1.msra.mxu0 0.0
    %2748 = vmatprep.subr.mxu0 0.0
    %2749 = vmatpush1.msra.mxu0 0.0
    %2750 = vmatprep.subr.mxu0 0.0
    %2751 = vmatpush1.msra.mxu0 0.0
    %2752 = vmatprep.subr.mxu0 0.0
    %2753 = vmatpush1.msra.mxu0 0.0
    %2754 = vmatprep.subr.mxu0 0.0
    %2755 = vmatpush1.msra.mxu0 0.0
    %2756 = vmatprep.subr.mxu0 0.0
    %2757 = vmatpush1.msra.mxu0 0.0
    %2758 = vmatprep.subr.mxu0 0.0
    %2759 = vmatpush1.msra.mxu0 0.0
    %2760 = vmatprep.subr.mxu0 0.0
    %2761 = vmatpush1.msra.mxu0 0.0
    %2762 = vmatprep.subr.mxu0 0.0
    %2763 = vmatpush1.msra.mxu0 0.0
    %2764 = vmatprep.mubr.f32.mxu0 0.0
    %2765 = vmatmul.mubr.f32.gmra.mrb[0].mxu0 %v2698
    %v2766 = vpop.f32.mrb[0].mxu0
    %v2767 = vadd.f32 %v1996, %v2766
    %v2768 = vpop.f32.mrb[0].mxu0
    %v2769 = vadd.f32 %v2000, %v2768
    %2770 = vdwg.mxu0
    %2771 = vmatprep.subr.mxu0 %v1683
    %2772 = vmatpush1.msra.mxu0 %v1682
    %2773 = vmatprep.subr.mxu0 %v1687
    %2774 = vmatpush1.msra.mxu0 %v1686
    %2775 = vmatprep.subr.mxu0 %v1691
    %2776 = vmatpush1.msra.mxu0 %v1690
    %2777 = vmatprep.subr.mxu0 %v1695
    %2778 = vmatpush1.msra.mxu0 %v1694
    %2779 = vmatprep.subr.mxu0 %v1699
    %2780 = vmatpush1.msra.mxu0 %v1698
    %2781 = vmatprep.subr.mxu0 %v1703
    %2782 = vmatpush1.msra.mxu0 %v1702
    %2783 = vmatprep.subr.mxu0 %v1707
    %2784 = vmatpush1.msra.mxu0 %v1706
    %2785 = vmatprep.subr.mxu0 %v1711
    %2786 = vmatpush1.msra.mxu0 %v1710
    %2787 = vmatprep.subr.mxu0 %v1715
    %2788 = vmatpush1.msra.mxu0 %v1714
    %2789 = vmatprep.subr.mxu0 %v1719
    %2790 = vmatpush1.msra.mxu0 %v1718
    %2791 = vmatprep.subr.mxu0 %v1723
    %2792 = vmatpush1.msra.mxu0 %v1722
    %2793 = vmatprep.subr.mxu0 %v1727
    %2794 = vmatpush1.msra.mxu0 %v1726
    %2795 = vmatprep.subr.mxu0 %v1731
    %2796 = vmatpush1.msra.mxu0 %v1730
    %2797 = vmatprep.subr.mxu0 %v1735
    %2798 = vmatpush1.msra.mxu0 %v1734
    %2799 = vmatprep.subr.mxu0 %v1739
    %2800 = vmatpush1.msra.mxu0 %v1738
    %2801 = vmatprep.subr.mxu0 %v1743
    %2802 = vmatpush1.msra.mxu0 %v1742
    %2803 = vmatprep.subr.mxu0 0.0
    %2804 = vmatpush1.msra.mxu0 0.0
    %2805 = vmatprep.subr.mxu0 0.0
    %2806 = vmatpush1.msra.mxu0 0.0
    %2807 = vmatprep.subr.mxu0 0.0
    %2808 = vmatpush1.msra.mxu0 0.0
    %2809 = vmatprep.subr.mxu0 0.0
    %2810 = vmatpush1.msra.mxu0 0.0
    %2811 = vmatprep.subr.mxu0 0.0
    %2812 = vmatpush1.msra.mxu0 0.0
    %2813 = vmatprep.subr.mxu0 0.0
    %2814 = vmatpush1.msra.mxu0 0.0
    %2815 = vmatprep.subr.mxu0 0.0
    %2816 = vmatpush1.msra.mxu0 0.0
    %2817 = vmatprep.subr.mxu0 0.0
    %2818 = vmatpush1.msra.mxu0 0.0
    %2819 = vmatprep.subr.mxu0 0.0
    %2820 = vmatpush1.msra.mxu0 0.0
    %2821 = vmatprep.subr.mxu0 0.0
    %2822 = vmatpush1.msra.mxu0 0.0
    %2823 = vmatprep.subr.mxu0 0.0
    %2824 = vmatpush1.msra.mxu0 0.0
    %2825 = vmatprep.subr.mxu0 0.0
    %2826 = vmatpush1.msra.mxu0 0.0
    %2827 = vmatprep.subr.mxu0 0.0
    %2828 = vmatpush1.msra.mxu0 0.0
    %2829 = vmatprep.subr.mxu0 0.0
    %2830 = vmatpush1.msra.mxu0 0.0
    %2831 = vmatprep.subr.mxu0 0.0
    %2832 = vmatpush1.msra.mxu0 0.0
    %2833 = vmatprep.subr.mxu0 0.0
    %2834 = vmatpush1.msra.mxu0 0.0
    %2835 = vmatprep.mubr.f32.mxu0 0.0
    %2836 = vmatmul.mubr.f32.gmra.mrb[0].mxu0 %v2698
    %v2837 = vpop.f32.mrb[0].mxu0
    %v2838 = vadd.f32 %v2004, %v2837
    %v2839 = vpop.f32.mrb[0].mxu0
    %v2840 = vadd.f32 %v2008, %v2839
    %2841 = vdwg.mxu0
    %s2842 = scalar_lea.vmem [#allocation3], 4
    %v2843 = vld [vmem:[%s2842] ss:$8 sm:$0x7]
    %v2844 = vadd.f32 %v2843, %v2767
    %v2845 = vxor.u32 %v2844, 2147483648
    %v2846 = vmul.f32 %v2845, 1.442695
    %v2847 = vpow.pop %v2846
    %v2848 = vadd.f32 %v2847, 1.0
    %v2849 = vrcp.pop %v2848
    %v2850 = vmul.f32 1.0, %v2849
    %v2852 = vrot.slane %v2843, 1
    %v2854 = vadd.f32 %v2852, %v2769
    %v2855 = vxor.u32 %v2854, 2147483648
    %v2856 = vmul.f32 %v2855, 1.442695
    %v2857 = vpow.pop %v2856
    %v2858 = vadd.f32 %v2857, 1.0
    %v2859 = vrcp.pop %v2858
    %v2860 = vmul.f32 1.0, %v2859
    %v2861 = vrot.slane %v2843, 2
    %v2863 = vadd.f32 %v2861, %v2840
    %v2864 = vmul.f32 %v2850, %v2838
    %v2865 = vadd.f32 %v2863, %v2864
    %v2866 = vtanh.pop %v2865
    %v2867 = vsub.f32 1.0, %v2860
    %v2868 = vmul.f32 %v2867, %v2866
    %v2869 = vmul.f32 %v2860, %v2698
    %v2870 = vadd.f32 %v2868, %v2869
    %2871 = vst [vmem:[#allocation4 + $0x4] sm:$0x1] %v2870
    %2872 = vmatprep.subr.mxu0 %v1681
    %2873 = vmatpush1.msra.mxu0 %v1680
    %2874 = vmatprep.subr.mxu0 %v1685
    %2875 = vmatpush1.msra.mxu0 %v1684
    %2876 = vmatprep.subr.mxu0 %v1689
    %2877 = vmatpush1.msra.mxu0 %v1688
    %2878 = vmatprep.subr.mxu0 %v1693
    %2879 = vmatpush1.msra.mxu0 %v1692
    %2880 = vmatprep.subr.mxu0 %v1697
    %2881 = vmatpush1.msra.mxu0 %v1696
    %2882 = vmatprep.subr.mxu0 %v1701
    %2883 = vmatpush1.msra.mxu0 %v1700
    %2884 = vmatprep.subr.mxu0 %v1705
    %2885 = vmatpush1.msra.mxu0 %v1704
    %2886 = vmatprep.subr.mxu0 %v1709
    %2887 = vmatpush1.msra.mxu0 %v1708
    %2888 = vmatprep.subr.mxu0 %v1713
    %2889 = vmatpush1.msra.mxu0 %v1712
    %2890 = vmatprep.subr.mxu0 %v1717
    %2891 = vmatpush1.msra.mxu0 %v1716
    %2892 = vmatprep.subr.mxu0 %v1721
    %2893 = vmatpush1.msra.mxu0 %v1720
    %2894 = vmatprep.subr.mxu0 %v1725
    %2895 = vmatpush1.msra.mxu0 %v1724
    %2896 = vmatprep.subr.mxu0 %v1729
    %2897 = vmatpush1.msra.mxu0 %v1728
    %2898 = vmatprep.subr.mxu0 %v1733
    %2899 = vmatpush1.msra.mxu0 %v1732
    %2900 = vmatprep.subr.mxu0 %v1737
    %2901 = vmatpush1.msra.mxu0 %v1736
    %2902 = vmatprep.subr.mxu0 %v1741
    %2903 = vmatpush1.msra.mxu0 %v1740
    %2904 = vmatprep.subr.mxu0 0.0
    %2905 = vmatpush1.msra.mxu0 0.0
    %2906 = vmatprep.subr.mxu0 0.0
    %2907 = vmatpush1.msra.mxu0 0.0
    %2908 = vmatprep.subr.mxu0 0.0
    %2909 = vmatpush1.msra.mxu0 0.0
    %2910 = vmatprep.subr.mxu0 0.0
    %2911 = vmatpush1.msra.mxu0 0.0
    %2912 = vmatprep.subr.mxu0 0.0
    %2913 = vmatpush1.msra.mxu0 0.0
    %2914 = vmatprep.subr.mxu0 0.0
    %2915 = vmatpush1.msra.mxu0 0.0
    %2916 = vmatprep.subr.mxu0 0.0
    %2917 = vmatpush1.msra.mxu0 0.0
    %2918 = vmatprep.subr.mxu0 0.0
    %2919 = vmatpush1.msra.mxu0 0.0
    %2920 = vmatprep.subr.mxu0 0.0
    %2921 = vmatpush1.msra.mxu0 0.0
    %2922 = vmatprep.subr.mxu0 0.0
    %2923 = vmatpush1.msra.mxu0 0.0
    %2924 = vmatprep.subr.mxu0 0.0
    %2925 = vmatpush1.msra.mxu0 0.0
    %2926 = vmatprep.subr.mxu0 0.0
    %2927 = vmatpush1.msra.mxu0 0.0
    %2928 = vmatprep.subr.mxu0 0.0
    %2929 = vmatpush1.msra.mxu0 0.0
    %2930 = vmatprep.subr.mxu0 0.0
    %2931 = vmatpush1.msra.mxu0 0.0
    %2932 = vmatprep.subr.mxu0 0.0
    %2933 = vmatpush1.msra.mxu0 0.0
    %2934 = vmatprep.subr.mxu0 0.0
    %2935 = vmatpush1.msra.mxu0 0.0
    %2936 = vmatprep.mubr.f32.mxu0 0.0
    %2937 = vmatmul.mubr.f32.gmra.mrb[0].mxu0 %v2870
    %v2938 = vpop.f32.mrb[0].mxu0
    %v2939 = vadd.f32 %v1996, %v2938
    %v2940 = vpop.f32.mrb[0].mxu0
    %v2941 = vadd.f32 %v2000, %v2940
    %2942 = vdwg.mxu0
    %2943 = vmatprep.subr.mxu0 %v1683
    %2944 = vmatpush1.msra.mxu0 %v1682
    %2945 = vmatprep.subr.mxu0 %v1687
    %2946 = vmatpush1.msra.mxu0 %v1686
    %2947 = vmatprep.subr.mxu0 %v1691
    %2948 = vmatpush1.msra.mxu0 %v1690
    %2949 = vmatprep.subr.mxu0 %v1695
    %2950 = vmatpush1.msra.mxu0 %v1694
    %2951 = vmatprep.subr.mxu0 %v1699
    %2952 = vmatpush1.msra.mxu0 %v1698
    %2953 = vmatprep.subr.mxu0 %v1703
    %2954 = vmatpush1.msra.mxu0 %v1702
    %2955 = vmatprep.subr.mxu0 %v1707
    %2956 = vmatpush1.msra.mxu0 %v1706
    %2957 = vmatprep.subr.mxu0 %v1711
    %2958 = vmatpush1.msra.mxu0 %v1710
    %2959 = vmatprep.subr.mxu0 %v1715
    %2960 = vmatpush1.msra.mxu0 %v1714
    %2961 = vmatprep.subr.mxu0 %v1719
    %2962 = vmatpush1.msra.mxu0 %v1718
    %2963 = vmatprep.subr.mxu0 %v1723
    %2964 = vmatpush1.msra.mxu0 %v1722
    %2965 = vmatprep.subr.mxu0 %v1727
    %2966 = vmatpush1.msra.mxu0 %v1726
    %2967 = vmatprep.subr.mxu0 %v1731
    %2968 = vmatpush1.msra.mxu0 %v1730
    %2969 = vmatprep.subr.mxu0 %v1735
    %2970 = vmatpush1.msra.mxu0 %v1734
    %2971 = vmatprep.subr.mxu0 %v1739
    %2972 = vmatpush1.msra.mxu0 %v1738
    %2973 = vmatprep.subr.mxu0 %v1743
    %2974 = vmatpush1.msra.mxu0 %v1742
    %2975 = vmatprep.subr.mxu0 0.0
    %2976 = vmatpush1.msra.mxu0 0.0
    %2977 = vmatprep.subr.mxu0 0.0
    %2978 = vmatpush1.msra.mxu0 0.0
    %2979 = vmatprep.subr.mxu0 0.0
    %2980 = vmatpush1.msra.mxu0 0.0
    %2981 = vmatprep.subr.mxu0 0.0
    %2982 = vmatpush1.msra.mxu0 0.0
    %2983 = vmatprep.subr.mxu0 0.0
    %2984 = vmatpush1.msra.mxu0 0.0
    %2985 = vmatprep.subr.mxu0 0.0
    %2986 = vmatpush1.msra.mxu0 0.0
    %2987 = vmatprep.subr.mxu0 0.0
    %2988 = vmatpush1.msra.mxu0 0.0
    %2989 = vmatprep.subr.mxu0 0.0
    %2990 = vmatpush1.msra.mxu0 0.0
    %2991 = vmatprep.subr.mxu0 0.0
    %2992 = vmatpush1.msra.mxu0 0.0
    %2993 = vmatprep.subr.mxu0 0.0
    %2994 = vmatpush1.msra.mxu0 0.0
    %2995 = vmatprep.subr.mxu0 0.0
    %2996 = vmatpush1.msra.mxu0 0.0
    %2997 = vmatprep.subr.mxu0 0.0
    %2998 = vmatpush1.msra.mxu0 0.0
    %2999 = vmatprep.subr.mxu0 0.0
    %3000 = vmatpush1.msra.mxu0 0.0
    %3001 = vmatprep.subr.mxu0 0.0
    %3002 = vmatpush1.msra.mxu0 0.0
    %3003 = vmatprep.subr.mxu0 0.0
    %3004 = vmatpush1.msra.mxu0 0.0
    %3005 = vmatprep.subr.mxu0 0.0
    %3006 = vmatpush1.msra.mxu0 0.0
    %3007 = vmatprep.mubr.f32.mxu0 0.0
    %3008 = vmatmul.mubr.f32.gmra.mrb[0].mxu0 %v2870
    %v3009 = vpop.f32.mrb[0].mxu0
    %v3010 = vadd.f32 %v2004, %v3009
    %v3011 = vpop.f32.mrb[0].mxu0
    %v3012 = vadd.f32 %v2008, %v3011
    %3013 = vdwg.mxu0
    %s3014 = scalar_lea.vmem [#allocation3], 5
    %v3015 = vld [vmem:[%s3014] ss:$8 sm:$0x7]
    %v3016 = vadd.f32 %v3015, %v2939
    %v3017 = vxor.u32 %v3016, 2147483648
    %v3018 = vmul.f32 %v3017, 1.442695
    %v3019 = vpow.pop %v3018
    %v3020 = vadd.f32 %v3019, 1.0
    %v3021 = vrcp.pop %v3020
    %v3022 = vmul.f32 1.0, %v3021
    %v3024 = vrot.slane %v3015, 1
    %v3026 = vadd.f32 %v3024, %v2941
    %v3027 = vxor.u32 %v3026, 2147483648
    %v3028 = vmul.f32 %v3027, 1.442695
    %v3029 = vpow.pop %v3028
    %v3030 = vadd.f32 %v3029, 1.0
    %v3031 = vrcp.pop %v3030
    %v3032 = vmul.f32 1.0, %v3031
    %v3033 = vrot.slane %v3015, 2
    %v3035 = vadd.f32 %v3033, %v3012
    %v3036 = vmul.f32 %v3022, %v3010
    %v3037 = vadd.f32 %v3035, %v3036
    %v3038 = vtanh.pop %v3037
    %v3039 = vsub.f32 1.0, %v3032
    %v3040 = vmul.f32 %v3039, %v3038
    %v3041 = vmul.f32 %v3032, %v2870
    %v3042 = vadd.f32 %v3040, %v3041
    %3043 = vst [vmem:[#allocation4 + $0x5] sm:$0x1] %v3042
    %3044 = vmatprep.subr.mxu0 %v1681
    %3045 = vmatpush1.msra.mxu0 %v1680
    %3046 = vmatprep.subr.mxu0 %v1685
    %3047 = vmatpush1.msra.mxu0 %v1684
    %3048 = vmatprep.subr.mxu0 %v1689
    %3049 = vmatpush1.msra.mxu0 %v1688
    %3050 = vmatprep.subr.mxu0 %v1693
    %3051 = vmatpush1.msra.mxu0 %v1692
    %3052 = vmatprep.subr.mxu0 %v1697
    %3053 = vmatpush1.msra.mxu0 %v1696
    %3054 = vmatprep.subr.mxu0 %v1701
    %3055 = vmatpush1.msra.mxu0 %v1700
    %3056 = vmatprep.subr.mxu0 %v1705
    %3057 = vmatpush1.msra.mxu0 %v1704
    %3058 = vmatprep.subr.mxu0 %v1709
    %3059 = vmatpush1.msra.mxu0 %v1708
    %3060 = vmatprep.subr.mxu0 %v1713
    %3061 = vmatpush1.msra.mxu0 %v1712
    %3062 = vmatprep.subr.mxu0 %v1717
    %3063 = vmatpush1.msra.mxu0 %v1716
    %3064 = vmatprep.subr.mxu0 %v1721
    %3065 = vmatpush1.msra.mxu0 %v1720
    %3066 = vmatprep.subr.mxu0 %v1725
    %3067 = vmatpush1.msra.mxu0 %v1724
    %3068 = vmatprep.subr.mxu0 %v1729
    %3069 = vmatpush1.msra.mxu0 %v1728
    %3070 = vmatprep.subr.mxu0 %v1733
    %3071 = vmatpush1.msra.mxu0 %v1732
    %3072 = vmatprep.subr.mxu0 %v1737
    %3073 = vmatpush1.msra.mxu0 %v1736
    %3074 = vmatprep.subr.mxu0 %v1741
    %3075 = vmatpush1.msra.mxu0 %v1740
    %3076 = vmatprep.subr.mxu0 0.0
    %3077 = vmatpush1.msra.mxu0 0.0
    %3078 = vmatprep.subr.mxu0 0.0
    %3079 = vmatpush1.msra.mxu0 0.0
    %3080 = vmatprep.subr.mxu0 0.0
    %3081 = vmatpush1.msra.mxu0 0.0
    %3082 = vmatprep.subr.mxu0 0.0
    %3083 = vmatpush1.msra.mxu0 0.0
    %3084 = vmatprep.subr.mxu0 0.0
    %3085 = vmatpush1.msra.mxu0 0.0
    %3086 = vmatprep.subr.mxu0 0.0
    %3087 = vmatpush1.msra.mxu0 0.0
    %3088 = vmatprep.subr.mxu0 0.0
    %3089 = vmatpush1.msra.mxu0 0.0
    %3090 = vmatprep.subr.mxu0 0.0
    %3091 = vmatpush1.msra.mxu0 0.0
    %3092 = vmatprep.subr.mxu0 0.0
    %3093 = vmatpush1.msra.mxu0 0.0
    %3094 = vmatprep.subr.mxu0 0.0
    %3095 = vmatpush1.msra.mxu0 0.0
    %3096 = vmatprep.subr.mxu0 0.0
    %3097 = vmatpush1.msra.mxu0 0.0
    %3098 = vmatprep.subr.mxu0 0.0
    %3099 = vmatpush1.msra.mxu0 0.0
    %3100 = vmatprep.subr.mxu0 0.0
    %3101 = vmatpush1.msra.mxu0 0.0
    %3102 = vmatprep.subr.mxu0 0.0
    %3103 = vmatpush1.msra.mxu0 0.0
    %3104 = vmatprep.subr.mxu0 0.0
    %3105 = vmatpush1.msra.mxu0 0.0
    %3106 = vmatprep.subr.mxu0 0.0
    %3107 = vmatpush1.msra.mxu0 0.0
    %3108 = vmatprep.mubr.f32.mxu0 0.0
    %3109 = vmatmul.mubr.f32.gmra.mrb[0].mxu0 %v3042
    %v3110 = vpop.f32.mrb[0].mxu0
    %v3111 = vadd.f32 %v1996, %v3110
    %v3112 = vpop.f32.mrb[0].mxu0
    %v3113 = vadd.f32 %v2000, %v3112
    %3114 = vdwg.mxu0
    %3115 = vmatprep.subr.mxu0 %v1683
    %3116 = vmatpush1.msra.mxu0 %v1682
    %3117 = vmatprep.subr.mxu0 %v1687
    %3118 = vmatpush1.msra.mxu0 %v1686
    %3119 = vmatprep.subr.mxu0 %v1691
    %3120 = vmatpush1.msra.mxu0 %v1690
    %3121 = vmatprep.subr.mxu0 %v1695
    %3122 = vmatpush1.msra.mxu0 %v1694
    %3123 = vmatprep.subr.mxu0 %v1699
    %3124 = vmatpush1.msra.mxu0 %v1698
    %3125 = vmatprep.subr.mxu0 %v1703
    %3126 = vmatpush1.msra.mxu0 %v1702
    %3127 = vmatprep.subr.mxu0 %v1707
    %3128 = vmatpush1.msra.mxu0 %v1706
    %3129 = vmatprep.subr.mxu0 %v1711
    %3130 = vmatpush1.msra.mxu0 %v1710
    %3131 = vmatprep.subr.mxu0 %v1715
    %3132 = vmatpush1.msra.mxu0 %v1714
    %3133 = vmatprep.subr.mxu0 %v1719
    %3134 = vmatpush1.msra.mxu0 %v1718
    %3135 = vmatprep.subr.mxu0 %v1723
    %3136 = vmatpush1.msra.mxu0 %v1722
    %3137 = vmatprep.subr.mxu0 %v1727
    %3138 = vmatpush1.msra.mxu0 %v1726
    %3139 = vmatprep.subr.mxu0 %v1731
    %3140 = vmatpush1.msra.mxu0 %v1730
    %3141 = vmatprep.subr.mxu0 %v1735
    %3142 = vmatpush1.msra.mxu0 %v1734
    %3143 = vmatprep.subr.mxu0 %v1739
    %3144 = vmatpush1.msra.mxu0 %v1738
    %3145 = vmatprep.subr.mxu0 %v1743
    %3146 = vmatpush1.msra.mxu0 %v1742
    %3147 = vmatprep.subr.mxu0 0.0
    %3148 = vmatpush1.msra.mxu0 0.0
    %3149 = vmatprep.subr.mxu0 0.0
    %3150 = vmatpush1.msra.mxu0 0.0
    %3151 = vmatprep.subr.mxu0 0.0
    %3152 = vmatpush1.msra.mxu0 0.0
    %3153 = vmatprep.subr.mxu0 0.0
    %3154 = vmatpush1.msra.mxu0 0.0
    %3155 = vmatprep.subr.mxu0 0.0
    %3156 = vmatpush1.msra.mxu0 0.0
    %3157 = vmatprep.subr.mxu0 0.0
    %3158 = vmatpush1.msra.mxu0 0.0
    %3159 = vmatprep.subr.mxu0 0.0
    %3160 = vmatpush1.msra.mxu0 0.0
    %3161 = vmatprep.subr.mxu0 0.0
    %3162 = vmatpush1.msra.mxu0 0.0
    %3163 = vmatprep.subr.mxu0 0.0
    %3164 = vmatpush1.msra.mxu0 0.0
    %3165 = vmatprep.subr.mxu0 0.0
    %3166 = vmatpush1.msra.mxu0 0.0
    %3167 = vmatprep.subr.mxu0 0.0
    %3168 = vmatpush1.msra.mxu0 0.0
    %3169 = vmatprep.subr.mxu0 0.0
    %3170 = vmatpush1.msra.mxu0 0.0
    %3171 = vmatprep.subr.mxu0 0.0
    %3172 = vmatpush1.msra.mxu0 0.0
    %3173 = vmatprep.subr.mxu0 0.0
    %3174 = vmatpush1.msra.mxu0 0.0
    %3175 = vmatprep.subr.mxu0 0.0
    %3176 = vmatpush1.msra.mxu0 0.0
    %3177 = vmatprep.subr.mxu0 0.0
    %3178 = vmatpush1.msra.mxu0 0.0
    %3179 = vmatprep.mubr.f32.mxu0 0.0
    %3180 = vmatmul.mubr.f32.gmra.mrb[0].mxu0 %v3042
    %v3181 = vpop.f32.mrb[0].mxu0
    %v3182 = vadd.f32 %v2004, %v3181
    %v3183 = vpop.f32.mrb[0].mxu0
    %v3184 = vadd.f32 %v2008, %v3183
    %3185 = vdwg.mxu0
    %s3186 = scalar_lea.vmem [#allocation3], 6
    %v3187 = vld [vmem:[%s3186] ss:$8 sm:$0x7]
    %v3188 = vadd.f32 %v3187, %v3111
    %v3189 = vxor.u32 %v3188, 2147483648
    %v3190 = vmul.f32 %v3189, 1.442695
    %v3191 = vpow.pop %v3190
    %v3192 = vadd.f32 %v3191, 1.0
    %v3193 = vrcp.pop %v3192
    %v3194 = vmul.f32 1.0, %v3193
    %v3196 = vrot.slane %v3187, 1
    %v3198 = vadd.f32 %v3196, %v3113
    %v3199 = vxor.u32 %v3198, 2147483648
    %v3200 = vmul.f32 %v3199, 1.442695
    %v3201 = vpow.pop %v3200
    %v3202 = vadd.f32 %v3201, 1.0
    %v3203 = vrcp.pop %v3202
    %v3204 = vmul.f32 1.0, %v3203
    %v3205 = vrot.slane %v3187, 2
    %v3207 = vadd.f32 %v3205, %v3184
    %v3208 = vmul.f32 %v3194, %v3182
    %v3209 = vadd.f32 %v3207, %v3208
    %v3210 = vtanh.pop %v3209
    %v3211 = vsub.f32 1.0, %v3204
    %v3212 = vmul.f32 %v3211, %v3210
    %v3213 = vmul.f32 %v3204, %v3042
    %v3214 = vadd.f32 %v3212, %v3213
    %3215 = vst [vmem:[#allocation4 + $0x6] sm:$0x1] %v3214
    %3216 = vmatprep.subr.mxu0 %v1681
    %3217 = vmatpush1.msra.mxu0 %v1680
    %3218 = vmatprep.subr.mxu0 %v1685
    %3219 = vmatpush1.msra.mxu0 %v1684
    %3220 = vmatprep.subr.mxu0 %v1689
    %3221 = vmatpush1.msra.mxu0 %v1688
    %3222 = vmatprep.subr.mxu0 %v1693
    %3223 = vmatpush1.msra.mxu0 %v1692
    %3224 = vmatprep.subr.mxu0 %v1697
    %3225 = vmatpush1.msra.mxu0 %v1696
    %3226 = vmatprep.subr.mxu0 %v1701
    %3227 = vmatpush1.msra.mxu0 %v1700
    %3228 = vmatprep.subr.mxu0 %v1705
    %3229 = vmatpush1.msra.mxu0 %v1704
    %3230 = vmatprep.subr.mxu0 %v1709
    %3231 = vmatpush1.msra.mxu0 %v1708
    %3232 = vmatprep.subr.mxu0 %v1713
    %3233 = vmatpush1.msra.mxu0 %v1712
    %3234 = vmatprep.subr.mxu0 %v1717
    %3235 = vmatpush1.msra.mxu0 %v1716
    %3236 = vmatprep.subr.mxu0 %v1721
    %3237 = vmatpush1.msra.mxu0 %v1720
    %3238 = vmatprep.subr.mxu0 %v1725
    %3239 = vmatpush1.msra.mxu0 %v1724
    %3240 = vmatprep.subr.mxu0 %v1729
    %3241 = vmatpush1.msra.mxu0 %v1728
    %3242 = vmatprep.subr.mxu0 %v1733
    %3243 = vmatpush1.msra.mxu0 %v1732
    %3244 = vmatprep.subr.mxu0 %v1737
    %3245 = vmatpush1.msra.mxu0 %v1736
    %3246 = vmatprep.subr.mxu0 %v1741
    %3247 = vmatpush1.msra.mxu0 %v1740
    %3248 = vmatprep.subr.mxu0 0.0
    %3249 = vmatpush1.msra.mxu0 0.0
    %3250 = vmatprep.subr.mxu0 0.0
    %3251 = vmatpush1.msra.mxu0 0.0
    %3252 = vmatprep.subr.mxu0 0.0
    %3253 = vmatpush1.msra.mxu0 0.0
    %3254 = vmatprep.subr.mxu0 0.0
    %3255 = vmatpush1.msra.mxu0 0.0
    %3256 = vmatprep.subr.mxu0 0.0
    %3257 = vmatpush1.msra.mxu0 0.0
    %3258 = vmatprep.subr.mxu0 0.0
    %3259 = vmatpush1.msra.mxu0 0.0
    %3260 = vmatprep.subr.mxu0 0.0
    %3261 = vmatpush1.msra.mxu0 0.0
    %3262 = vmatprep.subr.mxu0 0.0
    %3263 = vmatpush1.msra.mxu0 0.0
    %3264 = vmatprep.subr.mxu0 0.0
    %3265 = vmatpush1.msra.mxu0 0.0
    %3266 = vmatprep.subr.mxu0 0.0
    %3267 = vmatpush1.msra.mxu0 0.0
    %3268 = vmatprep.subr.mxu0 0.0
    %3269 = vmatpush1.msra.mxu0 0.0
    %3270 = vmatprep.subr.mxu0 0.0
    %3271 = vmatpush1.msra.mxu0 0.0
    %3272 = vmatprep.subr.mxu0 0.0
    %3273 = vmatpush1.msra.mxu0 0.0
    %3274 = vmatprep.subr.mxu0 0.0
    %3275 = vmatpush1.msra.mxu0 0.0
    %3276 = vmatprep.subr.mxu0 0.0
    %3277 = vmatpush1.msra.mxu0 0.0
    %3278 = vmatprep.subr.mxu0 0.0
    %3279 = vmatpush1.msra.mxu0 0.0
    %3280 = vmatprep.mubr.f32.mxu0 0.0
    %3281 = vmatmul.mubr.f32.gmra.mrb[0].mxu0 %v3214
    %v3282 = vpop.f32.mrb[0].mxu0
    %v3283 = vadd.f32 %v1996, %v3282
    %v3284 = vpop.f32.mrb[0].mxu0
    %v3285 = vadd.f32 %v2000, %v3284
    %3286 = vdwg.mxu0
    %3287 = vmatprep.subr.mxu0 %v1683
    %3288 = vmatpush1.msra.mxu0 %v1682
    %3289 = vmatprep.subr.mxu0 %v1687
    %3290 = vmatpush1.msra.mxu0 %v1686
    %3291 = vmatprep.subr.mxu0 %v1691
    %3292 = vmatpush1.msra.mxu0 %v1690
    %3293 = vmatprep.subr.mxu0 %v1695
    %3294 = vmatpush1.msra.mxu0 %v1694
    %3295 = vmatprep.subr.mxu0 %v1699
    %3296 = vmatpush1.msra.mxu0 %v1698
    %3297 = vmatprep.subr.mxu0 %v1703
    %3298 = vmatpush1.msra.mxu0 %v1702
    %3299 = vmatprep.subr.mxu0 %v1707
    %3300 = vmatpush1.msra.mxu0 %v1706
    %3301 = vmatprep.subr.mxu0 %v1711
    %3302 = vmatpush1.msra.mxu0 %v1710
    %3303 = vmatprep.subr.mxu0 %v1715
    %3304 = vmatpush1.msra.mxu0 %v1714
    %3305 = vmatprep.subr.mxu0 %v1719
    %3306 = vmatpush1.msra.mxu0 %v1718
    %3307 = vmatprep.subr.mxu0 %v1723
    %3308 = vmatpush1.msra.mxu0 %v1722
    %3309 = vmatprep.subr.mxu0 %v1727
    %3310 = vmatpush1.msra.mxu0 %v1726
    %3311 = vmatprep.subr.mxu0 %v1731
    %3312 = vmatpush1.msra.mxu0 %v1730
    %3313 = vmatprep.subr.mxu0 %v1735
    %3314 = vmatpush1.msra.mxu0 %v1734
    %3315 = vmatprep.subr.mxu0 %v1739
    %3316 = vmatpush1.msra.mxu0 %v1738
    %3317 = vmatprep.subr.mxu0 %v1743
    %3318 = vmatpush1.msra.mxu0 %v1742
    %3319 = vmatprep.subr.mxu0 0.0
    %3320 = vmatpush1.msra.mxu0 0.0
    %3321 = vmatprep.subr.mxu0 0.0
    %3322 = vmatpush1.msra.mxu0 0.0
    %3323 = vmatprep.subr.mxu0 0.0
    %3324 = vmatpush1.msra.mxu0 0.0
    %3325 = vmatprep.subr.mxu0 0.0
    %3326 = vmatpush1.msra.mxu0 0.0
    %3327 = vmatprep.subr.mxu0 0.0
    %3328 = vmatpush1.msra.mxu0 0.0
    %3329 = vmatprep.subr.mxu0 0.0
    %3330 = vmatpush1.msra.mxu0 0.0
    %3331 = vmatprep.subr.mxu0 0.0
    %3332 = vmatpush1.msra.mxu0 0.0
    %3333 = vmatprep.subr.mxu0 0.0
    %3334 = vmatpush1.msra.mxu0 0.0
    %3335 = vmatprep.subr.mxu0 0.0
    %3336 = vmatpush1.msra.mxu0 0.0
    %3337 = vmatprep.subr.mxu0 0.0
    %3338 = vmatpush1.msra.mxu0 0.0
    %3339 = vmatprep.subr.mxu0 0.0
    %3340 = vmatpush1.msra.mxu0 0.0
    %3341 = vmatprep.subr.mxu0 0.0
    %3342 = vmatpush1.msra.mxu0 0.0
    %3343 = vmatprep.subr.mxu0 0.0
    %3344 = vmatpush1.msra.mxu0 0.0
    %3345 = vmatprep.subr.mxu0 0.0
    %3346 = vmatpush1.msra.mxu0 0.0
    %3347 = vmatprep.subr.mxu0 0.0
    %3348 = vmatpush1.msra.mxu0 0.0
    %3349 = vmatprep.subr.mxu0 0.0
    %3350 = vmatpush1.msra.mxu0 0.0
    %3351 = vmatprep.mubr.f32.mxu0 0.0
    %3352 = vmatmul.mubr.f32.gmra.mrb[0].mxu0 %v3214
    %v3353 = vpop.f32.mrb[0].mxu0
    %v3354 = vadd.f32 %v2004, %v3353
    %v3355 = vpop.f32.mrb[0].mxu0
    %v3356 = vadd.f32 %v2008, %v3355
    %3357 = vdwg.mxu0
    %s3358 = scalar_lea.vmem [#allocation3], 7
    %v3359 = vld [vmem:[%s3358] ss:$8 sm:$0x7]
    %v3360 = vadd.f32 %v3359, %v3283
    %v3361 = vxor.u32 %v3360, 2147483648
    %v3362 = vmul.f32 %v3361, 1.442695
    %v3363 = vpow.pop %v3362
    %v3364 = vadd.f32 %v3363, 1.0
    %v3365 = vrcp.pop %v3364
    %v3366 = vmul.f32 1.0, %v3365
    %v3368 = vrot.slane %v3359, 1
    %v3370 = vadd.f32 %v3368, %v3285
    %v3371 = vxor.u32 %v3370, 2147483648
    %v3372 = vmul.f32 %v3371, 1.442695
    %v3373 = vpow.pop %v3372
    %v3374 = vadd.f32 %v3373, 1.0
    %v3375 = vrcp.pop %v3374
    %v3376 = vmul.f32 1.0, %v3375
    %v3377 = vrot.slane %v3359, 2
    %v3379 = vadd.f32 %v3377, %v3356
    %v3380 = vmul.f32 %v3366, %v3354
    %v3381 = vadd.f32 %v3379, %v3380
    %v3382 = vtanh.pop %v3381
    %v3383 = vsub.f32 1.0, %v3376
    %v3384 = vmul.f32 %v3383, %v3382
    %v3385 = vmul.f32 %v3376, %v3214
    %v3386 = vadd.f32 %v3384, %v3385
    %3387 = vst [vmem:[#allocation4 + $0x7] sm:$0x1] %v3386
    %v3388 = vld [vmem:[#allocation4] sm:$0xff]
    %v3390 = vlaneseq
    %v3391 = vshrl.u32 %v3390, 7
    %v3392 = vsub.s32 0, %v3391
    %v3393 = vrot.slane %v1745, %v3392
    %v3395 = vmul.f32 %v3388, %v3393
    %3396 = vadd.xlane.f32.xlu0 %v3395
    %v3397 = vpop.xlane.xlu0 %3396
    %v3399 = vlaneseq
    %v3400 = vshrl.u32 %v3399, 7
    %v3401 = vsub.s32 0, %v3400
    %v3402 = vrot.slane %v1746, %v3401
    %v3404 = vadd.f32 %v3397, %v3402
    %vm3405 = vcmask 7168
    %3406 = vst.msk [vmem:[%s13] sm:$0xff] %vm3405, %v3404
    // Predicated region
    $region66: #{encoder_decoder_rnn.1} parent=1 // pred_check
      _
    $region67: #{encoder_decoder_rnn.1} parent=1 // pred_check_branch
      %3408 = sbr.rel (0) target = $region69
    $region68: #{encoder_decoder_rnn.1} parent=1 // pred_region
      _
    $region69: #{encoder_decoder_rnn.1} parent=1 // pred_fallthru
      _
    // Predicated region
    $region70: #{encoder_decoder_rnn.1} parent=1 // pred_check
      _
    $region71: #{encoder_decoder_rnn.1} parent=1 // pred_check_branch
      %3410 = sbr.rel (0) target = $region73
    $region72: #{encoder_decoder_rnn.1} parent=1 // pred_region
      _
    $region73: #{encoder_decoder_rnn.1} parent=1 // pred_fallthru
      _
    %3411 = vsyncpa [#allocation7], 1
    %3412 = vsyncpa [#allocation9], 1

</llo_original>
